<compile_context>
chip_gen: v5e
topology: v5e:2x2
jax: 0.10.0
libtpu: 0.0.40
codegen_flags: <defaults>
</compile_context>

<pallas_src>
import functools
import math

import jax
import jax.numpy as jnp
from jax import lax
from jax.experimental import pallas as pl
from jax.experimental.pallas import tpu as pltpu

LEAKY_SLOPE = 0.2
BN_EPS = 1e-5
MAX_TILE_M = 1024                 # 512-1024 rows ~ 85% of HBM roofline in pipelining
FUSE_BN_VMEM_BYTES = 8 << 20      # whole-layer BN fusion budget (fits v7x 64 MiB TC)


# ----------------------------- Pallas kernels ------------------------------ #
def _conv_bias_act_kernel(p_ref, w_ref, eps_ref, o_ref, *, act):
    """(tile_m, K) bf16 x (K, Cp) bf16 -> f32 acc, + bias row (+ LeakyReLU)."""
    acc = jnp.dot(p_ref[...], w_ref[...], preferred_element_type=jnp.float32)
    acc = acc + eps_ref[0:1, :]                       # bias row, (1, Cp) broadcast
    if act:
        acc = jnp.where(acc > 0, acc, LEAKY_SLOPE * acc)
    o_ref[...] = acc.astype(o_ref.dtype)


def _conv_stats_kernel(p_ref, w_ref, y_ref, stats_ref, *, m_total, tile_m):
    """Matmul (bf16 y out) + per-tile partial BatchNorm stats from the f32 acc.

    The last tile may be ragged (grid = cdiv(M, tile_m)); rows past the true M
    extent contain garbage from the input DMA and are masked out of the sums.
    """
    y = jnp.dot(p_ref[...], w_ref[...], preferred_element_type=jnp.float32)
    y_ref[...] = y.astype(y_ref.dtype)                # bf16 intermediate to HBM

    valid = m_total - pl.program_id(0) * tile_m
    rows = lax.broadcasted_iota(jnp.int32, y.shape, 0)
    ym = jnp.where(rows < valid, y, 0.0)
    stats_ref[0:1, :] = jnp.sum(ym, axis=0, keepdims=True)        # sum
    stats_ref[1:2, :] = jnp.sum(ym * ym, axis=0, keepdims=True)   # sum of squares
    # rows 2..7 of the stats block are intentionally left unwritten (ignored).


def _bn_act_kernel(y_ref, ss_ref, o_ref):
    """Fused affine normalization (precomputed scale/shift) + LeakyReLU."""
    out = y_ref[...].astype(jnp.float32) * ss_ref[0:1, :] + ss_ref[1:2, :]
    out = jnp.where(out > 0, out, LEAKY_SLOPE * out)
    o_ref[...] = out.astype(o_ref.dtype)


def _conv_bn_act_fused_kernel(p_ref, w_ref, gb_ref, o_ref, *, m_rows, act):
    """Whole small BN layer in one kernel: matmul + exact batch stats + BN + act.

    The full (M_pad, K) patch block sits in VMEM; zero-padded rows contribute
    nothing to the sums (BN convs have no bias), so dividing by the true row
    count `m_rows` gives exact training-mode (N,H,W) statistics.
    """
    y = jnp.dot(p_ref[...], w_ref[...], preferred_element_type=jnp.float32)
    inv_m = 1.0 / m_rows
    mu = jnp.sum(y, axis=0, keepdims=True) * inv_m                # (1, Cp)
    var = jnp.sum(y * y, axis=0, keepdims=True) * inv_m - mu * mu
    scale = gb_ref[0:1, :] * lax.rsqrt(var + BN_EPS)              # gamma row
    shift = gb_ref[1:2, :] - mu * scale                           # beta row
    out = y * scale + shift
    if act:
        out = jnp.where(out > 0, out, LEAKY_SLOPE * out)
    o_ref[...] = out.astype(o_ref.dtype)


# ------------------------------- JAX glue ---------------------------------- #
def _round_up(x, m):
    return (x + m - 1) // m * m


def _cdiv(a, b):
    return -(-a // b)


def _vmem_limit(*buf_bytes):
    """Right-size the scoped VMEM limit: ~2x margin (double buffering + compiler
    temporaries), 8 MiB floor, 48 MiB cap (stays under v7x's 64 MiB per TC)."""
    need = 2 * sum(buf_bytes) + (2 << 20)
    return int(min(max(need, 8 << 20), 48 << 20))


def im2col(x, k, stride, pad):
    """x: (N, H, W, C) -> patches (N*Ho*Wo, k*k*C) in x.dtype, plus Ho, Wo."""
    # TODO(synk): replace the materialized im2col with an in-kernel tap loop
    # (16 shifted (tile_m, Cin) x (Cin, Cout) matmuls) to cut HBM read traffic.
    n, h, w, c = x.shape
    xp = jnp.pad(x, ((0, 0), (pad, pad), (pad, pad), (0, 0)))
    ho = (h + 2 * pad - k) // stride + 1
    wo = (w + 2 * pad - k) // stride + 1
    cols = []
    for i in range(k):
        for j in range(k):
            cols.append(xp[:, i:i + stride * ho:stride,
                           j:j + stride * wo:stride, :])          # (N, Ho, Wo, C)
    patches = jnp.stack(cols, axis=3)                             # (N, Ho, Wo, k*k, C)
    return patches.reshape(n * ho * wo, k * k * c), ho, wo


def conv_block(x, w, bias=None, gamma=None, beta=None, stride=2, act=True,
               out_dtype=jnp.bfloat16, fuse_bn=True):
    """One PatchDiscriminator block. x: (N,H,W,Cin); w: PyTorch (Cout,Cin,kh,kw)."""
    cout, cin, kh, kw = w.shape
    n = x.shape[0]
    x = x.astype(jnp.bfloat16)

    # Pad Cin once on the (16x smaller) NHWC activation so K = kh*kw*Cin_p is
    # already a multiple of 128 -> no K-direction pad of the patch matrix.
    c_align = 128 // math.gcd(kh * kw, 128)
    cin_p = _round_up(cin, c_align)
    if cin_p != cin:
        x = jnp.pad(x, ((0, 0), (0, 0), (0, 0), (0, cin_p - cin)))

    patches, ho, wo = im2col(x, kh, stride, 1)
    m, kdim = patches.shape                        # kdim % 128 == 0
    cp = _round_up(cout, 128)                      # lane-dense output channels
    out_bytes = jnp.dtype(out_dtype).itemsize

    w_mat = jnp.transpose(w, (2, 3, 1, 0)).astype(jnp.bfloat16)   # (kh,kw,cin,cout)
    w_mat = jnp.pad(w_mat, ((0, 0), (0, 0), (0, cin_p - cin), (0, cp - cout)))
    w_mat = w_mat.reshape(kh * kw * cin_p, cp)

    if gamma is None:
        # ---- Conv + bias (+ LeakyReLU), fused into a single kernel. ---------
        tile_m = min(MAX_TILE_M, _round_up(_cdiv(m, 2), 16), m)   # >= 2 tiles (v7x)
        num_tiles = _cdiv(m, tile_m)
        b = (jnp.zeros((cout,), jnp.float32) if bias is None
             else bias.astype(jnp.float32))
        epilogue = jnp.zeros((8, cp), jnp.float32).at[0, :cout].set(b)
        out = pl.pallas_call(
            functools.partial(_conv_bias_act_kernel, act=act),
            grid=(num_tiles,),
            in_specs=[pl.BlockSpec((tile_m, kdim), lambda i: (i, 0)),
                      pl.BlockSpec((kdim, cp), lambda i: (0, 0)),
                      pl.BlockSpec((8, cp), lambda i: (0, 0))],
            out_specs=pl.BlockSpec((tile_m, cp), lambda i: (i, 0)),
            out_shape=jax.ShapeDtypeStruct((m, cp), out_dtype),
            compiler_params=pltpu.CompilerParams(
                dimension_semantics=("parallel",),
                vmem_limit_bytes=_vmem_limit(tile_m * kdim * 2, kdim * cp * 2,
                                             tile_m * cp * out_bytes)),
            cost_estimate=pl.CostEstimate(
                flops=2 * m * kdim * cp, transcendentals=0,
                bytes_accessed=m * kdim * 2 + kdim * cp * 2 + 8 * cp * 4
                               + m * cp * out_bytes),
        )(patches, w_mat, epilogue)
        return out[:, :cout].reshape(n, ho, wo, cout)

    # ------------------------------ BN blocks ------------------------------- #
    fused_footprint = (m * kdim * 2 + kdim * cp * 2
                       + m * cp * 4 + m * cp * out_bytes)
    if fuse_bn and fused_footprint <= FUSE_BN_VMEM_BYTES:
        # Whole layer fits comfortably in VMEM: one fused kernel, no HBM y
        # round-trip, no host-side stats reduction, exact batch statistics.
        m_pad = _round_up(m, 16)
        p_in = (jnp.pad(patches, ((0, m_pad - m), (0, 0)))
                if m_pad != m else patches)
        gb = (jnp.zeros((8, cp), jnp.float32)
              .at[0, :].set(jnp.pad(gamma.astype(jnp.float32), (0, cp - cout),
                                    constant_values=1.0))
              .at[1, :].set(jnp.pad(beta.astype(jnp.float32), (0, cp - cout))))
        out = pl.pallas_call(
            functools.partial(_conv_bn_act_fused_kernel, m_rows=m, act=act),
            grid=(1,),
            in_specs=[pl.BlockSpec((m_pad, kdim), lambda i: (0, 0)),
                      pl.BlockSpec((kdim, cp), lambda i: (0, 0)),
                      pl.BlockSpec((8, cp), lambda i: (0, 0))],
            out_specs=pl.BlockSpec((m_pad, cp), lambda i: (0, 0)),
            out_shape=jax.ShapeDtypeStruct((m_pad, cp), out_dtype),
            compiler_params=pltpu.CompilerParams(
                dimension_semantics=("arbitrary",),
                vmem_limit_bytes=_vmem_limit(m_pad * kdim * 2, kdim * cp * 2,
                                             m_pad * cp * 4,
                                             m_pad * cp * out_bytes)),
            cost_estimate=pl.CostEstimate(
                flops=2 * m_pad * kdim * cp, transcendentals=cp,
                bytes_accessed=m_pad * kdim * 2 + kdim * cp * 2 + 8 * cp * 4
                               + m_pad * cp * out_bytes),
        )(p_in, w_mat, gb)
        return out[:m, :cout].reshape(n, ho, wo, cout)

    # Two-pass tiled BN: pass 1 = matmul + partial stats (y kept as bf16),
    # tiny JAX reduction -> per-channel scale/shift, pass 2 = normalize + act.
    tile_m = min(MAX_TILE_M, _round_up(_cdiv(m, 2), 16), m)
    num_tiles = _cdiv(m, tile_m)
    matmul_cost = pl.CostEstimate(
        flops=2 * m * kdim * cp, transcendentals=0,
        bytes_accessed=m * kdim * 2 + kdim * cp * 2 + m * cp * 2
                       + num_tiles * 8 * cp * 4)
    y, part = pl.pallas_call(
        functools.partial(_conv_stats_kernel, m_total=m, tile_m=tile_m),
        grid=(num_tiles,),
        in_specs=[pl.BlockSpec((tile_m, kdim), lambda i: (i, 0)),
                  pl.BlockSpec((kdim, cp), lambda i: (0, 0))],
        out_specs=(pl.BlockSpec((tile_m, cp), lambda i: (i, 0)),
                   pl.BlockSpec((8, cp), lambda i: (i, 0))),
        out_shape=(jax.ShapeDtypeStruct((m, cp), jnp.bfloat16),
                   jax.ShapeDtypeStruct((num_tiles * 8, cp), jnp.float32)),
        compiler_params=pltpu.CompilerParams(
            dimension_semantics=("parallel",),
            vmem_limit_bytes=_vmem_limit(tile_m * kdim * 2, kdim * cp * 2,
                                         tile_m * cp * 2, 8 * cp * 4)),
        cost_estimate=matmul_cost,
    )(patches, w_mat)

    # Exact training-mode (N,H,W) stats; only rows 0-1 of each partial are valid.
    total = jnp.sum(part.reshape(num_tiles, 8, cp)[:, :2], axis=0)     # (2, cp)
    mu = total[0] / m
    var = total[1] / m - mu * mu
    g = jnp.pad(gamma.astype(jnp.float32), (0, cp - cout), constant_values=1.0)
    bt = jnp.pad(beta.astype(jnp.float32), (0, cp - cout))
    scale = g * lax.rsqrt(var + BN_EPS)
    shift = bt - mu * scale
    scale_shift = jnp.zeros((8, cp), jnp.float32).at[0].set(scale).at[1].set(shift)

    out = pl.pallas_call(
        _bn_act_kernel,
        grid=(num_tiles,),
        in_specs=[pl.BlockSpec((tile_m, cp), lambda i: (i, 0)),
                  pl.BlockSpec((8, cp), lambda i: (0, 0))],
        out_specs=pl.BlockSpec((tile_m, cp), lambda i: (i, 0)),
        out_shape=jax.ShapeDtypeStruct((m, cp), out_dtype),
        compiler_params=pltpu.CompilerParams(
            dimension_semantics=("parallel",),
            vmem_limit_bytes=_vmem_limit(tile_m * cp * 2, 8 * cp * 4,
                                         tile_m * cp * out_bytes)),
    )(y, scale_shift)
    return out[:, :cout].reshape(n, ho, wo, cout)


def init_params(key, in_channels, num_filters=8, n_down=3):
    """Deterministic synthetic parameters mirroring the PyTorch module layout."""
    params = []

    def conv_w(kk, cout, cin):
        return 0.05 * jax.random.normal(kk, (cout, cin, 4, 4), jnp.float32)

    keys = jax.random.split(key, 4 * (n_down + 2))
    ki = iter(range(len(keys)))

    # Block 0: Conv(bias) + LeakyReLU (no norm)
    c_in, c_out = in_channels, num_filters
    params.append(dict(
        w=conv_w(keys[next(ki)], c_out, c_in),
        b=0.05 * jax.random.normal(keys[next(ki)], (c_out,), jnp.float32),
        gamma=None, beta=None, stride=2, act=True))

    # Intermediate blocks: Conv(no bias) + BN + LeakyReLU
    for i in range(n_down):
        c_in, c_out = c_out, c_out * 2
        stride = 1 if i == n_down - 1 else 2
        params.append(dict(
            w=conv_w(keys[next(ki)], c_out, c_in),
            b=None,
            gamma=1.0 + 0.1 * jax.random.normal(keys[next(ki)], (c_out,), jnp.float32),
            beta=0.1 * jax.random.normal(keys[next(ki)], (c_out,), jnp.float32),
            stride=stride, act=True))

    # Final block: Conv(bias) only
    params.append(dict(
        w=conv_w(keys[next(ki)], 1, c_out),
        b=0.05 * jax.random.normal(keys[next(ki)], (1,), jnp.float32),
        gamma=None, beta=None, stride=1, act=False))
    return params


def patch_discriminator(x_nchw, params, fuse_bn=True):
    x = jnp.transpose(x_nchw, (0, 2, 3, 1)).astype(jnp.bfloat16)   # NCHW -> NHWC
    for idx, p in enumerate(params):
        is_last = idx == len(params) - 1
        x = conv_block(x, p["w"], bias=p["b"], gamma=p["gamma"], beta=p["beta"],
                       stride=p["stride"], act=p["act"],
                       out_dtype=jnp.float32 if is_last else jnp.bfloat16,
                       fuse_bn=fuse_bn)
    return jnp.transpose(x, (0, 3, 1, 2)).astype(jnp.float32)      # NHWC -> NCHW


# ------------------------- pure-JAX reference ------------------------------ #
def reference_forward(x_nchw, params):
    """Same math with XLA convolutions, using the identical bf16-operand /
    f32-accumulate precision policy (bias/BN/LeakyReLU in f32)."""
    x = x_nchw.astype(jnp.float32)
    for p in params:
        out = lax.conv_general_dilated(
            x.astype(jnp.bfloat16), p["w"].astype(jnp.bfloat16),
            window_strides=(p["stride"], p["stride"]),
            padding=((1, 1), (1, 1)),
            dimension_numbers=("NCHW", "OIHW", "NCHW"),
            preferred_element_type=jnp.float32)
        if p["b"] is not None:
            out = out + p["b"].reshape(1, -1, 1, 1)
        if p["gamma"] is not None:
            mu = jnp.mean(out, axis=(0, 2, 3), keepdims=True)
            var = jnp.mean((out - mu) ** 2, axis=(0, 2, 3), keepdims=True)
            out = ((out - mu) * lax.rsqrt(var + BN_EPS)
                   * p["gamma"].reshape(1, -1, 1, 1)
                   + p["beta"].reshape(1, -1, 1, 1))
        if p["act"]:
            out = jnp.where(out > 0, out, LEAKY_SLOPE * out)
        x = out
    return x


if __name__ == "__main__":
    key = jax.random.PRNGKey(0)
    k_x, k_p = jax.random.split(key)

    # Small shapes: batch=2, channels=3, spatial=64, num_filters=8, n_down=3.
    # Output is (2, 1, 6, 6); exercises the fused-BN path, the tiled two-pass
    # BN path (forced), ragged M tails, and multi-tile grids.
    x = jax.random.normal(k_x, (2, 3, 64, 64), jnp.float32)
    params = init_params(k_p, in_channels=3, num_filters=8, n_down=3)

    fwd_fused = jax.jit(lambda inp: patch_discriminator(inp, params, fuse_bn=True))
    fwd_tiled = jax.jit(lambda inp: patch_discriminator(inp, params, fuse_bn=False))
    ref_fn = jax.jit(lambda inp: reference_forward(inp, params))

    out_fused = jax.block_until_ready(fwd_fused(x))
    out_tiled = jax.block_until_ready(fwd_tiled(x))
    ref = jax.block_until_ready(ref_fn(x))

    assert out_fused.shape == (2, 1, 6, 6), out_fused.shape
    assert out_tiled.shape == (2, 1, 6, 6), out_tiled.shape
    # Tolerance sized for bf16 rounding at layer boundaries (kernel and reference
    # share the bf16-operand policy; the tiled path additionally stores y in bf16).
    assert jnp.allclose(out_fused, ref, atol=3e-2, rtol=3e-2), (
        float(jnp.max(jnp.abs(out_fused - ref))))
    assert jnp.allclose(out_tiled, ref, atol=3e-2, rtol=3e-2), (
        float(jnp.max(jnp.abs(out_tiled - ref))))

    print("KERNEL_OK")
</pallas_src>

<mosaic_0001>
module attributes {stable_mosaic.version = 11 : i64} {
  func.func @_conv_bias_act_kernel(%arg0: i32, %arg1: memref<1024x128xbf16, #tpu.memory_space<vmem>>, %arg2: memref<128x128xbf16, #tpu.memory_space<vmem>>, %arg3: memref<8x128xf32, #tpu.memory_space<vmem>>, %arg4: memref<1024x128xbf16, #tpu.memory_space<vmem>>) attributes {dimension_semantics = [#tpu.dimension_semantics<parallel>], iteration_bounds = array<i64: 2>, scalar_prefetch = 0 : i64, scratch_operands = 0 : i64, tpu.core_type = #tpu.core_type<tc>, window_params = [{transform_indices = @transform_0, window_bounds = array<i64: 1024, 128>}, {pipeline_mode = #tpu.pipeline_mode<synchronous>, transform_indices = @transform_1, window_bounds = array<i64: 128, 128>}, {pipeline_mode = #tpu.pipeline_mode<synchronous>, transform_indices = @transform_2, window_bounds = array<i64: 8, 128>}, {transform_indices = @transform_3, window_bounds = array<i64: 1024, 128>}]} {
    %c0 = arith.constant 0 : index
    %c0_0 = arith.constant 0 : index
    %0 = vector.load %arg1[%c0, %c0_0] : memref<1024x128xbf16, #tpu.memory_space<vmem>>, vector<1024x128xbf16>
    %c0_1 = arith.constant 0 : index
    %c0_2 = arith.constant 0 : index
    %1 = vector.load %arg2[%c0_1, %c0_2] : memref<128x128xbf16, #tpu.memory_space<vmem>>, vector<128x128xbf16>
    %cst = arith.constant dense<0.000000e+00> : vector<1024x128xf32>
    %2 = tpu.matmul %0, %1, %cst {dimension_numbers = #tpu.dot_dimension_numbers<[1], [0], [0], [1], [0, 0, 1, 1], [], []>} : vector<1024x128xbf16>, vector<128x128xbf16>, vector<1024x128xf32> -> vector<1024x128xf32>
    %c0_3 = arith.constant 0 : index
    %c0_4 = arith.constant 0 : index
    %3 = vector.load %arg3[%c0_3, %c0_4] : memref<8x128xf32, #tpu.memory_space<vmem>>, vector<1x128xf32>
    %4 = vector.broadcast %3 : vector<1x128xf32> to vector<1024x128xf32>
    %5 = arith.addf %2, %4 : vector<1024x128xf32>
    %cst_5 = arith.constant 0.000000e+00 : f32
    %6 = vector.broadcast %cst_5 : f32 to vector<1024x128xf32>
    %7 = arith.cmpf ogt, %5, %6 : vector<1024x128xf32>
    %cst_6 = arith.constant 2.000000e-01 : f32
    %8 = vector.broadcast %cst_6 : f32 to vector<1024x128xf32>
    %9 = arith.mulf %8, %5 : vector<1024x128xf32>
    %10 = arith.select %7, %5, %9 : vector<1024x128xi1>, vector<1024x128xf32>
    %11 = arith.truncf %10 : vector<1024x128xf32> to vector<1024x128xbf16>
    %c0_7 = arith.constant 0 : index
    %c0_8 = arith.constant 0 : index
    %12 = vector.load %arg4[%c0_7, %c0_8] : memref<1024x128xbf16, #tpu.memory_space<vmem>>, vector<1024x128xbf16>
    tpu.vector_store %arg4[%c0_7, %c0_8], %11 {strides = array<i32>} : memref<1024x128xbf16, #tpu.memory_space<vmem>>, vector<1024x128xbf16>,
    return
  }
  func.func @transform_0(%arg0: i32) -> (i32, i32) {
    %c0_i32 = arith.constant 0 : i32
    %c0_i32_0 = arith.constant 0 : i32
    return %arg0, %c0_i32 : i32, i32
  }
  func.func @transform_1(%arg0: i32) -> (i32, i32) {
    %c0_i32 = arith.constant 0 : i32
    %c0_i32_0 = arith.constant 0 : i32
    %c0_i32_1 = arith.constant 0 : i32
    return %c0_i32, %c0_i32_0 : i32, i32
  }
  func.func @transform_2(%arg0: i32) -> (i32, i32) {
    %c0_i32 = arith.constant 0 : i32
    %c0_i32_0 = arith.constant 0 : i32
    %c0_i32_1 = arith.constant 0 : i32
    return %c0_i32, %c0_i32_0 : i32, i32
  }
  func.func @transform_3(%arg0: i32) -> (i32, i32) {
    %c0_i32 = arith.constant 0 : i32
    %c0_i32_0 = arith.constant 0 : i32
    return %arg0, %c0_i32 : i32, i32
  }
}

module attributes {stable_mosaic.version = 11 : i64} {
  func.func @_conv_bn_act_fused_kernel(%arg0: i32, %arg1: memref<512x128xbf16, #tpu.memory_space<vmem>>, %arg2: memref<128x128xbf16, #tpu.memory_space<vmem>>, %arg3: memref<8x128xf32, #tpu.memory_space<vmem>>, %arg4: memref<512x128xbf16, #tpu.memory_space<vmem>>) attributes {dimension_semantics = [#tpu.dimension_semantics<arbitrary>], iteration_bounds = array<i64: 1>, scalar_prefetch = 0 : i64, scratch_operands = 0 : i64, tpu.core_type = #tpu.core_type<tc>, window_params = [{pipeline_mode = #tpu.pipeline_mode<synchronous>, transform_indices = @transform_0, window_bounds = array<i64: 512, 128>}, {pipeline_mode = #tpu.pipeline_mode<synchronous>, transform_indices = @transform_1, window_bounds = array<i64: 128, 128>}, {pipeline_mode = #tpu.pipeline_mode<synchronous>, transform_indices = @transform_2, window_bounds = array<i64: 8, 128>}, {pipeline_mode = #tpu.pipeline_mode<synchronous>, transform_indices = @transform_3, window_bounds = array<i64: 512, 128>}]} {
    %c0 = arith.constant 0 : index
    %c0_0 = arith.constant 0 : index
    %0 = vector.load %arg1[%c0, %c0_0] : memref<512x128xbf16, #tpu.memory_space<vmem>>, vector<512x128xbf16>
    %c0_1 = arith.constant 0 : index
    %c0_2 = arith.constant 0 : index
    %1 = vector.load %arg2[%c0_1, %c0_2] : memref<128x128xbf16, #tpu.memory_space<vmem>>, vector<128x128xbf16>
    %cst = arith.constant dense<0.000000e+00> : vector<512x128xf32>
    %2 = tpu.matmul %0, %1, %cst {dimension_numbers = #tpu.dot_dimension_numbers<[1], [0], [0], [1], [0, 0, 1, 1], [], []>} : vector<512x128xbf16>, vector<128x128xbf16>, vector<512x128xf32> -> vector<512x128xf32>
    %cst_3 = arith.constant dense<0.000000e+00> : vector<128xf32>
    %3 = vector.multi_reduction <add>, %2, %cst_3 [0] : vector<512x128xf32> to vector<128xf32>
    %4 = vector.shape_cast %3 : vector<128xf32> to vector<1x128xf32>
    %cst_4 = arith.constant 0.001953125 : f32
    %5 = vector.broadcast %cst_4 : f32 to vector<1x128xf32>
    %6 = arith.mulf %4, %5 : vector<1x128xf32>
    %7 = arith.mulf %2, %2 : vector<512x128xf32>
    %cst_5 = arith.constant dense<0.000000e+00> : vector<128xf32>
    %8 = vector.multi_reduction <add>, %7, %cst_5 [0] : vector<512x128xf32> to vector<128xf32>
    %9 = vector.shape_cast %8 : vector<128xf32> to vector<1x128xf32>
    %cst_6 = arith.constant 0.001953125 : f32
    %10 = vector.broadcast %cst_6 : f32 to vector<1x128xf32>
    %11 = arith.mulf %9, %10 : vector<1x128xf32>
    %12 = arith.mulf %6, %6 : vector<1x128xf32>
    %13 = arith.subf %11, %12 : vector<1x128xf32>
    %c0_7 = arith.constant 0 : index
    %c0_8 = arith.constant 0 : index
    %14 = vector.load %arg3[%c0_7, %c0_8] : memref<8x128xf32, #tpu.memory_space<vmem>>, vector<1x128xf32>
    %cst_9 = arith.constant 9.99999974E-6 : f32
    %15 = vector.broadcast %cst_9 : f32 to vector<1x128xf32>
    %16 = arith.addf %13, %15 : vector<1x128xf32>
    %17 = math.rsqrt %16 : vector<1x128xf32>
    %18 = arith.mulf %14, %17 : vector<1x128xf32>
    %c1 = arith.constant 1 : index
    %c0_10 = arith.constant 0 : index
    %19 = vector.load %arg3[%c1, %c0_10] : memref<8x128xf32, #tpu.memory_space<vmem>>, vector<1x128xf32>
    %20 = arith.mulf %6, %18 : vector<1x128xf32>
    %21 = arith.subf %19, %20 : vector<1x128xf32>
    %22 = vector.broadcast %18 : vector<1x128xf32> to vector<512x128xf32>
    %23 = arith.mulf %2, %22 : vector<512x128xf32>
    %24 = vector.broadcast %21 : vector<1x128xf32> to vector<512x128xf32>
    %25 = arith.addf %23, %24 : vector<512x128xf32>
    %cst_11 = arith.constant 0.000000e+00 : f32
    %26 = vector.broadcast %cst_11 : f32 to vector<512x128xf32>
    %27 = arith.cmpf ogt, %25, %26 : vector<512x128xf32>
    %cst_12 = arith.constant 2.000000e-01 : f32
    %28 = vector.broadcast %cst_12 : f32 to vector<512x128xf32>
    %29 = arith.mulf %28, %25 : vector<512x128xf32>
    %30 = arith.select %27, %25, %29 : vector<512x128xi1>, vector<512x128xf32>
    %31 = arith.truncf %30 : vector<512x128xf32> to vector<512x128xbf16>
    %c0_13 = arith.constant 0 : index
    %c0_14 = arith.constant 0 : index
    %32 = vector.load %arg4[%c0_13, %c0_14] : memref<512x128xbf16, #tpu.memory_space<vmem>>, vector<512x128xbf16>
    tpu.vector_store %arg4[%c0_13, %c0_14], %31 {strides = array<i32>} : memref<512x128xbf16, #tpu.memory_space<vmem>>, vector<512x128xbf16>,
    return
  }
  func.func @transform_0(%arg0: i32) -> (i32, i32) {
    %c0_i32 = arith.constant 0 : i32
    %c0_i32_0 = arith.constant 0 : i32
    %c0_i32_1 = arith.constant 0 : i32
    return %c0_i32, %c0_i32_0 : i32, i32
  }
  func.func @transform_1(%arg0: i32) -> (i32, i32) {
    %c0_i32 = arith.constant 0 : i32
    %c0_i32_0 = arith.constant 0 : i32
    %c0_i32_1 = arith.constant 0 : i32
    return %c0_i32, %c0_i32_0 : i32, i32
  }
  func.func @transform_2(%arg0: i32) -> (i32, i32) {
    %c0_i32 = arith.constant 0 : i32
    %c0_i32_0 = arith.constant 0 : i32
    %c0_i32_1 = arith.constant 0 : i32
    return %c0_i32, %c0_i32_0 : i32, i32
  }
  func.func @transform_3(%arg0: i32) -> (i32, i32) {
    %c0_i32 = arith.constant 0 : i32
    %c0_i32_0 = arith.constant 0 : i32
    %c0_i32_1 = arith.constant 0 : i32
    return %c0_i32, %c0_i32_0 : i32, i32
  }
}

module attributes {stable_mosaic.version = 11 : i64} {
  func.func @_conv_bn_act_fused_kernel(%arg0: i32, %arg1: memref<128x256xbf16, #tpu.memory_space<vmem>>, %arg2: memref<256x128xbf16, #tpu.memory_space<vmem>>, %arg3: memref<8x128xf32, #tpu.memory_space<vmem>>, %arg4: memref<128x128xbf16, #tpu.memory_space<vmem>>) attributes {dimension_semantics = [#tpu.dimension_semantics<arbitrary>], iteration_bounds = array<i64: 1>, scalar_prefetch = 0 : i64, scratch_operands = 0 : i64, tpu.core_type = #tpu.core_type<tc>, window_params = [{pipeline_mode = #tpu.pipeline_mode<synchronous>, transform_indices = @transform_0, window_bounds = array<i64: 128, 256>}, {pipeline_mode = #tpu.pipeline_mode<synchronous>, transform_indices = @transform_1, window_bounds = array<i64: 256, 128>}, {pipeline_mode = #tpu.pipeline_mode<synchronous>, transform_indices = @transform_2, window_bounds = array<i64: 8, 128>}, {pipeline_mode = #tpu.pipeline_mode<synchronous>, transform_indices = @transform_3, window_bounds = array<i64: 128, 128>}]} {
    %c0 = arith.constant 0 : index
    %c0_0 = arith.constant 0 : index
    %0 = vector.load %arg1[%c0, %c0_0] : memref<128x256xbf16, #tpu.memory_space<vmem>>, vector<128x256xbf16>
    %c0_1 = arith.constant 0 : index
    %c0_2 = arith.constant 0 : index
    %1 = vector.load %arg2[%c0_1, %c0_2] : memref<256x128xbf16, #tpu.memory_space<vmem>>, vector<256x128xbf16>
    %cst = arith.constant dense<0.000000e+00> : vector<128x128xf32>
    %2 = tpu.matmul %0, %1, %cst {dimension_numbers = #tpu.dot_dimension_numbers<[1], [0], [0], [1], [0, 0, 1, 1], [], []>} : vector<128x256xbf16>, vector<256x128xbf16>, vector<128x128xf32> -> vector<128x128xf32>
    %cst_3 = arith.constant dense<0.000000e+00> : vector<128xf32>
    %3 = vector.multi_reduction <add>, %2, %cst_3 [0] : vector<128x128xf32> to vector<128xf32>
    %4 = vector.shape_cast %3 : vector<128xf32> to vector<1x128xf32>
    %cst_4 = arith.constant 7.812500e-03 : f32
    %5 = vector.broadcast %cst_4 : f32 to vector<1x128xf32>
    %6 = arith.mulf %4, %5 : vector<1x128xf32>
    %7 = arith.mulf %2, %2 : vector<128x128xf32>
    %cst_5 = arith.constant dense<0.000000e+00> : vector<128xf32>
    %8 = vector.multi_reduction <add>, %7, %cst_5 [0] : vector<128x128xf32> to vector<128xf32>
    %9 = vector.shape_cast %8 : vector<128xf32> to vector<1x128xf32>
    %cst_6 = arith.constant 7.812500e-03 : f32
    %10 = vector.broadcast %cst_6 : f32 to vector<1x128xf32>
    %11 = arith.mulf %9, %10 : vector<1x128xf32>
    %12 = arith.mulf %6, %6 : vector<1x128xf32>
    %13 = arith.subf %11, %12 : vector<1x128xf32>
    %c0_7 = arith.constant 0 : index
    %c0_8 = arith.constant 0 : index
    %14 = vector.load %arg3[%c0_7, %c0_8] : memref<8x128xf32, #tpu.memory_space<vmem>>, vector<1x128xf32>
    %cst_9 = arith.constant 9.99999974E-6 : f32
    %15 = vector.broadcast %cst_9 : f32 to vector<1x128xf32>
    %16 = arith.addf %13, %15 : vector<1x128xf32>
    %17 = math.rsqrt %16 : vector<1x128xf32>
    %18 = arith.mulf %14, %17 : vector<1x128xf32>
    %c1 = arith.constant 1 : index
    %c0_10 = arith.constant 0 : index
    %19 = vector.load %arg3[%c1, %c0_10] : memref<8x128xf32, #tpu.memory_space<vmem>>, vector<1x128xf32>
    %20 = arith.mulf %6, %18 : vector<1x128xf32>
    %21 = arith.subf %19, %20 : vector<1x128xf32>
    %22 = vector.broadcast %18 : vector<1x128xf32> to vector<128x128xf32>
    %23 = arith.mulf %2, %22 : vector<128x128xf32>
    %24 = vector.broadcast %21 : vector<1x128xf32> to vector<128x128xf32>
    %25 = arith.addf %23, %24 : vector<128x128xf32>
    %cst_11 = arith.constant 0.000000e+00 : f32
    %26 = vector.broadcast %cst_11 : f32 to vector<128x128xf32>
    %27 = arith.cmpf ogt, %25, %26 : vector<128x128xf32>
    %cst_12 = arith.constant 2.000000e-01 : f32
    %28 = vector.broadcast %cst_12 : f32 to vector<128x128xf32>
    %29 = arith.mulf %28, %25 : vector<128x128xf32>
    %30 = arith.select %27, %25, %29 : vector<128x128xi1>, vector<128x128xf32>
    %31 = arith.truncf %30 : vector<128x128xf32> to vector<128x128xbf16>
    %c0_13 = arith.constant 0 : index
    %c0_14 = arith.constant 0 : index
    %32 = vector.load %arg4[%c0_13, %c0_14] : memref<128x128xbf16, #tpu.memory_space<vmem>>, vector<128x128xbf16>
    tpu.vector_store %arg4[%c0_13, %c0_14], %31 {strides = array<i32>} : memref<128x128xbf16, #tpu.memory_space<vmem>>, vector<128x128xbf16>,
    return
  }
  func.func @transform_0(%arg0: i32) -> (i32, i32) {
    %c0_i32 = arith.constant 0 : i32
    %c0_i32_0 = arith.constant 0 : i32
    %c0_i32_1 = arith.constant 0 : i32
    return %c0_i32, %c0_i32_0 : i32, i32
  }
  func.func @transform_1(%arg0: i32) -> (i32, i32) {
    %c0_i32 = arith.constant 0 : i32
    %c0_i32_0 = arith.constant 0 : i32
    %c0_i32_1 = arith.constant 0 : i32
    return %c0_i32, %c0_i32_0 : i32, i32
  }
  func.func @transform_2(%arg0: i32) -> (i32, i32) {
    %c0_i32 = arith.constant 0 : i32
    %c0_i32_0 = arith.constant 0 : i32
    %c0_i32_1 = arith.constant 0 : i32
    return %c0_i32, %c0_i32_0 : i32, i32
  }
  func.func @transform_3(%arg0: i32) -> (i32, i32) {
    %c0_i32 = arith.constant 0 : i32
    %c0_i32_0 = arith.constant 0 : i32
    %c0_i32_1 = arith.constant 0 : i32
    return %c0_i32, %c0_i32_0 : i32, i32
  }
}

module attributes {stable_mosaic.version = 11 : i64} {
  func.func @_conv_bn_act_fused_kernel(%arg0: i32, %arg1: memref<112x512xbf16, #tpu.memory_space<vmem>>, %arg2: memref<512x128xbf16, #tpu.memory_space<vmem>>, %arg3: memref<8x128xf32, #tpu.memory_space<vmem>>, %arg4: memref<112x128xbf16, #tpu.memory_space<vmem>>) attributes {dimension_semantics = [#tpu.dimension_semantics<arbitrary>], iteration_bounds = array<i64: 1>, scalar_prefetch = 0 : i64, scratch_operands = 0 : i64, tpu.core_type = #tpu.core_type<tc>, window_params = [{pipeline_mode = #tpu.pipeline_mode<synchronous>, transform_indices = @transform_0, window_bounds = array<i64: 112, 512>}, {pipeline_mode = #tpu.pipeline_mode<synchronous>, transform_indices = @transform_1, window_bounds = array<i64: 512, 128>}, {pipeline_mode = #tpu.pipeline_mode<synchronous>, transform_indices = @transform_2, window_bounds = array<i64: 8, 128>}, {pipeline_mode = #tpu.pipeline_mode<synchronous>, transform_indices = @transform_3, window_bounds = array<i64: 112, 128>}]} {
    %c0 = arith.constant 0 : index
    %c0_0 = arith.constant 0 : index
    %0 = vector.load %arg1[%c0, %c0_0] : memref<112x512xbf16, #tpu.memory_space<vmem>>, vector<112x512xbf16>
    %c0_1 = arith.constant 0 : index
    %c0_2 = arith.constant 0 : index
    %1 = vector.load %arg2[%c0_1, %c0_2] : memref<512x128xbf16, #tpu.memory_space<vmem>>, vector<512x128xbf16>
    %cst = arith.constant dense<0.000000e+00> : vector<112x128xf32>
    %2 = tpu.matmul %0, %1, %cst {dimension_numbers = #tpu.dot_dimension_numbers<[1], [0], [0], [1], [0, 0, 1, 1], [], []>} : vector<112x512xbf16>, vector<512x128xbf16>, vector<112x128xf32> -> vector<112x128xf32>
    %cst_3 = arith.constant dense<0.000000e+00> : vector<128xf32>
    %3 = vector.multi_reduction <add>, %2, %cst_3 [0] : vector<112x128xf32> to vector<128xf32>
    %4 = vector.shape_cast %3 : vector<128xf32> to vector<1x128xf32>
    %cst_4 = arith.constant 0.0102040814 : f32
    %5 = vector.broadcast %cst_4 : f32 to vector<1x128xf32>
    %6 = arith.mulf %4, %5 : vector<1x128xf32>
    %7 = arith.mulf %2, %2 : vector<112x128xf32>
    %cst_5 = arith.constant dense<0.000000e+00> : vector<128xf32>
    %8 = vector.multi_reduction <add>, %7, %cst_5 [0] : vector<112x128xf32> to vector<128xf32>
    %9 = vector.shape_cast %8 : vector<128xf32> to vector<1x128xf32>
    %cst_6 = arith.constant 0.0102040814 : f32
    %10 = vector.broadcast %cst_6 : f32 to vector<1x128xf32>
    %11 = arith.mulf %9, %10 : vector<1x128xf32>
    %12 = arith.mulf %6, %6 : vector<1x128xf32>
    %13 = arith.subf %11, %12 : vector<1x128xf32>
    %c0_7 = arith.constant 0 : index
    %c0_8 = arith.constant 0 : index
    %14 = vector.load %arg3[%c0_7, %c0_8] : memref<8x128xf32, #tpu.memory_space<vmem>>, vector<1x128xf32>
    %cst_9 = arith.constant 9.99999974E-6 : f32
    %15 = vector.broadcast %cst_9 : f32 to vector<1x128xf32>
    %16 = arith.addf %13, %15 : vector<1x128xf32>
    %17 = math.rsqrt %16 : vector<1x128xf32>
    %18 = arith.mulf %14, %17 : vector<1x128xf32>
    %c1 = arith.constant 1 : index
    %c0_10 = arith.constant 0 : index
    %19 = vector.load %arg3[%c1, %c0_10] : memref<8x128xf32, #tpu.memory_space<vmem>>, vector<1x128xf32>
    %20 = arith.mulf %6, %18 : vector<1x128xf32>
    %21 = arith.subf %19, %20 : vector<1x128xf32>
    %22 = vector.broadcast %18 : vector<1x128xf32> to vector<112x128xf32>
    %23 = arith.mulf %2, %22 : vector<112x128xf32>
    %24 = vector.broadcast %21 : vector<1x128xf32> to vector<112x128xf32>
    %25 = arith.addf %23, %24 : vector<112x128xf32>
    %cst_11 = arith.constant 0.000000e+00 : f32
    %26 = vector.broadcast %cst_11 : f32 to vector<112x128xf32>
    %27 = arith.cmpf ogt, %25, %26 : vector<112x128xf32>
    %cst_12 = arith.constant 2.000000e-01 : f32
    %28 = vector.broadcast %cst_12 : f32 to vector<112x128xf32>
    %29 = arith.mulf %28, %25 : vector<112x128xf32>
    %30 = arith.select %27, %25, %29 : vector<112x128xi1>, vector<112x128xf32>
    %31 = arith.truncf %30 : vector<112x128xf32> to vector<112x128xbf16>
    %c0_13 = arith.constant 0 : index
    %c0_14 = arith.constant 0 : index
    %32 = vector.load %arg4[%c0_13, %c0_14] : memref<112x128xbf16, #tpu.memory_space<vmem>>, vector<112x128xbf16>
    tpu.vector_store %arg4[%c0_13, %c0_14], %31 {strides = array<i32>} : memref<112x128xbf16, #tpu.memory_space<vmem>>, vector<112x128xbf16>,
    return
  }
  func.func @transform_0(%arg0: i32) -> (i32, i32) {
    %c0_i32 = arith.constant 0 : i32
    %c0_i32_0 = arith.constant 0 : i32
    %c0_i32_1 = arith.constant 0 : i32
    return %c0_i32, %c0_i32_0 : i32, i32
  }
  func.func @transform_1(%arg0: i32) -> (i32, i32) {
    %c0_i32 = arith.constant 0 : i32
    %c0_i32_0 = arith.constant 0 : i32
    %c0_i32_1 = arith.constant 0 : i32
    return %c0_i32, %c0_i32_0 : i32, i32
  }
  func.func @transform_2(%arg0: i32) -> (i32, i32) {
    %c0_i32 = arith.constant 0 : i32
    %c0_i32_0 = arith.constant 0 : i32
    %c0_i32_1 = arith.constant 0 : i32
    return %c0_i32, %c0_i32_0 : i32, i32
  }
  func.func @transform_3(%arg0: i32) -> (i32, i32) {
    %c0_i32 = arith.constant 0 : i32
    %c0_i32_0 = arith.constant 0 : i32
    %c0_i32_1 = arith.constant 0 : i32
    return %c0_i32, %c0_i32_0 : i32, i32
  }
}

module attributes {stable_mosaic.version = 11 : i64} {
  func.func @_conv_bias_act_kernel(%arg0: i32, %arg1: memref<48x1024xbf16, #tpu.memory_space<vmem>>, %arg2: memref<1024x128xbf16, #tpu.memory_space<vmem>>, %arg3: memref<8x128xf32, #tpu.memory_space<vmem>>, %arg4: memref<48x128xf32, #tpu.memory_space<vmem>>) attributes {dimension_semantics = [#tpu.dimension_semantics<parallel>], iteration_bounds = array<i64: 2>, scalar_prefetch = 0 : i64, scratch_operands = 0 : i64, tpu.core_type = #tpu.core_type<tc>, window_params = [{transform_indices = @transform_0, window_bounds = array<i64: 48, 1024>}, {pipeline_mode = #tpu.pipeline_mode<synchronous>, transform_indices = @transform_1, window_bounds = array<i64: 1024, 128>}, {pipeline_mode = #tpu.pipeline_mode<synchronous>, transform_indices = @transform_2, window_bounds = array<i64: 8, 128>}, {transform_indices = @transform_3, window_bounds = array<i64: 48, 128>}]} {
    %c0 = arith.constant 0 : index
    %c0_0 = arith.constant 0 : index
    %0 = vector.load %arg1[%c0, %c0_0] : memref<48x1024xbf16, #tpu.memory_space<vmem>>, vector<48x1024xbf16>
    %c0_1 = arith.constant 0 : index
    %c0_2 = arith.constant 0 : index
    %1 = vector.load %arg2[%c0_1, %c0_2] : memref<1024x128xbf16, #tpu.memory_space<vmem>>, vector<1024x128xbf16>
    %cst = arith.constant dense<0.000000e+00> : vector<48x128xf32>
    %2 = tpu.matmul %0, %1, %cst {dimension_numbers = #tpu.dot_dimension_numbers<[1], [0], [0], [1], [0, 0, 1, 1], [], []>} : vector<48x1024xbf16>, vector<1024x128xbf16>, vector<48x128xf32> -> vector<48x128xf32>
    %c0_3 = arith.constant 0 : index
    %c0_4 = arith.constant 0 : index
    %3 = vector.load %arg3[%c0_3, %c0_4] : memref<8x128xf32, #tpu.memory_space<vmem>>, vector<1x128xf32>
    %4 = vector.broadcast %3 : vector<1x128xf32> to vector<48x128xf32>
    %5 = arith.addf %2, %4 : vector<48x128xf32>
    %c0_5 = arith.constant 0 : index
    %c0_6 = arith.constant 0 : index
    %6 = vector.load %arg4[%c0_5, %c0_6] : memref<48x128xf32, #tpu.memory_space<vmem>>, vector<48x128xf32>
    tpu.vector_store %arg4[%c0_5, %c0_6], %5 {strides = array<i32>} : memref<48x128xf32, #tpu.memory_space<vmem>>, vector<48x128xf32>,
    return
  }
  func.func @transform_0(%arg0: i32) -> (i32, i32) {
    %c0_i32 = arith.constant 0 : i32
    %c0_i32_0 = arith.constant 0 : i32
    return %arg0, %c0_i32 : i32, i32
  }
  func.func @transform_1(%arg0: i32) -> (i32, i32) {
    %c0_i32 = arith.constant 0 : i32
    %c0_i32_0 = arith.constant 0 : i32
    %c0_i32_1 = arith.constant 0 : i32
    return %c0_i32, %c0_i32_0 : i32, i32
  }
  func.func @transform_2(%arg0: i32) -> (i32, i32) {
    %c0_i32 = arith.constant 0 : i32
    %c0_i32_0 = arith.constant 0 : i32
    %c0_i32_1 = arith.constant 0 : i32
    return %c0_i32, %c0_i32_0 : i32, i32
  }
  func.func @transform_3(%arg0: i32) -> (i32, i32) {
    %c0_i32 = arith.constant 0 : i32
    %c0_i32_0 = arith.constant 0 : i32
    return %arg0, %c0_i32 : i32, i32
  }
}

</mosaic_0001>

<llo_original>
// kernel: _lambda_.5
$region0: #{_lambda_.5}
  #allocation0 [shape = 'u32[]', space=smem, size = 0x4, offset = 0x4, fixed_abs, tag = 'smem constant byte address 0x4 - core index']
  #allocation1 [shape = 'u32[72,128]{1,0:T(1,128)}', space=vmem, size = 0x9000, scoped, tag = 'internal scratch']
  %s0 = inlined_call_operand.vmem [shape: bf16[2048,128], index: 0, kind: input, shape index: {}]
  %s1 = inlined_call_operand.vmem [shape: bf16[128,128], index: 1, kind: input, shape index: {}]
  %s2 = inlined_call_operand.vmem [shape: f32[8,128], index: 2, kind: input, shape index: {}]
  %s3 = inlined_call_operand.vmem [shape: bf16[2048,128], index: 3, kind: output, shape index: {}]
  %s4 = sld [smem:[#allocation0]]
  $region45: #{_lambda_.5} parent=0
    _
  %s6 = ssub.s32 1, %s4
  %s7 = scalar_select 0, %s6, %s4
  loop: start=0, step=1, limit=4
  $region2: #{_lambda_.5} parent=0 // loop_pre_header
    _
  $region3: #{_lambda_.5} parent=0 // loop_header
    %s9 = sphi 0, %s13
    %p10 = scmp.ge.s32.totalorder %s9, 4
    %s19 = sphi 0, %s21
    %s22 = sphi 0, %s19
    %s23 = sphi 0, %s22
    %s39 = sphi 0, %s23
    %s43 = sphi 0, %s43
    %s45 = sphi 0, %s43
    %s46 = sphi 0, %s45
    %s60 = sphi 0, %s46
    %s64 = sphi 0, %s64
    %s66 = sphi 0, %s64
    %s67 = sphi 0, %s66
    %s81 = sphi 0, %s67
    %s87 = sphi 0, %s89
    %s90 = sphi 0, %s87
    %s91 = sphi 0, %s90
    %s107 = sphi 0, %s91
  $region4: #{_lambda_.5} parent=0 // loop_header_branch
    %12 = sbr.rel (%p10) target = $region8
  $region5: #{_lambda_.5} parent=0 // loop_body
    %s14 = ssub.s32 %s9, 1
    %s15 = ssub.s32 %s9, 2
    %s16 = sadd.s32 %s9, 1
    %s17 = ssub.s32 %s9, %s16
    %p18 = scmp.eq.s32.totalorder %s17, 0
    %s20 = sadd.s32 %s19, 1
    %s21 = scalar_select %p18, %s19, %s20
    %p24 = pneg %p18
    %p25 = scmp.eq.s32.totalorder %s9, 1
    %p26 = por %p24, %p25
    %p27 = scmp.ne.s32.totalorder %s19, %s22
    %p28 = scmp.eq.s32.totalorder %s9, 0
    %p29 = por %p27, %p28
    %p30 = scmp.ne.s32.totalorder %s19, %s22
    %p31 = scmp.eq.s32.totalorder %s14, 1
    %p32 = por %p30, %p31
    %p33 = scmp.ne.s32.totalorder %s22, %s23
    %p34 = scmp.eq.s32.totalorder %s14, 0
    %p35 = por %p33, %p34
    %p36 = scmp.ne.s32.totalorder %s22, %s23
    %p37 = scmp.eq.s32.totalorder %s15, 1
    %p38 = por %p36, %p37
    %p40 = scmp.ne.s32.totalorder %s23, %s39
    %p41 = scmp.eq.s32.totalorder %s15, 0
    %p42 = por %p40, %p41
    %s44 = sadd.s32 %s43, 1
    %p47 = scmp.eq.s32.totalorder %s9, 1
    %p48 = scmp.ne.s32.totalorder %s43, %s45
    %p49 = scmp.eq.s32.totalorder %s9, 0
    %p50 = por %p48, %p49
    %p51 = scmp.ne.s32.totalorder %s43, %s45
    %p52 = scmp.eq.s32.totalorder %s14, 1
    %p53 = por %p51, %p52
    %p54 = scmp.ne.s32.totalorder %s45, %s46
    %p55 = scmp.eq.s32.totalorder %s14, 0
    %p56 = por %p54, %p55
    %p57 = scmp.ne.s32.totalorder %s45, %s46
    %p58 = scmp.eq.s32.totalorder %s15, 1
    %p59 = por %p57, %p58
    %p61 = scmp.ne.s32.totalorder %s46, %s60
    %p62 = scmp.eq.s32.totalorder %s15, 0
    %p63 = por %p61, %p62
    %s65 = sadd.s32 %s64, 1
    %p68 = scmp.eq.s32.totalorder %s9, 1
    %p69 = scmp.ne.s32.totalorder %s64, %s66
    %p70 = scmp.eq.s32.totalorder %s9, 0
    %p71 = por %p69, %p70
    %p72 = scmp.ne.s32.totalorder %s64, %s66
    %p73 = scmp.eq.s32.totalorder %s14, 1
    %p74 = por %p72, %p73
    %p75 = scmp.ne.s32.totalorder %s66, %s67
    %p76 = scmp.eq.s32.totalorder %s14, 0
    %p77 = por %p75, %p76
    %p78 = scmp.ne.s32.totalorder %s66, %s67
    %p79 = scmp.eq.s32.totalorder %s15, 1
    %p80 = por %p78, %p79
    %p82 = scmp.ne.s32.totalorder %s67, %s81
    %p83 = scmp.eq.s32.totalorder %s15, 0
    %p84 = por %p82, %p83
    %s85 = ssub.s32 %s9, %s16
    %p86 = scmp.eq.s32.totalorder %s85, 0
    %s88 = sadd.s32 %s87, 1
    %s89 = scalar_select %p86, %s87, %s88
    %p92 = pneg %p86
    %p93 = scmp.eq.s32.totalorder %s9, 1
    %p94 = por %p92, %p93
    %p95 = scmp.ne.s32.totalorder %s87, %s90
    %p96 = scmp.eq.s32.totalorder %s9, 0
    %p97 = por %p95, %p96
    %p98 = scmp.ne.s32.totalorder %s87, %s90
    %p99 = scmp.eq.s32.totalorder %s14, 1
    %p100 = por %p98, %p99
    %p101 = scmp.ne.s32.totalorder %s90, %s91
    %p102 = scmp.eq.s32.totalorder %s14, 0
    %p103 = por %p101, %p102
    %p104 = scmp.ne.s32.totalorder %s90, %s91
    %p105 = scmp.eq.s32.totalorder %s15, 1
    %p106 = por %p104, %p105
    %p108 = scmp.ne.s32.totalorder %s91, %s107
    %p109 = scmp.eq.s32.totalorder %s15, 0
    %p110 = por %p108, %p109
    %p111 = scmp.le.s32.totalorder 1, %s9
    %p112 = scmp.lt.s32.totalorder %s9, 3
    %p113 = pnand %p111, %p112
    %p114 = pneg %p113
    // Predicated region
    $region9: #{_lambda_.5} parent=5 // pred_check
      _
    $region10: #{_lambda_.5} parent=5 // pred_check_branch
      %116 = sbr.rel (%p113) target = $region12
    $region11: #{_lambda_.5} parent=5 // pred_region
      %s117 = ssub.s32 %s9, 1
      // Predicated region
      $region13: #{_lambda_.5} parent=11 // pred_check
        %p118 = pneg %p56
      $region14: #{_lambda_.5} parent=11 // pred_check_branch
        %120 = sbr.rel (%p118) target = $region16
      $region15: #{_lambda_.5} parent=11 // pred_region
        _
      $region16: #{_lambda_.5} parent=11 // pred_fallthru
        _
      // Predicated region
      $region17: #{_lambda_.5} parent=11 // pred_check
        %p121 = pneg %p77
      $region18: #{_lambda_.5} parent=11 // pred_check_branch
        %123 = sbr.rel (%p121) target = $region20
      $region19: #{_lambda_.5} parent=11 // pred_region
        _
      $region20: #{_lambda_.5} parent=11 // pred_fallthru
        _
    $region12: #{_lambda_.5} parent=5 // pred_fallthru
      _
    %p124 = scmp.lt.s32.totalorder %s9, 2
    // Predicated region
    $region21: #{_lambda_.5} parent=5 // pred_check
      %p125 = pneg %p124
    $region22: #{_lambda_.5} parent=5 // pred_check_branch
      %127 = sbr.rel (%p125) target = $region24
    $region23: #{_lambda_.5} parent=5 // pred_region
      // Predicated region
      $region25: #{_lambda_.5} parent=23 // pred_check
        %p128 = pneg %p29
      $region26: #{_lambda_.5} parent=23 // pred_check_branch
        %130 = sbr.rel (%p128) target = $region28
      $region27: #{_lambda_.5} parent=23 // pred_region
        %s131 = smul.u32 128, %s9
        %p132 = scmp.lt.s32.totalorder %s131, 255
        %s133 = scalar_select %p132, %s131, 255
        %s134 = smul.addr %s133, 4
        %s135 = scalar_lea.vmem %s0, %s134
        %s136 = smul.u32 128, %s9
      $region28: #{_lambda_.5} parent=23 // pred_fallthru
        _
    $region24: #{_lambda_.5} parent=5 // pred_fallthru
      _
    %p137 = scmp.le.s32.totalorder 1, %s9
    %p138 = scmp.lt.s32.totalorder %s9, 3
    %p139 = pnand %p137, %p138
    %p140 = pneg %p139
    // Predicated region
    $region29: #{_lambda_.5} parent=5 // pred_check
      _
    $region30: #{_lambda_.5} parent=5 // pred_check_branch
      %142 = sbr.rel (%p139) target = $region32
    $region31: #{_lambda_.5} parent=5 // pred_region
      %s143 = ssub.s32 %s9, 1
      %s144 = smul.u32 128, %s14
      %p145 = scmp.lt.s32.totalorder %s144, 255
      %s146 = scalar_select %p145, %s144, 255
      %s147 = smul.addr %s146, 4
      %s148 = scalar_lea.vmem %s0, %s147
      %p149 = pneg %p35
      %p150 = pneg %p32
      %p151 = pneg %p56
      %p152 = pneg %p53
      %p153 = pneg %p77
      %p154 = pneg %p74
      %p155 = pneg %p103
      %p156 = pneg %p100
      %s157 = smul.u32 128, %s14
      %p158 = scmp.lt.s32.totalorder %s157, 255
      %s159 = scalar_select %p158, %s157, 255
      %s160 = smul.addr %s159, 4
      %s161 = scalar_lea.vmem %s3, %s160
      %s162 = smul.u32 128, %s14
      %p163 = scmp.lt.s32.totalorder %s162, 255
      %s164 = scalar_select %p163, %s162, 255
      %s165 = smul.addr %s164, 4
      %s166 = scalar_lea.vmem %s0, %s165
      %s167 = smul.u32 128, %s14
      %s168 = smul.u32 128, %s14
      %p169 = scmp.lt.s32.totalorder %s168, 255
      %s170 = scalar_select %p169, %s168, 255
      %s171 = smul.addr %s170, 4
      %s172 = scalar_lea.vmem %s3, %s171
      %s173 = smul.u32 128, %s14
      %v174 = vld [vmem:[%s166] sm:$0xf]
      %v175 = vld [vmem:[%s166 + $0x4] sm:$0xf]
      %v176 = vld [vmem:[%s166 + $0x8] sm:$0xf]
      %v177 = vld [vmem:[%s166 + $0xc] sm:$0xf]
      %v178 = vld [vmem:[%s166 + $0x10] sm:$0xf]
      %v179 = vld [vmem:[%s166 + $0x14] sm:$0xf]
      %v180 = vld [vmem:[%s166 + $0x18] sm:$0xf]
      %v181 = vld [vmem:[%s166 + $0x1c] sm:$0xf]
      %v182 = vld [vmem:[%s166 + $0x20] sm:$0xf]
      %v183 = vld [vmem:[%s166 + $0x24] sm:$0xf]
      %v184 = vld [vmem:[%s166 + $0x28] sm:$0xf]
      %v185 = vld [vmem:[%s166 + $0x2c] sm:$0xf]
      %v186 = vld [vmem:[%s166 + $0x30] sm:$0xf]
      %v187 = vld [vmem:[%s166 + $0x34] sm:$0xf]
      %v188 = vld [vmem:[%s166 + $0x38] sm:$0xf]
      %v189 = vld [vmem:[%s166 + $0x3c] sm:$0xf]
      %v190 = vld [vmem:[%s166 + $0x40] sm:$0xf]
      %v191 = vld [vmem:[%s166 + $0x44] sm:$0xf]
      %v192 = vld [vmem:[%s166 + $0x48] sm:$0xf]
      %v193 = vld [vmem:[%s166 + $0x4c] sm:$0xf]
      %v194 = vld [vmem:[%s166 + $0x50] sm:$0xf]
      %v195 = vld [vmem:[%s166 + $0x54] sm:$0xf]
      %v196 = vld [vmem:[%s166 + $0x58] sm:$0xf]
      %v197 = vld [vmem:[%s166 + $0x5c] sm:$0xf]
      %v198 = vld [vmem:[%s166 + $0x60] sm:$0xf]
      %v199 = vld [vmem:[%s166 + $0x64] sm:$0xf]
      %v200 = vld [vmem:[%s166 + $0x68] sm:$0xf]
      %v201 = vld [vmem:[%s166 + $0x6c] sm:$0xf]
      %v202 = vld [vmem:[%s166 + $0x70] sm:$0xf]
      %v203 = vld [vmem:[%s166 + $0x74] sm:$0xf]
      %v204 = vld [vmem:[%s166 + $0x78] sm:$0xf]
      %v205 = vld [vmem:[%s166 + $0x7c] sm:$0xf]
      %v206 = vld [vmem:[%s166 + $0x80] sm:$0xf]
      %v207 = vld [vmem:[%s166 + $0x84] sm:$0xf]
      %v208 = vld [vmem:[%s166 + $0x88] sm:$0xf]
      %v209 = vld [vmem:[%s166 + $0x8c] sm:$0xf]
      %v210 = vld [vmem:[%s166 + $0x90] sm:$0xf]
      %v211 = vld [vmem:[%s166 + $0x94] sm:$0xf]
      %v212 = vld [vmem:[%s166 + $0x98] sm:$0xf]
      %v213 = vld [vmem:[%s166 + $0x9c] sm:$0xf]
      %v214 = vld [vmem:[%s166 + $0xa0] sm:$0xf]
      %v215 = vld [vmem:[%s166 + $0xa4] sm:$0xf]
      %v216 = vld [vmem:[%s166 + $0xa8] sm:$0xf]
      %v217 = vld [vmem:[%s166 + $0xac] sm:$0xf]
      %v218 = vld [vmem:[%s166 + $0xb0] sm:$0xf]
      %v219 = vld [vmem:[%s166 + $0xb4] sm:$0xf]
      %v220 = vld [vmem:[%s166 + $0xb8] sm:$0xf]
      %v221 = vld [vmem:[%s166 + $0xbc] sm:$0xf]
      %v222 = vld [vmem:[%s166 + $0xc0] sm:$0xf]
      %v223 = vld [vmem:[%s166 + $0xc4] sm:$0xf]
      %v224 = vld [vmem:[%s166 + $0xc8] sm:$0xf]
      %v225 = vld [vmem:[%s166 + $0xcc] sm:$0xf]
      %v226 = vld [vmem:[%s166 + $0xd0] sm:$0xf]
      %v227 = vld [vmem:[%s166 + $0xd4] sm:$0xf]
      %v228 = vld [vmem:[%s166 + $0xd8] sm:$0xf]
      %v229 = vld [vmem:[%s166 + $0xdc] sm:$0xf]
      %v230 = vld [vmem:[%s166 + $0xe0] sm:$0xf]
      %v231 = vld [vmem:[%s166 + $0xe4] sm:$0xf]
      %v232 = vld [vmem:[%s166 + $0xe8] sm:$0xf]
      %v233 = vld [vmem:[%s166 + $0xec] sm:$0xf]
      %v234 = vld [vmem:[%s166 + $0xf0] sm:$0xf]
      %v235 = vld [vmem:[%s166 + $0xf4] sm:$0xf]
      %v236 = vld [vmem:[%s166 + $0xf8] sm:$0xf]
      %v237 = vld [vmem:[%s166 + $0xfc] sm:$0xf]
      %v238 = vld [vmem:[%s166 + $0x100] sm:$0xf]
      %v239 = vld [vmem:[%s166 + $0x104] sm:$0xf]
      %v240 = vld [vmem:[%s166 + $0x108] sm:$0xf]
      %v241 = vld [vmem:[%s166 + $0x10c] sm:$0xf]
      %v242 = vld [vmem:[%s166 + $0x110] sm:$0xf]
      %v243 = vld [vmem:[%s166 + $0x114] sm:$0xf]
      %v244 = vld [vmem:[%s166 + $0x118] sm:$0xf]
      %v245 = vld [vmem:[%s166 + $0x11c] sm:$0xf]
      %v246 = vld [vmem:[%s166 + $0x120] sm:$0xf]
      %v247 = vld [vmem:[%s166 + $0x124] sm:$0xf]
      %v248 = vld [vmem:[%s166 + $0x128] sm:$0xf]
      %v249 = vld [vmem:[%s166 + $0x12c] sm:$0xf]
      %v250 = vld [vmem:[%s166 + $0x130] sm:$0xf]
      %v251 = vld [vmem:[%s166 + $0x134] sm:$0xf]
      %v252 = vld [vmem:[%s166 + $0x138] sm:$0xf]
      %v253 = vld [vmem:[%s166 + $0x13c] sm:$0xf]
      %v254 = vld [vmem:[%s166 + $0x140] sm:$0xf]
      %v255 = vld [vmem:[%s166 + $0x144] sm:$0xf]
      %v256 = vld [vmem:[%s166 + $0x148] sm:$0xf]
      %v257 = vld [vmem:[%s166 + $0x14c] sm:$0xf]
      %v258 = vld [vmem:[%s166 + $0x150] sm:$0xf]
      %v259 = vld [vmem:[%s166 + $0x154] sm:$0xf]
      %v260 = vld [vmem:[%s166 + $0x158] sm:$0xf]
      %v261 = vld [vmem:[%s166 + $0x15c] sm:$0xf]
      %v262 = vld [vmem:[%s166 + $0x160] sm:$0xf]
      %v263 = vld [vmem:[%s166 + $0x164] sm:$0xf]
      %v264 = vld [vmem:[%s166 + $0x168] sm:$0xf]
      %v265 = vld [vmem:[%s166 + $0x16c] sm:$0xf]
      %v266 = vld [vmem:[%s166 + $0x170] sm:$0xf]
      %v267 = vld [vmem:[%s166 + $0x174] sm:$0xf]
      %v268 = vld [vmem:[%s166 + $0x178] sm:$0xf]
      %v269 = vld [vmem:[%s166 + $0x17c] sm:$0xf]
      %v270 = vld [vmem:[%s166 + $0x180] sm:$0xf]
      %v271 = vld [vmem:[%s166 + $0x184] sm:$0xf]
      %v272 = vld [vmem:[%s166 + $0x188] sm:$0xf]
      %v273 = vld [vmem:[%s166 + $0x18c] sm:$0xf]
      %v274 = vld [vmem:[%s166 + $0x190] sm:$0xf]
      %v275 = vld [vmem:[%s166 + $0x194] sm:$0xf]
      %v276 = vld [vmem:[%s166 + $0x198] sm:$0xf]
      %v277 = vld [vmem:[%s166 + $0x19c] sm:$0xf]
      %v278 = vld [vmem:[%s166 + $0x1a0] sm:$0xf]
      %v279 = vld [vmem:[%s166 + $0x1a4] sm:$0xf]
      %v280 = vld [vmem:[%s166 + $0x1a8] sm:$0xf]
      %v281 = vld [vmem:[%s166 + $0x1ac] sm:$0xf]
      %v282 = vld [vmem:[%s166 + $0x1b0] sm:$0xf]
      %v283 = vld [vmem:[%s166 + $0x1b4] sm:$0xf]
      %v284 = vld [vmem:[%s166 + $0x1b8] sm:$0xf]
      %v285 = vld [vmem:[%s166 + $0x1bc] sm:$0xf]
      %v286 = vld [vmem:[%s166 + $0x1c0] sm:$0xf]
      %v287 = vld [vmem:[%s166 + $0x1c4] sm:$0xf]
      %v288 = vld [vmem:[%s166 + $0x1c8] sm:$0xf]
      %v289 = vld [vmem:[%s166 + $0x1cc] sm:$0xf]
      %v290 = vld [vmem:[%s166 + $0x1d0] sm:$0xf]
      %v291 = vld [vmem:[%s166 + $0x1d4] sm:$0xf]
      %v292 = vld [vmem:[%s166 + $0x1d8] sm:$0xf]
      %v293 = vld [vmem:[%s166 + $0x1dc] sm:$0xf]
      %v294 = vld [vmem:[%s166 + $0x1e0] sm:$0xf]
      %v295 = vld [vmem:[%s166 + $0x1e4] sm:$0xf]
      %v296 = vld [vmem:[%s166 + $0x1e8] sm:$0xf]
      %v297 = vld [vmem:[%s166 + $0x1ec] sm:$0xf]
      %v298 = vld [vmem:[%s166 + $0x1f0] sm:$0xf]
      %v299 = vld [vmem:[%s166 + $0x1f4] sm:$0xf]
      %v300 = vld [vmem:[%s166 + $0x1f8] sm:$0xf]
      %v301 = vld [vmem:[%s166 + $0x1fc] sm:$0xf]
      %v302 = vld [vmem:[%s1] sm:$0xf]
      %v303 = vld [vmem:[%s1 + $0x4] sm:$0xf]
      %v304 = vld [vmem:[%s1 + $0x8] sm:$0xf]
      %v305 = vld [vmem:[%s1 + $0xc] sm:$0xf]
      %v306 = vld [vmem:[%s1 + $0x10] sm:$0xf]
      %v307 = vld [vmem:[%s1 + $0x14] sm:$0xf]
      %v308 = vld [vmem:[%s1 + $0x18] sm:$0xf]
      %v309 = vld [vmem:[%s1 + $0x1c] sm:$0xf]
      %v310 = vld [vmem:[%s1 + $0x20] sm:$0xf]
      %v311 = vld [vmem:[%s1 + $0x24] sm:$0xf]
      %v312 = vld [vmem:[%s1 + $0x28] sm:$0xf]
      %v313 = vld [vmem:[%s1 + $0x2c] sm:$0xf]
      %v314 = vld [vmem:[%s1 + $0x30] sm:$0xf]
      %v315 = vld [vmem:[%s1 + $0x34] sm:$0xf]
      %v316 = vld [vmem:[%s1 + $0x38] sm:$0xf]
      %v317 = vld [vmem:[%s1 + $0x3c] sm:$0xf]
      %v318 = vld [vmem:[%s2] sm:$0x1]
      %v319 = vperm.slane %v318, 0
      %v448 = vunpack.c.l.b16 %v174
      %v449 = vunpack.c.l.b16 %v175
      %v450 = vunpack.c.l.b16 %v176
      %v451 = vunpack.c.l.b16 %v177
      %v452 = vunpack.c.l.b16 %v178
      %v453 = vunpack.c.l.b16 %v179
      %v454 = vunpack.c.l.b16 %v180
      %v455 = vunpack.c.l.b16 %v181
      %v456 = vunpack.c.l.b16 %v182
      %v457 = vunpack.c.l.b16 %v183
      %v458 = vunpack.c.l.b16 %v184
      %v459 = vunpack.c.l.b16 %v185
      %v460 = vunpack.c.l.b16 %v186
      %v461 = vunpack.c.l.b16 %v187
      %v462 = vunpack.c.l.b16 %v188
      %v463 = vunpack.c.l.b16 %v189
      %v464 = vunpack.c.l.b16 %v190
      %v465 = vunpack.c.l.b16 %v191
      %v466 = vunpack.c.l.b16 %v192
      %v467 = vunpack.c.l.b16 %v193
      %v468 = vunpack.c.l.b16 %v194
      %v469 = vunpack.c.l.b16 %v195
      %v470 = vunpack.c.l.b16 %v196
      %v471 = vunpack.c.l.b16 %v197
      %v472 = vunpack.c.l.b16 %v198
      %v473 = vunpack.c.l.b16 %v199
      %v474 = vunpack.c.l.b16 %v200
      %v475 = vunpack.c.l.b16 %v201
      %v476 = vunpack.c.l.b16 %v202
      %v477 = vunpack.c.l.b16 %v203
      %v478 = vunpack.c.l.b16 %v204
      %v479 = vunpack.c.l.b16 %v205
      %v480 = vunpack.c.l.b16 %v206
      %v481 = vunpack.c.l.b16 %v207
      %v482 = vunpack.c.l.b16 %v208
      %v483 = vunpack.c.l.b16 %v209
      %v484 = vunpack.c.l.b16 %v210
      %v485 = vunpack.c.l.b16 %v211
      %v486 = vunpack.c.l.b16 %v212
      %v487 = vunpack.c.l.b16 %v213
      %v488 = vunpack.c.l.b16 %v214
      %v489 = vunpack.c.l.b16 %v215
      %v490 = vunpack.c.l.b16 %v216
      %v491 = vunpack.c.l.b16 %v217
      %v492 = vunpack.c.l.b16 %v218
      %v493 = vunpack.c.l.b16 %v219
      %v494 = vunpack.c.l.b16 %v220
      %v495 = vunpack.c.l.b16 %v221
      %v496 = vunpack.c.l.b16 %v222
      %v497 = vunpack.c.l.b16 %v223
      %v498 = vunpack.c.l.b16 %v224
      %v499 = vunpack.c.l.b16 %v225
      %v500 = vunpack.c.l.b16 %v226
      %v501 = vunpack.c.l.b16 %v227
      %v502 = vunpack.c.l.b16 %v228
      %v503 = vunpack.c.l.b16 %v229
      %v504 = vunpack.c.l.b16 %v230
      %v505 = vunpack.c.l.b16 %v231
      %v506 = vunpack.c.l.b16 %v232
      %v507 = vunpack.c.l.b16 %v233
      %v508 = vunpack.c.l.b16 %v234
      %v509 = vunpack.c.l.b16 %v235
      %v510 = vunpack.c.l.b16 %v236
      %v511 = vunpack.c.l.b16 %v237
      %v512 = vunpack.c.l.b16 %v238
      %v513 = vunpack.c.l.b16 %v239
      %v514 = vunpack.c.l.b16 %v240
      %v515 = vunpack.c.l.b16 %v241
      %v516 = vunpack.c.l.b16 %v242
      %v517 = vunpack.c.l.b16 %v243
      %v518 = vunpack.c.l.b16 %v244
      %v519 = vunpack.c.l.b16 %v245
      %v520 = vunpack.c.l.b16 %v246
      %v521 = vunpack.c.l.b16 %v247
      %v522 = vunpack.c.l.b16 %v248
      %v523 = vunpack.c.l.b16 %v249
      %v524 = vunpack.c.l.b16 %v250
      %v525 = vunpack.c.l.b16 %v251
      %v526 = vunpack.c.l.b16 %v252
      %v527 = vunpack.c.l.b16 %v253
      %v528 = vunpack.c.l.b16 %v254
      %v529 = vunpack.c.l.b16 %v255
      %v530 = vunpack.c.l.b16 %v256
      %v531 = vunpack.c.l.b16 %v257
      %v532 = vunpack.c.l.b16 %v258
      %v533 = vunpack.c.l.b16 %v259
      %v534 = vunpack.c.l.b16 %v260
      %v535 = vunpack.c.l.b16 %v261
      %v536 = vunpack.c.l.b16 %v262
      %v537 = vunpack.c.l.b16 %v263
      %v538 = vunpack.c.l.b16 %v264
      %v539 = vunpack.c.l.b16 %v265
      %v540 = vunpack.c.l.b16 %v266
      %v541 = vunpack.c.l.b16 %v267
      %v542 = vunpack.c.l.b16 %v268
      %v543 = vunpack.c.l.b16 %v269
      %v544 = vunpack.c.l.b16 %v270
      %v545 = vunpack.c.l.b16 %v271
      %v546 = vunpack.c.l.b16 %v272
      %v547 = vunpack.c.l.b16 %v273
      %v548 = vunpack.c.l.b16 %v274
      %v549 = vunpack.c.l.b16 %v275
      %v550 = vunpack.c.l.b16 %v276
      %v551 = vunpack.c.l.b16 %v277
      %v552 = vunpack.c.l.b16 %v278
      %v553 = vunpack.c.l.b16 %v279
      %v554 = vunpack.c.l.b16 %v280
      %v555 = vunpack.c.l.b16 %v281
      %v556 = vunpack.c.l.b16 %v282
      %v557 = vunpack.c.l.b16 %v283
      %v558 = vunpack.c.l.b16 %v284
      %v559 = vunpack.c.l.b16 %v285
      %v560 = vunpack.c.l.b16 %v286
      %v561 = vunpack.c.l.b16 %v287
      %v562 = vunpack.c.l.b16 %v288
      %v563 = vunpack.c.l.b16 %v289
      %v564 = vunpack.c.l.b16 %v290
      %v565 = vunpack.c.l.b16 %v291
      %v566 = vunpack.c.l.b16 %v292
      %v567 = vunpack.c.l.b16 %v293
      %v568 = vunpack.c.l.b16 %v294
      %v569 = vunpack.c.l.b16 %v295
      %v570 = vunpack.c.l.b16 %v296
      %v571 = vunpack.c.l.b16 %v297
      %v572 = vunpack.c.l.b16 %v298
      %v573 = vunpack.c.l.b16 %v299
      %v574 = vunpack.c.l.b16 %v300
      %v575 = vunpack.c.l.b16 %v301
      %v576 = vpack.c.b16 %v449, %v448
      %v577 = vpack.c.b16 %v451, %v450
      %v578 = vpack.c.b16 %v453, %v452
      %v579 = vpack.c.b16 %v455, %v454
      %v580 = vpack.c.b16 %v457, %v456
      %v581 = vpack.c.b16 %v459, %v458
      %v582 = vpack.c.b16 %v461, %v460
      %v583 = vpack.c.b16 %v463, %v462
      %v584 = vpack.c.b16 %v465, %v464
      %v585 = vpack.c.b16 %v467, %v466
      %v586 = vpack.c.b16 %v469, %v468
      %v587 = vpack.c.b16 %v471, %v470
      %v588 = vpack.c.b16 %v473, %v472
      %v589 = vpack.c.b16 %v475, %v474
      %v590 = vpack.c.b16 %v477, %v476
      %v591 = vpack.c.b16 %v479, %v478
      %v592 = vpack.c.b16 %v481, %v480
      %v593 = vpack.c.b16 %v483, %v482
      %v594 = vpack.c.b16 %v485, %v484
      %v595 = vpack.c.b16 %v487, %v486
      %v596 = vpack.c.b16 %v489, %v488
      %v597 = vpack.c.b16 %v491, %v490
      %v598 = vpack.c.b16 %v493, %v492
      %v599 = vpack.c.b16 %v495, %v494
      %v600 = vpack.c.b16 %v497, %v496
      %v601 = vpack.c.b16 %v499, %v498
      %v602 = vpack.c.b16 %v501, %v500
      %v603 = vpack.c.b16 %v503, %v502
      %v604 = vpack.c.b16 %v505, %v504
      %v605 = vpack.c.b16 %v507, %v506
      %v606 = vpack.c.b16 %v509, %v508
      %v607 = vpack.c.b16 %v511, %v510
      %v608 = vpack.c.b16 %v513, %v512
      %v609 = vpack.c.b16 %v515, %v514
      %v610 = vpack.c.b16 %v517, %v516
      %v611 = vpack.c.b16 %v519, %v518
      %v612 = vpack.c.b16 %v521, %v520
      %v613 = vpack.c.b16 %v523, %v522
      %v614 = vpack.c.b16 %v525, %v524
      %v615 = vpack.c.b16 %v527, %v526
      %v616 = vpack.c.b16 %v529, %v528
      %v617 = vpack.c.b16 %v531, %v530
      %v618 = vpack.c.b16 %v533, %v532
      %v619 = vpack.c.b16 %v535, %v534
      %v620 = vpack.c.b16 %v537, %v536
      %v621 = vpack.c.b16 %v539, %v538
      %v622 = vpack.c.b16 %v541, %v540
      %v623 = vpack.c.b16 %v543, %v542
      %v624 = vpack.c.b16 %v545, %v544
      %v625 = vpack.c.b16 %v547, %v546
      %v626 = vpack.c.b16 %v549, %v548
      %v627 = vpack.c.b16 %v551, %v550
      %v628 = vpack.c.b16 %v553, %v552
      %v629 = vpack.c.b16 %v555, %v554
      %v630 = vpack.c.b16 %v557, %v556
      %v631 = vpack.c.b16 %v559, %v558
      %v632 = vpack.c.b16 %v561, %v560
      %v633 = vpack.c.b16 %v563, %v562
      %v634 = vpack.c.b16 %v565, %v564
      %v635 = vpack.c.b16 %v567, %v566
      %v636 = vpack.c.b16 %v569, %v568
      %v637 = vpack.c.b16 %v571, %v570
      %v638 = vpack.c.b16 %v573, %v572
      %v639 = vpack.c.b16 %v575, %v574
      %v720 = vunpack.c.l.b16 %v302
      %v721 = vunpack.c.l.b16 %v303
      %v722 = vunpack.c.l.b16 %v304
      %v723 = vunpack.c.l.b16 %v305
      %v724 = vunpack.c.l.b16 %v306
      %v725 = vunpack.c.l.b16 %v307
      %v726 = vunpack.c.l.b16 %v308
      %v727 = vunpack.c.l.b16 %v309
      %v728 = vunpack.c.l.b16 %v310
      %v729 = vunpack.c.l.b16 %v311
      %v730 = vunpack.c.l.b16 %v312
      %v731 = vunpack.c.l.b16 %v313
      %v732 = vunpack.c.l.b16 %v314
      %v733 = vunpack.c.l.b16 %v315
      %v734 = vunpack.c.l.b16 %v316
      %v735 = vunpack.c.l.b16 %v317
      %v736 = vpack.c.b16 %v721, %v720
      %v737 = vpack.c.b16 %v723, %v722
      %v738 = vpack.c.b16 %v725, %v724
      %v739 = vpack.c.b16 %v727, %v726
      %v740 = vpack.c.b16 %v729, %v728
      %v741 = vpack.c.b16 %v731, %v730
      %v742 = vpack.c.b16 %v733, %v732
      %v743 = vpack.c.b16 %v735, %v734
      %752 = vmatpush.bf16.msra.mxu0 %v743
      %753 = vmatpush.bf16.msra.mxu0 %v742
      %754 = vmatpush.bf16.msra.mxu0 %v741
      %755 = vmatpush.bf16.msra.mxu0 %v740
      %756 = vmatpush.bf16.msra.mxu0 %v739
      %757 = vmatpush.bf16.msra.mxu0 %v738
      %758 = vmatpush.bf16.msra.mxu0 %v737
      %759 = vmatpush.bf16.msra.mxu0 %v736
      %760 = vmatmul.bf16.gmra.mxu0 %v576
      %v761 = vpop.f32.mrf.mxu0
      %v762 = vadd.f32 %v319, %v761
      %v763 = vpop.f32.mrf.mxu0
      %v764 = vadd.f32 %v319, %v763
      %765 = vmatmul.bf16.gmra.mxu0 %v577
      %v766 = vpop.f32.mrf.mxu0
      %v767 = vadd.f32 %v319, %v766
      %v768 = vpop.f32.mrf.mxu0
      %v769 = vadd.f32 %v319, %v768
      %770 = vmatmul.bf16.gmra.mxu0 %v578
      %v771 = vpop.f32.mrf.mxu0
      %v772 = vadd.f32 %v319, %v771
      %v773 = vpop.f32.mrf.mxu0
      %v774 = vadd.f32 %v319, %v773
      %775 = vmatmul.bf16.gmra.mxu0 %v579
      %v776 = vpop.f32.mrf.mxu0
      %v777 = vadd.f32 %v319, %v776
      %v778 = vpop.f32.mrf.mxu0
      %v779 = vadd.f32 %v319, %v778
      %780 = vmatmul.bf16.gmra.mxu0 %v580
      %v781 = vpop.f32.mrf.mxu0
      %v782 = vadd.f32 %v319, %v781
      %v783 = vpop.f32.mrf.mxu0
      %v784 = vadd.f32 %v319, %v783
      %785 = vmatmul.bf16.gmra.mxu0 %v581
      %v786 = vpop.f32.mrf.mxu0
      %v787 = vadd.f32 %v319, %v786
      %v788 = vpop.f32.mrf.mxu0
      %v789 = vadd.f32 %v319, %v788
      %790 = vmatmul.bf16.gmra.mxu0 %v582
      %v791 = vpop.f32.mrf.mxu0
      %v792 = vadd.f32 %v319, %v791
      %v793 = vpop.f32.mrf.mxu0
      %v794 = vadd.f32 %v319, %v793
      %795 = vmatmul.bf16.gmra.mxu0 %v583
      %v796 = vpop.f32.mrf.mxu0
      %v797 = vadd.f32 %v319, %v796
      %v798 = vpop.f32.mrf.mxu0
      %v799 = vadd.f32 %v319, %v798
      %800 = vmatmul.bf16.gmra.mxu0 %v584
      %v801 = vpop.f32.mrf.mxu0
      %v802 = vadd.f32 %v319, %v801
      %v803 = vpop.f32.mrf.mxu0
      %v804 = vadd.f32 %v319, %v803
      %805 = vmatmul.bf16.gmra.mxu0 %v585
      %v806 = vpop.f32.mrf.mxu0
      %v807 = vadd.f32 %v319, %v806
      %v808 = vpop.f32.mrf.mxu0
      %v809 = vadd.f32 %v319, %v808
      %810 = vmatmul.bf16.gmra.mxu0 %v586
      %v811 = vpop.f32.mrf.mxu0
      %v812 = vadd.f32 %v319, %v811
      %v813 = vpop.f32.mrf.mxu0
      %v814 = vadd.f32 %v319, %v813
      %815 = vmatmul.bf16.gmra.mxu0 %v587
      %v816 = vpop.f32.mrf.mxu0
      %v817 = vadd.f32 %v319, %v816
      %v818 = vpop.f32.mrf.mxu0
      %v819 = vadd.f32 %v319, %v818
      %820 = vmatmul.bf16.gmra.mxu0 %v588
      %v821 = vpop.f32.mrf.mxu0
      %v822 = vadd.f32 %v319, %v821
      %v823 = vpop.f32.mrf.mxu0
      %v824 = vadd.f32 %v319, %v823
      %825 = vmatmul.bf16.gmra.mxu0 %v589
      %v826 = vpop.f32.mrf.mxu0
      %v827 = vadd.f32 %v319, %v826
      %v828 = vpop.f32.mrf.mxu0
      %v829 = vadd.f32 %v319, %v828
      %830 = vmatmul.bf16.gmra.mxu0 %v590
      %v831 = vpop.f32.mrf.mxu0
      %v832 = vadd.f32 %v319, %v831
      %v833 = vpop.f32.mrf.mxu0
      %v834 = vadd.f32 %v319, %v833
      %835 = vmatmul.bf16.gmra.mxu0 %v591
      %v836 = vpop.f32.mrf.mxu0
      %v837 = vadd.f32 %v319, %v836
      %v838 = vpop.f32.mrf.mxu0
      %v839 = vadd.f32 %v319, %v838
      %840 = vmatmul.bf16.gmra.mxu0 %v592
      %v841 = vpop.f32.mrf.mxu0
      %v842 = vadd.f32 %v319, %v841
      %v843 = vpop.f32.mrf.mxu0
      %v844 = vadd.f32 %v319, %v843
      %845 = vmatmul.bf16.gmra.mxu0 %v593
      %v846 = vpop.f32.mrf.mxu0
      %v847 = vadd.f32 %v319, %v846
      %v848 = vpop.f32.mrf.mxu0
      %v849 = vadd.f32 %v319, %v848
      %850 = vmatmul.bf16.gmra.mxu0 %v594
      %v851 = vpop.f32.mrf.mxu0
      %v852 = vadd.f32 %v319, %v851
      %v853 = vpop.f32.mrf.mxu0
      %v854 = vadd.f32 %v319, %v853
      %855 = vmatmul.bf16.gmra.mxu0 %v595
      %v856 = vpop.f32.mrf.mxu0
      %v857 = vadd.f32 %v319, %v856
      %v858 = vpop.f32.mrf.mxu0
      %v859 = vadd.f32 %v319, %v858
      %860 = vmatmul.bf16.gmra.mxu0 %v596
      %v861 = vpop.f32.mrf.mxu0
      %v862 = vadd.f32 %v319, %v861
      %v863 = vpop.f32.mrf.mxu0
      %v864 = vadd.f32 %v319, %v863
      %865 = vmatmul.bf16.gmra.mxu0 %v597
      %v866 = vpop.f32.mrf.mxu0
      %v867 = vadd.f32 %v319, %v866
      %v868 = vpop.f32.mrf.mxu0
      %v869 = vadd.f32 %v319, %v868
      %870 = vmatmul.bf16.gmra.mxu0 %v598
      %v871 = vpop.f32.mrf.mxu0
      %v872 = vadd.f32 %v319, %v871
      %v873 = vpop.f32.mrf.mxu0
      %v874 = vadd.f32 %v319, %v873
      %875 = vmatmul.bf16.gmra.mxu0 %v599
      %v876 = vpop.f32.mrf.mxu0
      %v877 = vadd.f32 %v319, %v876
      %v878 = vpop.f32.mrf.mxu0
      %v879 = vadd.f32 %v319, %v878
      %880 = vmatmul.bf16.gmra.mxu0 %v600
      %v881 = vpop.f32.mrf.mxu0
      %v882 = vadd.f32 %v319, %v881
      %v883 = vpop.f32.mrf.mxu0
      %v884 = vadd.f32 %v319, %v883
      %885 = vmatmul.bf16.gmra.mxu0 %v601
      %v886 = vpop.f32.mrf.mxu0
      %v887 = vadd.f32 %v319, %v886
      %v888 = vpop.f32.mrf.mxu0
      %v889 = vadd.f32 %v319, %v888
      %890 = vmatmul.bf16.gmra.mxu0 %v602
      %v891 = vpop.f32.mrf.mxu0
      %v892 = vadd.f32 %v319, %v891
      %v893 = vpop.f32.mrf.mxu0
      %v894 = vadd.f32 %v319, %v893
      %895 = vmatmul.bf16.gmra.mxu0 %v603
      %v896 = vpop.f32.mrf.mxu0
      %v897 = vadd.f32 %v319, %v896
      %v898 = vpop.f32.mrf.mxu0
      %v899 = vadd.f32 %v319, %v898
      %900 = vmatmul.bf16.gmra.mxu0 %v604
      %v901 = vpop.f32.mrf.mxu0
      %v902 = vadd.f32 %v319, %v901
      %v903 = vpop.f32.mrf.mxu0
      %v904 = vadd.f32 %v319, %v903
      %905 = vmatmul.bf16.gmra.mxu0 %v605
      %v906 = vpop.f32.mrf.mxu0
      %v907 = vadd.f32 %v319, %v906
      %v908 = vpop.f32.mrf.mxu0
      %v909 = vadd.f32 %v319, %v908
      %910 = vmatmul.bf16.gmra.mxu0 %v606
      %v911 = vpop.f32.mrf.mxu0
      %v912 = vadd.f32 %v319, %v911
      %v913 = vpop.f32.mrf.mxu0
      %v914 = vadd.f32 %v319, %v913
      %915 = vmatmul.bf16.gmra.mxu0 %v607
      %v916 = vpop.f32.mrf.mxu0
      %v917 = vadd.f32 %v319, %v916
      %v918 = vpop.f32.mrf.mxu0
      %v919 = vadd.f32 %v319, %v918
      %920 = vmatmul.bf16.gmra.mxu0 %v608
      %v921 = vpop.f32.mrf.mxu0
      %v922 = vadd.f32 %v319, %v921
      %v923 = vpop.f32.mrf.mxu0
      %v924 = vadd.f32 %v319, %v923
      %925 = vmatmul.bf16.gmra.mxu0 %v609
      %v926 = vpop.f32.mrf.mxu0
      %v927 = vadd.f32 %v319, %v926
      %v928 = vpop.f32.mrf.mxu0
      %v929 = vadd.f32 %v319, %v928
      %930 = vmatmul.bf16.gmra.mxu0 %v610
      %v931 = vpop.f32.mrf.mxu0
      %v932 = vadd.f32 %v319, %v931
      %v933 = vpop.f32.mrf.mxu0
      %v934 = vadd.f32 %v319, %v933
      %935 = vmatmul.bf16.gmra.mxu0 %v611
      %v936 = vpop.f32.mrf.mxu0
      %v937 = vadd.f32 %v319, %v936
      %v938 = vpop.f32.mrf.mxu0
      %v939 = vadd.f32 %v319, %v938
      %940 = vmatmul.bf16.gmra.mxu0 %v612
      %v941 = vpop.f32.mrf.mxu0
      %v942 = vadd.f32 %v319, %v941
      %v943 = vpop.f32.mrf.mxu0
      %v944 = vadd.f32 %v319, %v943
      %945 = vmatmul.bf16.gmra.mxu0 %v613
      %v946 = vpop.f32.mrf.mxu0
      %v947 = vadd.f32 %v319, %v946
      %v948 = vpop.f32.mrf.mxu0
      %v949 = vadd.f32 %v319, %v948
      %950 = vmatmul.bf16.gmra.mxu0 %v614
      %v951 = vpop.f32.mrf.mxu0
      %v952 = vadd.f32 %v319, %v951
      %v953 = vpop.f32.mrf.mxu0
      %v954 = vadd.f32 %v319, %v953
      %955 = vmatmul.bf16.gmra.mxu0 %v615
      %v956 = vpop.f32.mrf.mxu0
      %v957 = vadd.f32 %v319, %v956
      %v958 = vpop.f32.mrf.mxu0
      %v959 = vadd.f32 %v319, %v958
      %960 = vmatmul.bf16.gmra.mxu0 %v616
      %v961 = vpop.f32.mrf.mxu0
      %v962 = vadd.f32 %v319, %v961
      %v963 = vpop.f32.mrf.mxu0
      %v964 = vadd.f32 %v319, %v963
      %965 = vmatmul.bf16.gmra.mxu0 %v617
      %v966 = vpop.f32.mrf.mxu0
      %v967 = vadd.f32 %v319, %v966
      %v968 = vpop.f32.mrf.mxu0
      %v969 = vadd.f32 %v319, %v968
      %970 = vmatmul.bf16.gmra.mxu0 %v618
      %v971 = vpop.f32.mrf.mxu0
      %v972 = vadd.f32 %v319, %v971
      %v973 = vpop.f32.mrf.mxu0
      %v974 = vadd.f32 %v319, %v973
      %975 = vmatmul.bf16.gmra.mxu0 %v619
      %v976 = vpop.f32.mrf.mxu0
      %v977 = vadd.f32 %v319, %v976
      %v978 = vpop.f32.mrf.mxu0
      %v979 = vadd.f32 %v319, %v978
      %980 = vmatmul.bf16.gmra.mxu0 %v620
      %v981 = vpop.f32.mrf.mxu0
      %v982 = vadd.f32 %v319, %v981
      %v983 = vpop.f32.mrf.mxu0
      %v984 = vadd.f32 %v319, %v983
      %985 = vmatmul.bf16.gmra.mxu0 %v621
      %v986 = vpop.f32.mrf.mxu0
      %v987 = vadd.f32 %v319, %v986
      %v988 = vpop.f32.mrf.mxu0
      %v989 = vadd.f32 %v319, %v988
      %990 = vmatmul.bf16.gmra.mxu0 %v622
      %v991 = vpop.f32.mrf.mxu0
      %v992 = vadd.f32 %v319, %v991
      %v993 = vpop.f32.mrf.mxu0
      %v994 = vadd.f32 %v319, %v993
      %995 = vmatmul.bf16.gmra.mxu0 %v623
      %v996 = vpop.f32.mrf.mxu0
      %v997 = vadd.f32 %v319, %v996
      %v998 = vpop.f32.mrf.mxu0
      %v999 = vadd.f32 %v319, %v998
      %1000 = vmatmul.bf16.gmra.mxu0 %v624
      %v1001 = vpop.f32.mrf.mxu0
      %v1002 = vadd.f32 %v319, %v1001
      %v1003 = vpop.f32.mrf.mxu0
      %v1004 = vadd.f32 %v319, %v1003
      %1005 = vmatmul.bf16.gmra.mxu0 %v625
      %v1006 = vpop.f32.mrf.mxu0
      %v1007 = vadd.f32 %v319, %v1006
      %v1008 = vpop.f32.mrf.mxu0
      %v1009 = vadd.f32 %v319, %v1008
      %1010 = vmatmul.bf16.gmra.mxu0 %v626
      %v1011 = vpop.f32.mrf.mxu0
      %v1012 = vadd.f32 %v319, %v1011
      %v1013 = vpop.f32.mrf.mxu0
      %v1014 = vadd.f32 %v319, %v1013
      %1015 = vmatmul.bf16.gmra.mxu0 %v627
      %v1016 = vpop.f32.mrf.mxu0
      %v1017 = vadd.f32 %v319, %v1016
      %v1018 = vpop.f32.mrf.mxu0
      %v1019 = vadd.f32 %v319, %v1018
      %1020 = vmatmul.bf16.gmra.mxu0 %v628
      %v1021 = vpop.f32.mrf.mxu0
      %v1022 = vadd.f32 %v319, %v1021
      %v1023 = vpop.f32.mrf.mxu0
      %v1024 = vadd.f32 %v319, %v1023
      %1025 = vmatmul.bf16.gmra.mxu0 %v629
      %v1026 = vpop.f32.mrf.mxu0
      %v1027 = vadd.f32 %v319, %v1026
      %v1028 = vpop.f32.mrf.mxu0
      %v1029 = vadd.f32 %v319, %v1028
      %1030 = vmatmul.bf16.gmra.mxu0 %v630
      %v1031 = vpop.f32.mrf.mxu0
      %v1032 = vadd.f32 %v319, %v1031
      %v1033 = vpop.f32.mrf.mxu0
      %v1034 = vadd.f32 %v319, %v1033
      %1035 = vmatmul.bf16.gmra.mxu0 %v631
      %v1036 = vpop.f32.mrf.mxu0
      %v1037 = vadd.f32 %v319, %v1036
      %v1038 = vpop.f32.mrf.mxu0
      %v1039 = vadd.f32 %v319, %v1038
      %1040 = vmatmul.bf16.gmra.mxu0 %v632
      %v1041 = vpop.f32.mrf.mxu0
      %v1042 = vadd.f32 %v319, %v1041
      %v1043 = vpop.f32.mrf.mxu0
      %v1044 = vadd.f32 %v319, %v1043
      %1045 = vmatmul.bf16.gmra.mxu0 %v633
      %v1046 = vpop.f32.mrf.mxu0
      %v1047 = vadd.f32 %v319, %v1046
      %v1048 = vpop.f32.mrf.mxu0
      %v1049 = vadd.f32 %v319, %v1048
      %1050 = vmatmul.bf16.gmra.mxu0 %v634
      %v1051 = vpop.f32.mrf.mxu0
      %v1052 = vadd.f32 %v319, %v1051
      %v1053 = vpop.f32.mrf.mxu0
      %v1054 = vadd.f32 %v319, %v1053
      %1055 = vmatmul.bf16.gmra.mxu0 %v635
      %v1056 = vpop.f32.mrf.mxu0
      %v1057 = vadd.f32 %v319, %v1056
      %v1058 = vpop.f32.mrf.mxu0
      %v1059 = vadd.f32 %v319, %v1058
      %1060 = vmatmul.bf16.gmra.mxu0 %v636
      %v1061 = vpop.f32.mrf.mxu0
      %v1062 = vadd.f32 %v319, %v1061
      %v1063 = vpop.f32.mrf.mxu0
      %v1064 = vadd.f32 %v319, %v1063
      %1065 = vmatmul.bf16.gmra.mxu0 %v637
      %v1066 = vpop.f32.mrf.mxu0
      %v1067 = vadd.f32 %v319, %v1066
      %v1068 = vpop.f32.mrf.mxu0
      %v1069 = vadd.f32 %v319, %v1068
      %1070 = vmatmul.bf16.gmra.mxu0 %v638
      %v1071 = vpop.f32.mrf.mxu0
      %v1072 = vadd.f32 %v319, %v1071
      %v1073 = vpop.f32.mrf.mxu0
      %v1074 = vadd.f32 %v319, %v1073
      %1075 = vmatmul.bf16.gmra.mxu0 %v639
      %v1076 = vpop.f32.mrf.mxu0
      %v1077 = vadd.f32 %v319, %v1076
      %v1078 = vpop.f32.mrf.mxu0
      %v1079 = vadd.f32 %v319, %v1078
      %1080 = vdwg.mxu0
      %vm1081 = vcmp.gt.f32.partialorder %v762, 0.0
      %vm1082 = vcmp.gt.f32.partialorder %v764, 0.0
      %vm1083 = vcmp.gt.f32.partialorder %v767, 0.0
      %vm1084 = vcmp.gt.f32.partialorder %v769, 0.0
      %vm1085 = vcmp.gt.f32.partialorder %v772, 0.0
      %vm1086 = vcmp.gt.f32.partialorder %v774, 0.0
      %vm1087 = vcmp.gt.f32.partialorder %v777, 0.0
      %vm1088 = vcmp.gt.f32.partialorder %v779, 0.0
      %vm1089 = vcmp.gt.f32.partialorder %v782, 0.0
      %vm1090 = vcmp.gt.f32.partialorder %v784, 0.0
      %vm1091 = vcmp.gt.f32.partialorder %v787, 0.0
      %vm1092 = vcmp.gt.f32.partialorder %v789, 0.0
      %vm1093 = vcmp.gt.f32.partialorder %v792, 0.0
      %vm1094 = vcmp.gt.f32.partialorder %v794, 0.0
      %vm1095 = vcmp.gt.f32.partialorder %v797, 0.0
      %vm1096 = vcmp.gt.f32.partialorder %v799, 0.0
      %vm1097 = vcmp.gt.f32.partialorder %v802, 0.0
      %vm1098 = vcmp.gt.f32.partialorder %v804, 0.0
      %vm1099 = vcmp.gt.f32.partialorder %v807, 0.0
      %vm1100 = vcmp.gt.f32.partialorder %v809, 0.0
      %vm1101 = vcmp.gt.f32.partialorder %v812, 0.0
      %vm1102 = vcmp.gt.f32.partialorder %v814, 0.0
      %vm1103 = vcmp.gt.f32.partialorder %v817, 0.0
      %vm1104 = vcmp.gt.f32.partialorder %v819, 0.0
      %vm1105 = vcmp.gt.f32.partialorder %v822, 0.0
      %vm1106 = vcmp.gt.f32.partialorder %v824, 0.0
      %vm1107 = vcmp.gt.f32.partialorder %v827, 0.0
      %vm1108 = vcmp.gt.f32.partialorder %v829, 0.0
      %vm1109 = vcmp.gt.f32.partialorder %v832, 0.0
      %vm1110 = vcmp.gt.f32.partialorder %v834, 0.0
      %vm1111 = vcmp.gt.f32.partialorder %v837, 0.0
      %vm1112 = vcmp.gt.f32.partialorder %v839, 0.0
      %vm1113 = vcmp.gt.f32.partialorder %v842, 0.0
      %vm1114 = vcmp.gt.f32.partialorder %v844, 0.0
      %vm1115 = vcmp.gt.f32.partialorder %v847, 0.0
      %vm1116 = vcmp.gt.f32.partialorder %v849, 0.0
      %vm1117 = vcmp.gt.f32.partialorder %v852, 0.0
      %vm1118 = vcmp.gt.f32.partialorder %v854, 0.0
      %vm1119 = vcmp.gt.f32.partialorder %v857, 0.0
      %vm1120 = vcmp.gt.f32.partialorder %v859, 0.0
      %vm1121 = vcmp.gt.f32.partialorder %v862, 0.0
      %vm1122 = vcmp.gt.f32.partialorder %v864, 0.0
      %vm1123 = vcmp.gt.f32.partialorder %v867, 0.0
      %vm1124 = vcmp.gt.f32.partialorder %v869, 0.0
      %vm1125 = vcmp.gt.f32.partialorder %v872, 0.0
      %vm1126 = vcmp.gt.f32.partialorder %v874, 0.0
      %vm1127 = vcmp.gt.f32.partialorder %v877, 0.0
      %vm1128 = vcmp.gt.f32.partialorder %v879, 0.0
      %vm1129 = vcmp.gt.f32.partialorder %v882, 0.0
      %vm1130 = vcmp.gt.f32.partialorder %v884, 0.0
      %vm1131 = vcmp.gt.f32.partialorder %v887, 0.0
      %vm1132 = vcmp.gt.f32.partialorder %v889, 0.0
      %vm1133 = vcmp.gt.f32.partialorder %v892, 0.0
      %vm1134 = vcmp.gt.f32.partialorder %v894, 0.0
      %vm1135 = vcmp.gt.f32.partialorder %v897, 0.0
      %vm1136 = vcmp.gt.f32.partialorder %v899, 0.0
      %vm1137 = vcmp.gt.f32.partialorder %v902, 0.0
      %vm1138 = vcmp.gt.f32.partialorder %v904, 0.0
      %vm1139 = vcmp.gt.f32.partialorder %v907, 0.0
      %vm1140 = vcmp.gt.f32.partialorder %v909, 0.0
      %vm1141 = vcmp.gt.f32.partialorder %v912, 0.0
      %vm1142 = vcmp.gt.f32.partialorder %v914, 0.0
      %vm1143 = vcmp.gt.f32.partialorder %v917, 0.0
      %vm1144 = vcmp.gt.f32.partialorder %v919, 0.0
      %vm1145 = vcmp.gt.f32.partialorder %v922, 0.0
      %vm1146 = vcmp.gt.f32.partialorder %v924, 0.0
      %vm1147 = vcmp.gt.f32.partialorder %v927, 0.0
      %vm1148 = vcmp.gt.f32.partialorder %v929, 0.0
      %vm1149 = vcmp.gt.f32.partialorder %v932, 0.0
      %vm1150 = vcmp.gt.f32.partialorder %v934, 0.0
      %vm1151 = vcmp.gt.f32.partialorder %v937, 0.0
      %vm1152 = vcmp.gt.f32.partialorder %v939, 0.0
      %vm1153 = vcmp.gt.f32.partialorder %v942, 0.0
      %vm1154 = vcmp.gt.f32.partialorder %v944, 0.0
      %vm1155 = vcmp.gt.f32.partialorder %v947, 0.0
      %vm1156 = vcmp.gt.f32.partialorder %v949, 0.0
      %vm1157 = vcmp.gt.f32.partialorder %v952, 0.0
      %vm1158 = vcmp.gt.f32.partialorder %v954, 0.0
      %vm1159 = vcmp.gt.f32.partialorder %v957, 0.0
      %vm1160 = vcmp.gt.f32.partialorder %v959, 0.0
      %vm1161 = vcmp.gt.f32.partialorder %v962, 0.0
      %vm1162 = vcmp.gt.f32.partialorder %v964, 0.0
      %vm1163 = vcmp.gt.f32.partialorder %v967, 0.0
      %vm1164 = vcmp.gt.f32.partialorder %v969, 0.0
      %vm1165 = vcmp.gt.f32.partialorder %v972, 0.0
      %vm1166 = vcmp.gt.f32.partialorder %v974, 0.0
      %vm1167 = vcmp.gt.f32.partialorder %v977, 0.0
      %vm1168 = vcmp.gt.f32.partialorder %v979, 0.0
      %vm1169 = vcmp.gt.f32.partialorder %v982, 0.0
      %vm1170 = vcmp.gt.f32.partialorder %v984, 0.0
      %vm1171 = vcmp.gt.f32.partialorder %v987, 0.0
      %vm1172 = vcmp.gt.f32.partialorder %v989, 0.0
      %vm1173 = vcmp.gt.f32.partialorder %v992, 0.0
      %vm1174 = vcmp.gt.f32.partialorder %v994, 0.0
      %vm1175 = vcmp.gt.f32.partialorder %v997, 0.0
      %vm1176 = vcmp.gt.f32.partialorder %v999, 0.0
      %vm1177 = vcmp.gt.f32.partialorder %v1002, 0.0
      %vm1178 = vcmp.gt.f32.partialorder %v1004, 0.0
      %vm1179 = vcmp.gt.f32.partialorder %v1007, 0.0
      %vm1180 = vcmp.gt.f32.partialorder %v1009, 0.0
      %vm1181 = vcmp.gt.f32.partialorder %v1012, 0.0
      %vm1182 = vcmp.gt.f32.partialorder %v1014, 0.0
      %vm1183 = vcmp.gt.f32.partialorder %v1017, 0.0
      %vm1184 = vcmp.gt.f32.partialorder %v1019, 0.0
      %vm1185 = vcmp.gt.f32.partialorder %v1022, 0.0
      %vm1186 = vcmp.gt.f32.partialorder %v1024, 0.0
      %vm1187 = vcmp.gt.f32.partialorder %v1027, 0.0
      %vm1188 = vcmp.gt.f32.partialorder %v1029, 0.0
      %vm1189 = vcmp.gt.f32.partialorder %v1032, 0.0
      %vm1190 = vcmp.gt.f32.partialorder %v1034, 0.0
      %vm1191 = vcmp.gt.f32.partialorder %v1037, 0.0
      %vm1192 = vcmp.gt.f32.partialorder %v1039, 0.0
      %vm1193 = vcmp.gt.f32.partialorder %v1042, 0.0
      %vm1194 = vcmp.gt.f32.partialorder %v1044, 0.0
      %vm1195 = vcmp.gt.f32.partialorder %v1047, 0.0
      %vm1196 = vcmp.gt.f32.partialorder %v1049, 0.0
      %vm1197 = vcmp.gt.f32.partialorder %v1052, 0.0
      %vm1198 = vcmp.gt.f32.partialorder %v1054, 0.0
      %vm1199 = vcmp.gt.f32.partialorder %v1057, 0.0
      %vm1200 = vcmp.gt.f32.partialorder %v1059, 0.0
      %vm1201 = vcmp.gt.f32.partialorder %v1062, 0.0
      %vm1202 = vcmp.gt.f32.partialorder %v1064, 0.0
      %vm1203 = vcmp.gt.f32.partialorder %v1067, 0.0
      %vm1204 = vcmp.gt.f32.partialorder %v1069, 0.0
      %vm1205 = vcmp.gt.f32.partialorder %v1072, 0.0
      %vm1206 = vcmp.gt.f32.partialorder %v1074, 0.0
      %vm1207 = vcmp.gt.f32.partialorder %v1077, 0.0
      %vm1208 = vcmp.gt.f32.partialorder %v1079, 0.0
      %v1209 = vmul.f32 %v762, 0.2
      %v1210 = vmul.f32 %v764, 0.2
      %v1211 = vmul.f32 %v767, 0.2
      %v1212 = vmul.f32 %v769, 0.2
      %v1213 = vmul.f32 %v772, 0.2
      %v1214 = vmul.f32 %v774, 0.2
      %v1215 = vmul.f32 %v777, 0.2
      %v1216 = vmul.f32 %v779, 0.2
      %v1217 = vmul.f32 %v782, 0.2
      %v1218 = vmul.f32 %v784, 0.2
      %v1219 = vmul.f32 %v787, 0.2
      %v1220 = vmul.f32 %v789, 0.2
      %v1221 = vmul.f32 %v792, 0.2
      %v1222 = vmul.f32 %v794, 0.2
      %v1223 = vmul.f32 %v797, 0.2
      %v1224 = vmul.f32 %v799, 0.2
      %v1225 = vmul.f32 %v802, 0.2
      %v1226 = vmul.f32 %v804, 0.2
      %v1227 = vmul.f32 %v807, 0.2
      %v1228 = vmul.f32 %v809, 0.2
      %v1229 = vmul.f32 %v812, 0.2
      %v1230 = vmul.f32 %v814, 0.2
      %v1231 = vmul.f32 %v817, 0.2
      %v1232 = vmul.f32 %v819, 0.2
      %v1233 = vmul.f32 %v822, 0.2
      %v1234 = vmul.f32 %v824, 0.2
      %v1235 = vmul.f32 %v827, 0.2
      %v1236 = vmul.f32 %v829, 0.2
      %v1237 = vmul.f32 %v832, 0.2
      %v1238 = vmul.f32 %v834, 0.2
      %v1239 = vmul.f32 %v837, 0.2
      %v1240 = vmul.f32 %v839, 0.2
      %v1241 = vmul.f32 %v842, 0.2
      %v1242 = vmul.f32 %v844, 0.2
      %v1243 = vmul.f32 %v847, 0.2
      %v1244 = vmul.f32 %v849, 0.2
      %v1245 = vmul.f32 %v852, 0.2
      %v1246 = vmul.f32 %v854, 0.2
      %v1247 = vmul.f32 %v857, 0.2
      %v1248 = vmul.f32 %v859, 0.2
      %v1249 = vmul.f32 %v862, 0.2
      %v1250 = vmul.f32 %v864, 0.2
      %v1251 = vmul.f32 %v867, 0.2
      %v1252 = vmul.f32 %v869, 0.2
      %v1253 = vmul.f32 %v872, 0.2
      %v1254 = vmul.f32 %v874, 0.2
      %v1255 = vmul.f32 %v877, 0.2
      %v1256 = vmul.f32 %v879, 0.2
      %v1257 = vmul.f32 %v882, 0.2
      %v1258 = vmul.f32 %v884, 0.2
      %v1259 = vmul.f32 %v887, 0.2
      %v1260 = vmul.f32 %v889, 0.2
      %v1261 = vmul.f32 %v892, 0.2
      %v1262 = vmul.f32 %v894, 0.2
      %v1263 = vmul.f32 %v897, 0.2
      %v1264 = vmul.f32 %v899, 0.2
      %v1265 = vmul.f32 %v902, 0.2
      %v1266 = vmul.f32 %v904, 0.2
      %v1267 = vmul.f32 %v907, 0.2
      %v1268 = vmul.f32 %v909, 0.2
      %v1269 = vmul.f32 %v912, 0.2
      %v1270 = vmul.f32 %v914, 0.2
      %v1271 = vmul.f32 %v917, 0.2
      %v1272 = vmul.f32 %v919, 0.2
      %v1273 = vmul.f32 %v922, 0.2
      %v1274 = vmul.f32 %v924, 0.2
      %v1275 = vmul.f32 %v927, 0.2
      %v1276 = vmul.f32 %v929, 0.2
      %v1277 = vmul.f32 %v932, 0.2
      %v1278 = vmul.f32 %v934, 0.2
      %v1279 = vmul.f32 %v937, 0.2
      %v1280 = vmul.f32 %v939, 0.2
      %v1281 = vmul.f32 %v942, 0.2
      %v1282 = vmul.f32 %v944, 0.2
      %v1283 = vmul.f32 %v947, 0.2
      %v1284 = vmul.f32 %v949, 0.2
      %v1285 = vmul.f32 %v952, 0.2
      %v1286 = vmul.f32 %v954, 0.2
      %v1287 = vmul.f32 %v957, 0.2
      %v1288 = vmul.f32 %v959, 0.2
      %v1289 = vmul.f32 %v962, 0.2
      %v1290 = vmul.f32 %v964, 0.2
      %v1291 = vmul.f32 %v967, 0.2
      %v1292 = vmul.f32 %v969, 0.2
      %v1293 = vmul.f32 %v972, 0.2
      %v1294 = vmul.f32 %v974, 0.2
      %v1295 = vmul.f32 %v977, 0.2
      %v1296 = vmul.f32 %v979, 0.2
      %v1297 = vmul.f32 %v982, 0.2
      %v1298 = vmul.f32 %v984, 0.2
      %v1299 = vmul.f32 %v987, 0.2
      %v1300 = vmul.f32 %v989, 0.2
      %v1301 = vmul.f32 %v992, 0.2
      %v1302 = vmul.f32 %v994, 0.2
      %v1303 = vmul.f32 %v997, 0.2
      %v1304 = vmul.f32 %v999, 0.2
      %v1305 = vmul.f32 %v1002, 0.2
      %v1306 = vmul.f32 %v1004, 0.2
      %v1307 = vmul.f32 %v1007, 0.2
      %v1308 = vmul.f32 %v1009, 0.2
      %v1309 = vmul.f32 %v1012, 0.2
      %v1310 = vmul.f32 %v1014, 0.2
      %v1311 = vmul.f32 %v1017, 0.2
      %v1312 = vmul.f32 %v1019, 0.2
      %v1313 = vmul.f32 %v1022, 0.2
      %v1314 = vmul.f32 %v1024, 0.2
      %v1315 = vmul.f32 %v1027, 0.2
      %v1316 = vmul.f32 %v1029, 0.2
      %v1317 = vmul.f32 %v1032, 0.2
      %v1318 = vmul.f32 %v1034, 0.2
      %v1319 = vmul.f32 %v1037, 0.2
      %v1320 = vmul.f32 %v1039, 0.2
      %v1321 = vmul.f32 %v1042, 0.2
      %v1322 = vmul.f32 %v1044, 0.2
      %v1323 = vmul.f32 %v1047, 0.2
      %v1324 = vmul.f32 %v1049, 0.2
      %v1325 = vmul.f32 %v1052, 0.2
      %v1326 = vmul.f32 %v1054, 0.2
      %v1327 = vmul.f32 %v1057, 0.2
      %v1328 = vmul.f32 %v1059, 0.2
      %v1329 = vmul.f32 %v1062, 0.2
      %v1330 = vmul.f32 %v1064, 0.2
      %v1331 = vmul.f32 %v1067, 0.2
      %v1332 = vmul.f32 %v1069, 0.2
      %v1333 = vmul.f32 %v1072, 0.2
      %v1334 = vmul.f32 %v1074, 0.2
      %v1335 = vmul.f32 %v1077, 0.2
      %v1336 = vmul.f32 %v1079, 0.2
      %v1337 = vsel %vm1081, %v762, %v1209
      %v1338 = vsel %vm1082, %v764, %v1210
      %v1339 = vsel %vm1083, %v767, %v1211
      %v1340 = vsel %vm1084, %v769, %v1212
      %v1341 = vsel %vm1085, %v772, %v1213
      %v1342 = vsel %vm1086, %v774, %v1214
      %v1343 = vsel %vm1087, %v777, %v1215
      %v1344 = vsel %vm1088, %v779, %v1216
      %v1345 = vsel %vm1089, %v782, %v1217
      %v1346 = vsel %vm1090, %v784, %v1218
      %v1347 = vsel %vm1091, %v787, %v1219
      %v1348 = vsel %vm1092, %v789, %v1220
      %v1349 = vsel %vm1093, %v792, %v1221
      %v1350 = vsel %vm1094, %v794, %v1222
      %v1351 = vsel %vm1095, %v797, %v1223
      %v1352 = vsel %vm1096, %v799, %v1224
      %v1353 = vsel %vm1097, %v802, %v1225
      %v1354 = vsel %vm1098, %v804, %v1226
      %v1355 = vsel %vm1099, %v807, %v1227
      %v1356 = vsel %vm1100, %v809, %v1228
      %v1357 = vsel %vm1101, %v812, %v1229
      %v1358 = vsel %vm1102, %v814, %v1230
      %v1359 = vsel %vm1103, %v817, %v1231
      %v1360 = vsel %vm1104, %v819, %v1232
      %v1361 = vsel %vm1105, %v822, %v1233
      %v1362 = vsel %vm1106, %v824, %v1234
      %v1363 = vsel %vm1107, %v827, %v1235
      %v1364 = vsel %vm1108, %v829, %v1236
      %v1365 = vsel %vm1109, %v832, %v1237
      %v1366 = vsel %vm1110, %v834, %v1238
      %v1367 = vsel %vm1111, %v837, %v1239
      %v1368 = vsel %vm1112, %v839, %v1240
      %v1369 = vsel %vm1113, %v842, %v1241
      %v1370 = vsel %vm1114, %v844, %v1242
      %v1371 = vsel %vm1115, %v847, %v1243
      %v1372 = vsel %vm1116, %v849, %v1244
      %v1373 = vsel %vm1117, %v852, %v1245
      %v1374 = vsel %vm1118, %v854, %v1246
      %v1375 = vsel %vm1119, %v857, %v1247
      %v1376 = vsel %vm1120, %v859, %v1248
      %v1377 = vsel %vm1121, %v862, %v1249
      %v1378 = vsel %vm1122, %v864, %v1250
      %v1379 = vsel %vm1123, %v867, %v1251
      %v1380 = vsel %vm1124, %v869, %v1252
      %v1381 = vsel %vm1125, %v872, %v1253
      %v1382 = vsel %vm1126, %v874, %v1254
      %v1383 = vsel %vm1127, %v877, %v1255
      %v1384 = vsel %vm1128, %v879, %v1256
      %v1385 = vsel %vm1129, %v882, %v1257
      %v1386 = vsel %vm1130, %v884, %v1258
      %v1387 = vsel %vm1131, %v887, %v1259
      %v1388 = vsel %vm1132, %v889, %v1260
      %v1389 = vsel %vm1133, %v892, %v1261
      %v1390 = vsel %vm1134, %v894, %v1262
      %v1391 = vsel %vm1135, %v897, %v1263
      %v1392 = vsel %vm1136, %v899, %v1264
      %v1393 = vsel %vm1137, %v902, %v1265
      %v1394 = vsel %vm1138, %v904, %v1266
      %v1395 = vsel %vm1139, %v907, %v1267
      %v1396 = vsel %vm1140, %v909, %v1268
      %v1397 = vsel %vm1141, %v912, %v1269
      %v1398 = vsel %vm1142, %v914, %v1270
      %v1399 = vsel %vm1143, %v917, %v1271
      %v1400 = vsel %vm1144, %v919, %v1272
      %v1401 = vsel %vm1145, %v922, %v1273
      %v1402 = vsel %vm1146, %v924, %v1274
      %v1403 = vsel %vm1147, %v927, %v1275
      %v1404 = vsel %vm1148, %v929, %v1276
      %v1405 = vsel %vm1149, %v932, %v1277
      %v1406 = vsel %vm1150, %v934, %v1278
      %v1407 = vsel %vm1151, %v937, %v1279
      %v1408 = vsel %vm1152, %v939, %v1280
      %v1409 = vsel %vm1153, %v942, %v1281
      %v1410 = vsel %vm1154, %v944, %v1282
      %v1411 = vsel %vm1155, %v947, %v1283
      %v1412 = vsel %vm1156, %v949, %v1284
      %v1413 = vsel %vm1157, %v952, %v1285
      %v1414 = vsel %vm1158, %v954, %v1286
      %v1415 = vsel %vm1159, %v957, %v1287
      %v1416 = vsel %vm1160, %v959, %v1288
      %v1417 = vsel %vm1161, %v962, %v1289
      %v1418 = vsel %vm1162, %v964, %v1290
      %v1419 = vsel %vm1163, %v967, %v1291
      %v1420 = vsel %vm1164, %v969, %v1292
      %v1421 = vsel %vm1165, %v972, %v1293
      %v1422 = vsel %vm1166, %v974, %v1294
      %v1423 = vsel %vm1167, %v977, %v1295
      %v1424 = vsel %vm1168, %v979, %v1296
      %v1425 = vsel %vm1169, %v982, %v1297
      %v1426 = vsel %vm1170, %v984, %v1298
      %v1427 = vsel %vm1171, %v987, %v1299
      %v1428 = vsel %vm1172, %v989, %v1300
      %v1429 = vsel %vm1173, %v992, %v1301
      %v1430 = vsel %vm1174, %v994, %v1302
      %v1431 = vsel %vm1175, %v997, %v1303
      %v1432 = vsel %vm1176, %v999, %v1304
      %v1433 = vsel %vm1177, %v1002, %v1305
      %v1434 = vsel %vm1178, %v1004, %v1306
      %v1435 = vsel %vm1179, %v1007, %v1307
      %v1436 = vsel %vm1180, %v1009, %v1308
      %v1437 = vsel %vm1181, %v1012, %v1309
      %v1438 = vsel %vm1182, %v1014, %v1310
      %v1439 = vsel %vm1183, %v1017, %v1311
      %v1440 = vsel %vm1184, %v1019, %v1312
      %v1441 = vsel %vm1185, %v1022, %v1313
      %v1442 = vsel %vm1186, %v1024, %v1314
      %v1443 = vsel %vm1187, %v1027, %v1315
      %v1444 = vsel %vm1188, %v1029, %v1316
      %v1445 = vsel %vm1189, %v1032, %v1317
      %v1446 = vsel %vm1190, %v1034, %v1318
      %v1447 = vsel %vm1191, %v1037, %v1319
      %v1448 = vsel %vm1192, %v1039, %v1320
      %v1449 = vsel %vm1193, %v1042, %v1321
      %v1450 = vsel %vm1194, %v1044, %v1322
      %v1451 = vsel %vm1195, %v1047, %v1323
      %v1452 = vsel %vm1196, %v1049, %v1324
      %v1453 = vsel %vm1197, %v1052, %v1325
      %v1454 = vsel %vm1198, %v1054, %v1326
      %v1455 = vsel %vm1199, %v1057, %v1327
      %v1456 = vsel %vm1200, %v1059, %v1328
      %v1457 = vsel %vm1201, %v1062, %v1329
      %v1458 = vsel %vm1202, %v1064, %v1330
      %v1459 = vsel %vm1203, %v1067, %v1331
      %v1460 = vsel %vm1204, %v1069, %v1332
      %v1461 = vsel %vm1205, %v1072, %v1333
      %v1462 = vsel %vm1206, %v1074, %v1334
      %v1463 = vsel %vm1207, %v1077, %v1335
      %v1464 = vsel %vm1208, %v1079, %v1336
      %v1465 = vpack.c.bf16 %v1337, %v1337
      %v1466 = vpack.c.bf16 %v1338, %v1338
      %v1467 = vpack.c.bf16 %v1339, %v1339
      %v1468 = vpack.c.bf16 %v1340, %v1340
      %v1469 = vpack.c.bf16 %v1341, %v1341
      %v1470 = vpack.c.bf16 %v1342, %v1342
      %v1471 = vpack.c.bf16 %v1343, %v1343
      %v1472 = vpack.c.bf16 %v1344, %v1344
      %v1473 = vpack.c.bf16 %v1345, %v1345
      %v1474 = vpack.c.bf16 %v1346, %v1346
      %v1475 = vpack.c.bf16 %v1347, %v1347
      %v1476 = vpack.c.bf16 %v1348, %v1348
      %v1477 = vpack.c.bf16 %v1349, %v1349
      %v1478 = vpack.c.bf16 %v1350, %v1350
      %v1479 = vpack.c.bf16 %v1351, %v1351
      %v1480 = vpack.c.bf16 %v1352, %v1352
      %v1481 = vpack.c.bf16 %v1353, %v1353
      %v1482 = vpack.c.bf16 %v1354, %v1354
      %v1483 = vpack.c.bf16 %v1355, %v1355
      %v1484 = vpack.c.bf16 %v1356, %v1356
      %v1485 = vpack.c.bf16 %v1357, %v1357
      %v1486 = vpack.c.bf16 %v1358, %v1358
      %v1487 = vpack.c.bf16 %v1359, %v1359
      %v1488 = vpack.c.bf16 %v1360, %v1360
      %v1489 = vpack.c.bf16 %v1361, %v1361
      %v1490 = vpack.c.bf16 %v1362, %v1362
      %v1491 = vpack.c.bf16 %v1363, %v1363
      %v1492 = vpack.c.bf16 %v1364, %v1364
      %v1493 = vpack.c.bf16 %v1365, %v1365
      %v1494 = vpack.c.bf16 %v1366, %v1366
      %v1495 = vpack.c.bf16 %v1367, %v1367
      %v1496 = vpack.c.bf16 %v1368, %v1368
      %v1497 = vpack.c.bf16 %v1369, %v1369
      %v1498 = vpack.c.bf16 %v1370, %v1370
      %v1499 = vpack.c.bf16 %v1371, %v1371
      %v1500 = vpack.c.bf16 %v1372, %v1372
      %v1501 = vpack.c.bf16 %v1373, %v1373
      %v1502 = vpack.c.bf16 %v1374, %v1374
      %v1503 = vpack.c.bf16 %v1375, %v1375
      %v1504 = vpack.c.bf16 %v1376, %v1376
      %v1505 = vpack.c.bf16 %v1377, %v1377
      %v1506 = vpack.c.bf16 %v1378, %v1378
      %v1507 = vpack.c.bf16 %v1379, %v1379
      %v1508 = vpack.c.bf16 %v1380, %v1380
      %v1509 = vpack.c.bf16 %v1381, %v1381
      %v1510 = vpack.c.bf16 %v1382, %v1382
      %v1511 = vpack.c.bf16 %v1383, %v1383
      %v1512 = vpack.c.bf16 %v1384, %v1384
      %v1513 = vpack.c.bf16 %v1385, %v1385
      %v1514 = vpack.c.bf16 %v1386, %v1386
      %v1515 = vpack.c.bf16 %v1387, %v1387
      %v1516 = vpack.c.bf16 %v1388, %v1388
      %v1517 = vpack.c.bf16 %v1389, %v1389
      %v1518 = vpack.c.bf16 %v1390, %v1390
      %v1519 = vpack.c.bf16 %v1391, %v1391
      %v1520 = vpack.c.bf16 %v1392, %v1392
      %v1521 = vpack.c.bf16 %v1393, %v1393
      %v1522 = vpack.c.bf16 %v1394, %v1394
      %v1523 = vpack.c.bf16 %v1395, %v1395
      %v1524 = vpack.c.bf16 %v1396, %v1396
      %v1525 = vpack.c.bf16 %v1397, %v1397
      %v1526 = vpack.c.bf16 %v1398, %v1398
      %v1527 = vpack.c.bf16 %v1399, %v1399
      %v1528 = vpack.c.bf16 %v1400, %v1400
      %v1529 = vpack.c.bf16 %v1401, %v1401
      %v1530 = vpack.c.bf16 %v1402, %v1402
      %v1531 = vpack.c.bf16 %v1403, %v1403
      %v1532 = vpack.c.bf16 %v1404, %v1404
      %v1533 = vpack.c.bf16 %v1405, %v1405
      %v1534 = vpack.c.bf16 %v1406, %v1406
      %v1535 = vpack.c.bf16 %v1407, %v1407
      %v1536 = vpack.c.bf16 %v1408, %v1408
      %v1537 = vpack.c.bf16 %v1409, %v1409
      %v1538 = vpack.c.bf16 %v1410, %v1410
      %v1539 = vpack.c.bf16 %v1411, %v1411
      %v1540 = vpack.c.bf16 %v1412, %v1412
      %v1541 = vpack.c.bf16 %v1413, %v1413
      %v1542 = vpack.c.bf16 %v1414, %v1414
      %v1543 = vpack.c.bf16 %v1415, %v1415
      %v1544 = vpack.c.bf16 %v1416, %v1416
      %v1545 = vpack.c.bf16 %v1417, %v1417
      %v1546 = vpack.c.bf16 %v1418, %v1418
      %v1547 = vpack.c.bf16 %v1419, %v1419
      %v1548 = vpack.c.bf16 %v1420, %v1420
      %v1549 = vpack.c.bf16 %v1421, %v1421
      %v1550 = vpack.c.bf16 %v1422, %v1422
      %v1551 = vpack.c.bf16 %v1423, %v1423
      %v1552 = vpack.c.bf16 %v1424, %v1424
      %v1553 = vpack.c.bf16 %v1425, %v1425
      %v1554 = vpack.c.bf16 %v1426, %v1426
      %v1555 = vpack.c.bf16 %v1427, %v1427
      %v1556 = vpack.c.bf16 %v1428, %v1428
      %v1557 = vpack.c.bf16 %v1429, %v1429
      %v1558 = vpack.c.bf16 %v1430, %v1430
      %v1559 = vpack.c.bf16 %v1431, %v1431
      %v1560 = vpack.c.bf16 %v1432, %v1432
      %v1561 = vpack.c.bf16 %v1433, %v1433
      %v1562 = vpack.c.bf16 %v1434, %v1434
      %v1563 = vpack.c.bf16 %v1435, %v1435
      %v1564 = vpack.c.bf16 %v1436, %v1436
      %v1565 = vpack.c.bf16 %v1437, %v1437
      %v1566 = vpack.c.bf16 %v1438, %v1438
      %v1567 = vpack.c.bf16 %v1439, %v1439
      %v1568 = vpack.c.bf16 %v1440, %v1440
      %v1569 = vpack.c.bf16 %v1441, %v1441
      %v1570 = vpack.c.bf16 %v1442, %v1442
      %v1571 = vpack.c.bf16 %v1443, %v1443
      %v1572 = vpack.c.bf16 %v1444, %v1444
      %v1573 = vpack.c.bf16 %v1445, %v1445
      %v1574 = vpack.c.bf16 %v1446, %v1446
      %v1575 = vpack.c.bf16 %v1447, %v1447
      %v1576 = vpack.c.bf16 %v1448, %v1448
      %v1577 = vpack.c.bf16 %v1449, %v1449
      %v1578 = vpack.c.bf16 %v1450, %v1450
      %v1579 = vpack.c.bf16 %v1451, %v1451
      %v1580 = vpack.c.bf16 %v1452, %v1452
      %v1581 = vpack.c.bf16 %v1453, %v1453
      %v1582 = vpack.c.bf16 %v1454, %v1454
      %v1583 = vpack.c.bf16 %v1455, %v1455
      %v1584 = vpack.c.bf16 %v1456, %v1456
      %v1585 = vpack.c.bf16 %v1457, %v1457
      %v1586 = vpack.c.bf16 %v1458, %v1458
      %v1587 = vpack.c.bf16 %v1459, %v1459
      %v1588 = vpack.c.bf16 %v1460, %v1460
      %v1589 = vpack.c.bf16 %v1461, %v1461
      %v1590 = vpack.c.bf16 %v1462, %v1462
      %v1591 = vpack.c.bf16 %v1463, %v1463
      %v1592 = vpack.c.bf16 %v1464, %v1464
      %1593 = vst [vmem:[%s172] sm:$0xf] %v1465
      %1594 = vst [vmem:[%s172 + $0x4] sm:$0xf] %v1466
      %1595 = vst [vmem:[%s172 + $0x8] sm:$0xf] %v1467
      %1596 = vst [vmem:[%s172 + $0xc] sm:$0xf] %v1468
      %1597 = vst [vmem:[%s172 + $0x10] sm:$0xf] %v1469
      %1598 = vst [vmem:[%s172 + $0x14] sm:$0xf] %v1470
      %1599 = vst [vmem:[%s172 + $0x18] sm:$0xf] %v1471
      %1600 = vst [vmem:[%s172 + $0x1c] sm:$0xf] %v1472
      %1601 = vst [vmem:[%s172 + $0x20] sm:$0xf] %v1473
      %1602 = vst [vmem:[%s172 + $0x24] sm:$0xf] %v1474
      %1603 = vst [vmem:[%s172 + $0x28] sm:$0xf] %v1475
      %1604 = vst [vmem:[%s172 + $0x2c] sm:$0xf] %v1476
      %1605 = vst [vmem:[%s172 + $0x30] sm:$0xf] %v1477
      %1606 = vst [vmem:[%s172 + $0x34] sm:$0xf] %v1478
      %1607 = vst [vmem:[%s172 + $0x38] sm:$0xf] %v1479
      %1608 = vst [vmem:[%s172 + $0x3c] sm:$0xf] %v1480
      %1609 = vst [vmem:[%s172 + $0x40] sm:$0xf] %v1481
      %1610 = vst [vmem:[%s172 + $0x44] sm:$0xf] %v1482
      %1611 = vst [vmem:[%s172 + $0x48] sm:$0xf] %v1483
      %1612 = vst [vmem:[%s172 + $0x4c] sm:$0xf] %v1484
      %1613 = vst [vmem:[%s172 + $0x50] sm:$0xf] %v1485
      %1614 = vst [vmem:[%s172 + $0x54] sm:$0xf] %v1486
      %1615 = vst [vmem:[%s172 + $0x58] sm:$0xf] %v1487
      %1616 = vst [vmem:[%s172 + $0x5c] sm:$0xf] %v1488
      %1617 = vst [vmem:[%s172 + $0x60] sm:$0xf] %v1489
      %1618 = vst [vmem:[%s172 + $0x64] sm:$0xf] %v1490
      %1619 = vst [vmem:[%s172 + $0x68] sm:$0xf] %v1491
      %1620 = vst [vmem:[%s172 + $0x6c] sm:$0xf] %v1492
      %1621 = vst [vmem:[%s172 + $0x70] sm:$0xf] %v1493
      %1622 = vst [vmem:[%s172 + $0x74] sm:$0xf] %v1494
      %1623 = vst [vmem:[%s172 + $0x78] sm:$0xf] %v1495
      %1624 = vst [vmem:[%s172 + $0x7c] sm:$0xf] %v1496
      %1625 = vst [vmem:[%s172 + $0x80] sm:$0xf] %v1497
      %1626 = vst [vmem:[%s172 + $0x84] sm:$0xf] %v1498
      %1627 = vst [vmem:[%s172 + $0x88] sm:$0xf] %v1499
      %1628 = vst [vmem:[%s172 + $0x8c] sm:$0xf] %v1500
      %1629 = vst [vmem:[%s172 + $0x90] sm:$0xf] %v1501
      %1630 = vst [vmem:[%s172 + $0x94] sm:$0xf] %v1502
      %1631 = vst [vmem:[%s172 + $0x98] sm:$0xf] %v1503
      %1632 = vst [vmem:[%s172 + $0x9c] sm:$0xf] %v1504
      %1633 = vst [vmem:[%s172 + $0xa0] sm:$0xf] %v1505
      %1634 = vst [vmem:[%s172 + $0xa4] sm:$0xf] %v1506
      %1635 = vst [vmem:[%s172 + $0xa8] sm:$0xf] %v1507
      %1636 = vst [vmem:[%s172 + $0xac] sm:$0xf] %v1508
      %1637 = vst [vmem:[%s172 + $0xb0] sm:$0xf] %v1509
      %1638 = vst [vmem:[%s172 + $0xb4] sm:$0xf] %v1510
      %1639 = vst [vmem:[%s172 + $0xb8] sm:$0xf] %v1511
      %1640 = vst [vmem:[%s172 + $0xbc] sm:$0xf] %v1512
      %1641 = vst [vmem:[%s172 + $0xc0] sm:$0xf] %v1513
      %1642 = vst [vmem:[%s172 + $0xc4] sm:$0xf] %v1514
      %1643 = vst [vmem:[%s172 + $0xc8] sm:$0xf] %v1515
      %1644 = vst [vmem:[%s172 + $0xcc] sm:$0xf] %v1516
      %1645 = vst [vmem:[%s172 + $0xd0] sm:$0xf] %v1517
      %1646 = vst [vmem:[%s172 + $0xd4] sm:$0xf] %v1518
      %1647 = vst [vmem:[%s172 + $0xd8] sm:$0xf] %v1519
      %1648 = vst [vmem:[%s172 + $0xdc] sm:$0xf] %v1520
      %1649 = vst [vmem:[%s172 + $0xe0] sm:$0xf] %v1521
      %1650 = vst [vmem:[%s172 + $0xe4] sm:$0xf] %v1522
      %1651 = vst [vmem:[%s172 + $0xe8] sm:$0xf] %v1523
      %1652 = vst [vmem:[%s172 + $0xec] sm:$0xf] %v1524
      %1653 = vst [vmem:[%s172 + $0xf0] sm:$0xf] %v1525
      %1654 = vst [vmem:[%s172 + $0xf4] sm:$0xf] %v1526
      %1655 = vst [vmem:[%s172 + $0xf8] sm:$0xf] %v1527
      %1656 = vst [vmem:[%s172 + $0xfc] sm:$0xf] %v1528
      %1657 = vst [vmem:[%s172 + $0x100] sm:$0xf] %v1529
      %1658 = vst [vmem:[%s172 + $0x104] sm:$0xf] %v1530
      %1659 = vst [vmem:[%s172 + $0x108] sm:$0xf] %v1531
      %1660 = vst [vmem:[%s172 + $0x10c] sm:$0xf] %v1532
      %1661 = vst [vmem:[%s172 + $0x110] sm:$0xf] %v1533
      %1662 = vst [vmem:[%s172 + $0x114] sm:$0xf] %v1534
      %1663 = vst [vmem:[%s172 + $0x118] sm:$0xf] %v1535
      %1664 = vst [vmem:[%s172 + $0x11c] sm:$0xf] %v1536
      %1665 = vst [vmem:[%s172 + $0x120] sm:$0xf] %v1537
      %1666 = vst [vmem:[%s172 + $0x124] sm:$0xf] %v1538
      %1667 = vst [vmem:[%s172 + $0x128] sm:$0xf] %v1539
      %1668 = vst [vmem:[%s172 + $0x12c] sm:$0xf] %v1540
      %1669 = vst [vmem:[%s172 + $0x130] sm:$0xf] %v1541
      %1670 = vst [vmem:[%s172 + $0x134] sm:$0xf] %v1542
      %1671 = vst [vmem:[%s172 + $0x138] sm:$0xf] %v1543
      %1672 = vst [vmem:[%s172 + $0x13c] sm:$0xf] %v1544
      %1673 = vst [vmem:[%s172 + $0x140] sm:$0xf] %v1545
      %1674 = vst [vmem:[%s172 + $0x144] sm:$0xf] %v1546
      %1675 = vst [vmem:[%s172 + $0x148] sm:$0xf] %v1547
      %1676 = vst [vmem:[%s172 + $0x14c] sm:$0xf] %v1548
      %1677 = vst [vmem:[%s172 + $0x150] sm:$0xf] %v1549
      %1678 = vst [vmem:[%s172 + $0x154] sm:$0xf] %v1550
      %1679 = vst [vmem:[%s172 + $0x158] sm:$0xf] %v1551
      %1680 = vst [vmem:[%s172 + $0x15c] sm:$0xf] %v1552
      %1681 = vst [vmem:[%s172 + $0x160] sm:$0xf] %v1553
      %1682 = vst [vmem:[%s172 + $0x164] sm:$0xf] %v1554
      %1683 = vst [vmem:[%s172 + $0x168] sm:$0xf] %v1555
      %1684 = vst [vmem:[%s172 + $0x16c] sm:$0xf] %v1556
      %1685 = vst [vmem:[%s172 + $0x170] sm:$0xf] %v1557
      %1686 = vst [vmem:[%s172 + $0x174] sm:$0xf] %v1558
      %1687 = vst [vmem:[%s172 + $0x178] sm:$0xf] %v1559
      %1688 = vst [vmem:[%s172 + $0x17c] sm:$0xf] %v1560
      %1689 = vst [vmem:[%s172 + $0x180] sm:$0xf] %v1561
      %1690 = vst [vmem:[%s172 + $0x184] sm:$0xf] %v1562
      %1691 = vst [vmem:[%s172 + $0x188] sm:$0xf] %v1563
      %1692 = vst [vmem:[%s172 + $0x18c] sm:$0xf] %v1564
      %1693 = vst [vmem:[%s172 + $0x190] sm:$0xf] %v1565
      %1694 = vst [vmem:[%s172 + $0x194] sm:$0xf] %v1566
      %1695 = vst [vmem:[%s172 + $0x198] sm:$0xf] %v1567
      %1696 = vst [vmem:[%s172 + $0x19c] sm:$0xf] %v1568
      %1697 = vst [vmem:[%s172 + $0x1a0] sm:$0xf] %v1569
      %1698 = vst [vmem:[%s172 + $0x1a4] sm:$0xf] %v1570
      %1699 = vst [vmem:[%s172 + $0x1a8] sm:$0xf] %v1571
      %1700 = vst [vmem:[%s172 + $0x1ac] sm:$0xf] %v1572
      %1701 = vst [vmem:[%s172 + $0x1b0] sm:$0xf] %v1573
      %1702 = vst [vmem:[%s172 + $0x1b4] sm:$0xf] %v1574
      %1703 = vst [vmem:[%s172 + $0x1b8] sm:$0xf] %v1575
      %1704 = vst [vmem:[%s172 + $0x1bc] sm:$0xf] %v1576
      %1705 = vst [vmem:[%s172 + $0x1c0] sm:$0xf] %v1577
      %1706 = vst [vmem:[%s172 + $0x1c4] sm:$0xf] %v1578
      %1707 = vst [vmem:[%s172 + $0x1c8] sm:$0xf] %v1579
      %1708 = vst [vmem:[%s172 + $0x1cc] sm:$0xf] %v1580
      %1709 = vst [vmem:[%s172 + $0x1d0] sm:$0xf] %v1581
      %1710 = vst [vmem:[%s172 + $0x1d4] sm:$0xf] %v1582
      %1711 = vst [vmem:[%s172 + $0x1d8] sm:$0xf] %v1583
      %1712 = vst [vmem:[%s172 + $0x1dc] sm:$0xf] %v1584
      %1713 = vst [vmem:[%s172 + $0x1e0] sm:$0xf] %v1585
      %1714 = vst [vmem:[%s172 + $0x1e4] sm:$0xf] %v1586
      %1715 = vst [vmem:[%s172 + $0x1e8] sm:$0xf] %v1587
      %1716 = vst [vmem:[%s172 + $0x1ec] sm:$0xf] %v1588
      %1717 = vst [vmem:[%s172 + $0x1f0] sm:$0xf] %v1589
      %1718 = vst [vmem:[%s172 + $0x1f4] sm:$0xf] %v1590
      %1719 = vst [vmem:[%s172 + $0x1f8] sm:$0xf] %v1591
      %1720 = vst [vmem:[%s172 + $0x1fc] sm:$0xf] %v1592
      %s1721 = smul.u32 128, %s14
      %p1722 = scmp.lt.s32.totalorder %s1721, 255
      %s1723 = scalar_select %p1722, %s1721, 255
      %s1724 = smul.addr %s1723, 4
      %s1725 = scalar_lea.vmem %s3, %s1724
      // Predicated region
      $region33: #{_lambda_.5} parent=31 // pred_check
        %p1726 = pneg %p100
      $region34: #{_lambda_.5} parent=31 // pred_check_branch
        %1728 = sbr.rel (%p1726) target = $region36
      $region35: #{_lambda_.5} parent=31 // pred_region
        %s1729 = smul.u32 128, %s14
      $region36: #{_lambda_.5} parent=31 // pred_fallthru
        _
    $region32: #{_lambda_.5} parent=5 // pred_fallthru
      _
    %p1730 = scmp.le.s32.totalorder 2, %s9
    // Predicated region
    $region37: #{_lambda_.5} parent=5 // pred_check
      %p1731 = pneg %p1730
    $region38: #{_lambda_.5} parent=5 // pred_check_branch
      %1733 = sbr.rel (%p1731) target = $region40
    $region39: #{_lambda_.5} parent=5 // pred_region
      %s1734 = ssub.s32 %s9, 2
      // Predicated region
      $region41: #{_lambda_.5} parent=39 // pred_check
        %p1735 = pneg %p106
      $region42: #{_lambda_.5} parent=39 // pred_check_branch
        %1737 = sbr.rel (%p1735) target = $region44
      $region43: #{_lambda_.5} parent=39 // pred_region
        %s1738 = smul.u32 128, %s15
        %p1739 = scmp.lt.s32.totalorder %s1738, 255
        %s1740 = scalar_select %p1739, %s1738, 255
        %s1741 = smul.addr %s1740, 4
        %s1742 = scalar_lea.vmem %s3, %s1741
      $region44: #{_lambda_.5} parent=39 // pred_fallthru
        _
    $region40: #{_lambda_.5} parent=5 // pred_fallthru
      _
  $region6: #{_lambda_.5} parent=0 // loop_footer
    %s13 = sadd.s32 1, %s9
  $region7: #{_lambda_.5} parent=0 // loop_footer_branch
    %8 = sbr.rel target = $region3
  $region8: #{_lambda_.5} parent=0 // loop_exit
    _

// kernel: _lambda_.6
$region0: #{_lambda_.6}
  #allocation0 [shape = 'u32[]', space=smem, size = 0x4, offset = 0x4, fixed_abs, tag = 'smem constant byte address 0x4 - core index']
  #allocation1 [shape = 'u32[72,128]{1,0:T(1,128)}', space=vmem, size = 0x9000, scoped, tag = 'internal scratch']
  %s0 = inlined_call_operand.vmem [shape: bf16[512,128], index: 0, kind: input, shape index: {}]
  %s1 = inlined_call_operand.vmem [shape: bf16[128,128], index: 1, kind: input, shape index: {}]
  %s2 = inlined_call_operand.vmem [shape: f32[8,128], index: 2, kind: input, shape index: {}]
  %s3 = inlined_call_operand.vmem [shape: bf16[512,128], index: 3, kind: output, shape index: {}]
  %s4 = sld [smem:[#allocation0]]
  $region22: #{_lambda_.6} parent=0
    _
  %s6 = ssub.s32 1, %s4
  %s7 = scalar_select 0, %s6, %s4
  // Predicated region
  $region2: #{_lambda_.6} parent=0 // pred_check
    _
  $region3: #{_lambda_.6} parent=0 // pred_check_branch
    %9 = sbr.rel (0) target = $region5
  $region4: #{_lambda_.6} parent=0 // pred_region
    _
  $region5: #{_lambda_.6} parent=0 // pred_fallthru
    _
  // Predicated region
  $region6: #{_lambda_.6} parent=0 // pred_check
    _
  $region7: #{_lambda_.6} parent=0 // pred_check_branch
    %11 = sbr.rel (0) target = $region9
  $region8: #{_lambda_.6} parent=0 // pred_region
    _
  $region9: #{_lambda_.6} parent=0 // pred_fallthru
    _
  // Predicated region
  $region10: #{_lambda_.6} parent=0 // pred_check
    _
  $region11: #{_lambda_.6} parent=0 // pred_check_branch
    %13 = sbr.rel (0) target = $region13
  $region12: #{_lambda_.6} parent=0 // pred_region
    _
  $region13: #{_lambda_.6} parent=0 // pred_fallthru
    _
  %v14 = vld [vmem:[%s0] sm:$0xf]
  %v15 = vld [vmem:[%s0 + $0x4] sm:$0xf]
  %v16 = vld [vmem:[%s0 + $0x8] sm:$0xf]
  %v17 = vld [vmem:[%s0 + $0xc] sm:$0xf]
  %v18 = vld [vmem:[%s0 + $0x10] sm:$0xf]
  %v19 = vld [vmem:[%s0 + $0x14] sm:$0xf]
  %v20 = vld [vmem:[%s0 + $0x18] sm:$0xf]
  %v21 = vld [vmem:[%s0 + $0x1c] sm:$0xf]
  %v22 = vld [vmem:[%s0 + $0x20] sm:$0xf]
  %v23 = vld [vmem:[%s0 + $0x24] sm:$0xf]
  %v24 = vld [vmem:[%s0 + $0x28] sm:$0xf]
  %v25 = vld [vmem:[%s0 + $0x2c] sm:$0xf]
  %v26 = vld [vmem:[%s0 + $0x30] sm:$0xf]
  %v27 = vld [vmem:[%s0 + $0x34] sm:$0xf]
  %v28 = vld [vmem:[%s0 + $0x38] sm:$0xf]
  %v29 = vld [vmem:[%s0 + $0x3c] sm:$0xf]
  %v30 = vld [vmem:[%s0 + $0x40] sm:$0xf]
  %v31 = vld [vmem:[%s0 + $0x44] sm:$0xf]
  %v32 = vld [vmem:[%s0 + $0x48] sm:$0xf]
  %v33 = vld [vmem:[%s0 + $0x4c] sm:$0xf]
  %v34 = vld [vmem:[%s0 + $0x50] sm:$0xf]
  %v35 = vld [vmem:[%s0 + $0x54] sm:$0xf]
  %v36 = vld [vmem:[%s0 + $0x58] sm:$0xf]
  %v37 = vld [vmem:[%s0 + $0x5c] sm:$0xf]
  %v38 = vld [vmem:[%s0 + $0x60] sm:$0xf]
  %v39 = vld [vmem:[%s0 + $0x64] sm:$0xf]
  %v40 = vld [vmem:[%s0 + $0x68] sm:$0xf]
  %v41 = vld [vmem:[%s0 + $0x6c] sm:$0xf]
  %v42 = vld [vmem:[%s0 + $0x70] sm:$0xf]
  %v43 = vld [vmem:[%s0 + $0x74] sm:$0xf]
  %v44 = vld [vmem:[%s0 + $0x78] sm:$0xf]
  %v45 = vld [vmem:[%s0 + $0x7c] sm:$0xf]
  %v46 = vld [vmem:[%s0 + $0x80] sm:$0xf]
  %v47 = vld [vmem:[%s0 + $0x84] sm:$0xf]
  %v48 = vld [vmem:[%s0 + $0x88] sm:$0xf]
  %v49 = vld [vmem:[%s0 + $0x8c] sm:$0xf]
  %v50 = vld [vmem:[%s0 + $0x90] sm:$0xf]
  %v51 = vld [vmem:[%s0 + $0x94] sm:$0xf]
  %v52 = vld [vmem:[%s0 + $0x98] sm:$0xf]
  %v53 = vld [vmem:[%s0 + $0x9c] sm:$0xf]
  %v54 = vld [vmem:[%s0 + $0xa0] sm:$0xf]
  %v55 = vld [vmem:[%s0 + $0xa4] sm:$0xf]
  %v56 = vld [vmem:[%s0 + $0xa8] sm:$0xf]
  %v57 = vld [vmem:[%s0 + $0xac] sm:$0xf]
  %v58 = vld [vmem:[%s0 + $0xb0] sm:$0xf]
  %v59 = vld [vmem:[%s0 + $0xb4] sm:$0xf]
  %v60 = vld [vmem:[%s0 + $0xb8] sm:$0xf]
  %v61 = vld [vmem:[%s0 + $0xbc] sm:$0xf]
  %v62 = vld [vmem:[%s0 + $0xc0] sm:$0xf]
  %v63 = vld [vmem:[%s0 + $0xc4] sm:$0xf]
  %v64 = vld [vmem:[%s0 + $0xc8] sm:$0xf]
  %v65 = vld [vmem:[%s0 + $0xcc] sm:$0xf]
  %v66 = vld [vmem:[%s0 + $0xd0] sm:$0xf]
  %v67 = vld [vmem:[%s0 + $0xd4] sm:$0xf]
  %v68 = vld [vmem:[%s0 + $0xd8] sm:$0xf]
  %v69 = vld [vmem:[%s0 + $0xdc] sm:$0xf]
  %v70 = vld [vmem:[%s0 + $0xe0] sm:$0xf]
  %v71 = vld [vmem:[%s0 + $0xe4] sm:$0xf]
  %v72 = vld [vmem:[%s0 + $0xe8] sm:$0xf]
  %v73 = vld [vmem:[%s0 + $0xec] sm:$0xf]
  %v74 = vld [vmem:[%s0 + $0xf0] sm:$0xf]
  %v75 = vld [vmem:[%s0 + $0xf4] sm:$0xf]
  %v76 = vld [vmem:[%s0 + $0xf8] sm:$0xf]
  %v77 = vld [vmem:[%s0 + $0xfc] sm:$0xf]
  %v78 = vld [vmem:[%s1] sm:$0xf]
  %v79 = vld [vmem:[%s1 + $0x4] sm:$0xf]
  %v80 = vld [vmem:[%s1 + $0x8] sm:$0xf]
  %v81 = vld [vmem:[%s1 + $0xc] sm:$0xf]
  %v82 = vld [vmem:[%s1 + $0x10] sm:$0xf]
  %v83 = vld [vmem:[%s1 + $0x14] sm:$0xf]
  %v84 = vld [vmem:[%s1 + $0x18] sm:$0xf]
  %v85 = vld [vmem:[%s1 + $0x1c] sm:$0xf]
  %v86 = vld [vmem:[%s1 + $0x20] sm:$0xf]
  %v87 = vld [vmem:[%s1 + $0x24] sm:$0xf]
  %v88 = vld [vmem:[%s1 + $0x28] sm:$0xf]
  %v89 = vld [vmem:[%s1 + $0x2c] sm:$0xf]
  %v90 = vld [vmem:[%s1 + $0x30] sm:$0xf]
  %v91 = vld [vmem:[%s1 + $0x34] sm:$0xf]
  %v92 = vld [vmem:[%s1 + $0x38] sm:$0xf]
  %v93 = vld [vmem:[%s1 + $0x3c] sm:$0xf]
  %v158 = vunpack.c.l.b16 %v14
  %v159 = vunpack.c.l.b16 %v15
  %v160 = vunpack.c.l.b16 %v16
  %v161 = vunpack.c.l.b16 %v17
  %v162 = vunpack.c.l.b16 %v18
  %v163 = vunpack.c.l.b16 %v19
  %v164 = vunpack.c.l.b16 %v20
  %v165 = vunpack.c.l.b16 %v21
  %v166 = vunpack.c.l.b16 %v22
  %v167 = vunpack.c.l.b16 %v23
  %v168 = vunpack.c.l.b16 %v24
  %v169 = vunpack.c.l.b16 %v25
  %v170 = vunpack.c.l.b16 %v26
  %v171 = vunpack.c.l.b16 %v27
  %v172 = vunpack.c.l.b16 %v28
  %v173 = vunpack.c.l.b16 %v29
  %v174 = vunpack.c.l.b16 %v30
  %v175 = vunpack.c.l.b16 %v31
  %v176 = vunpack.c.l.b16 %v32
  %v177 = vunpack.c.l.b16 %v33
  %v178 = vunpack.c.l.b16 %v34
  %v179 = vunpack.c.l.b16 %v35
  %v180 = vunpack.c.l.b16 %v36
  %v181 = vunpack.c.l.b16 %v37
  %v182 = vunpack.c.l.b16 %v38
  %v183 = vunpack.c.l.b16 %v39
  %v184 = vunpack.c.l.b16 %v40
  %v185 = vunpack.c.l.b16 %v41
  %v186 = vunpack.c.l.b16 %v42
  %v187 = vunpack.c.l.b16 %v43
  %v188 = vunpack.c.l.b16 %v44
  %v189 = vunpack.c.l.b16 %v45
  %v190 = vunpack.c.l.b16 %v46
  %v191 = vunpack.c.l.b16 %v47
  %v192 = vunpack.c.l.b16 %v48
  %v193 = vunpack.c.l.b16 %v49
  %v194 = vunpack.c.l.b16 %v50
  %v195 = vunpack.c.l.b16 %v51
  %v196 = vunpack.c.l.b16 %v52
  %v197 = vunpack.c.l.b16 %v53
  %v198 = vunpack.c.l.b16 %v54
  %v199 = vunpack.c.l.b16 %v55
  %v200 = vunpack.c.l.b16 %v56
  %v201 = vunpack.c.l.b16 %v57
  %v202 = vunpack.c.l.b16 %v58
  %v203 = vunpack.c.l.b16 %v59
  %v204 = vunpack.c.l.b16 %v60
  %v205 = vunpack.c.l.b16 %v61
  %v206 = vunpack.c.l.b16 %v62
  %v207 = vunpack.c.l.b16 %v63
  %v208 = vunpack.c.l.b16 %v64
  %v209 = vunpack.c.l.b16 %v65
  %v210 = vunpack.c.l.b16 %v66
  %v211 = vunpack.c.l.b16 %v67
  %v212 = vunpack.c.l.b16 %v68
  %v213 = vunpack.c.l.b16 %v69
  %v214 = vunpack.c.l.b16 %v70
  %v215 = vunpack.c.l.b16 %v71
  %v216 = vunpack.c.l.b16 %v72
  %v217 = vunpack.c.l.b16 %v73
  %v218 = vunpack.c.l.b16 %v74
  %v219 = vunpack.c.l.b16 %v75
  %v220 = vunpack.c.l.b16 %v76
  %v221 = vunpack.c.l.b16 %v77
  %v222 = vpack.c.b16 %v159, %v158
  %v223 = vpack.c.b16 %v161, %v160
  %v224 = vpack.c.b16 %v163, %v162
  %v225 = vpack.c.b16 %v165, %v164
  %v226 = vpack.c.b16 %v167, %v166
  %v227 = vpack.c.b16 %v169, %v168
  %v228 = vpack.c.b16 %v171, %v170
  %v229 = vpack.c.b16 %v173, %v172
  %v230 = vpack.c.b16 %v175, %v174
  %v231 = vpack.c.b16 %v177, %v176
  %v232 = vpack.c.b16 %v179, %v178
  %v233 = vpack.c.b16 %v181, %v180
  %v234 = vpack.c.b16 %v183, %v182
  %v235 = vpack.c.b16 %v185, %v184
  %v236 = vpack.c.b16 %v187, %v186
  %v237 = vpack.c.b16 %v189, %v188
  %v238 = vpack.c.b16 %v191, %v190
  %v239 = vpack.c.b16 %v193, %v192
  %v240 = vpack.c.b16 %v195, %v194
  %v241 = vpack.c.b16 %v197, %v196
  %v242 = vpack.c.b16 %v199, %v198
  %v243 = vpack.c.b16 %v201, %v200
  %v244 = vpack.c.b16 %v203, %v202
  %v245 = vpack.c.b16 %v205, %v204
  %v246 = vpack.c.b16 %v207, %v206
  %v247 = vpack.c.b16 %v209, %v208
  %v248 = vpack.c.b16 %v211, %v210
  %v249 = vpack.c.b16 %v213, %v212
  %v250 = vpack.c.b16 %v215, %v214
  %v251 = vpack.c.b16 %v217, %v216
  %v252 = vpack.c.b16 %v219, %v218
  %v253 = vpack.c.b16 %v221, %v220
  %v302 = vunpack.c.l.b16 %v78
  %v303 = vunpack.c.l.b16 %v79
  %v304 = vunpack.c.l.b16 %v80
  %v305 = vunpack.c.l.b16 %v81
  %v306 = vunpack.c.l.b16 %v82
  %v307 = vunpack.c.l.b16 %v83
  %v308 = vunpack.c.l.b16 %v84
  %v309 = vunpack.c.l.b16 %v85
  %v310 = vunpack.c.l.b16 %v86
  %v311 = vunpack.c.l.b16 %v87
  %v312 = vunpack.c.l.b16 %v88
  %v313 = vunpack.c.l.b16 %v89
  %v314 = vunpack.c.l.b16 %v90
  %v315 = vunpack.c.l.b16 %v91
  %v316 = vunpack.c.l.b16 %v92
  %v317 = vunpack.c.l.b16 %v93
  %v318 = vpack.c.b16 %v303, %v302
  %v319 = vpack.c.b16 %v305, %v304
  %v320 = vpack.c.b16 %v307, %v306
  %v321 = vpack.c.b16 %v309, %v308
  %v322 = vpack.c.b16 %v311, %v310
  %v323 = vpack.c.b16 %v313, %v312
  %v324 = vpack.c.b16 %v315, %v314
  %v325 = vpack.c.b16 %v317, %v316
  %334 = vmatpush.bf16.msra.mxu0 %v325
  %335 = vmatpush.bf16.msra.mxu0 %v324
  %336 = vmatpush.bf16.msra.mxu0 %v323
  %337 = vmatpush.bf16.msra.mxu0 %v322
  %338 = vmatpush.bf16.msra.mxu0 %v321
  %339 = vmatpush.bf16.msra.mxu0 %v320
  %340 = vmatpush.bf16.msra.mxu0 %v319
  %341 = vmatpush.bf16.msra.mxu0 %v318
  %342 = vmatmul.bf16.gmra.mxu0 %v222
  %v343 = vpop.f32.mrf.mxu0
  %v344 = vadd.f32 0.0, %v343
  %v345 = vpop.f32.mrf.mxu0
  %v346 = vadd.f32 0.0, %v345
  %347 = vmatmul.bf16.gmra.mxu0 %v223
  %v348 = vpop.f32.mrf.mxu0
  %v349 = vadd.f32 0.0, %v348
  %v350 = vpop.f32.mrf.mxu0
  %v351 = vadd.f32 0.0, %v350
  %352 = vmatmul.bf16.gmra.mxu0 %v224
  %v353 = vpop.f32.mrf.mxu0
  %v354 = vadd.f32 0.0, %v353
  %v355 = vpop.f32.mrf.mxu0
  %v356 = vadd.f32 0.0, %v355
  %357 = vmatmul.bf16.gmra.mxu0 %v225
  %v358 = vpop.f32.mrf.mxu0
  %v359 = vadd.f32 0.0, %v358
  %v360 = vpop.f32.mrf.mxu0
  %v361 = vadd.f32 0.0, %v360
  %362 = vmatmul.bf16.gmra.mxu0 %v226
  %v363 = vpop.f32.mrf.mxu0
  %v364 = vadd.f32 0.0, %v363
  %v365 = vpop.f32.mrf.mxu0
  %v366 = vadd.f32 0.0, %v365
  %367 = vmatmul.bf16.gmra.mxu0 %v227
  %v368 = vpop.f32.mrf.mxu0
  %v369 = vadd.f32 0.0, %v368
  %v370 = vpop.f32.mrf.mxu0
  %v371 = vadd.f32 0.0, %v370
  %372 = vmatmul.bf16.gmra.mxu0 %v228
  %v373 = vpop.f32.mrf.mxu0
  %v374 = vadd.f32 0.0, %v373
  %v375 = vpop.f32.mrf.mxu0
  %v376 = vadd.f32 0.0, %v375
  %377 = vmatmul.bf16.gmra.mxu0 %v229
  %v378 = vpop.f32.mrf.mxu0
  %v379 = vadd.f32 0.0, %v378
  %v380 = vpop.f32.mrf.mxu0
  %v381 = vadd.f32 0.0, %v380
  %382 = vmatmul.bf16.gmra.mxu0 %v230
  %v383 = vpop.f32.mrf.mxu0
  %v384 = vadd.f32 0.0, %v383
  %v385 = vpop.f32.mrf.mxu0
  %v386 = vadd.f32 0.0, %v385
  %387 = vmatmul.bf16.gmra.mxu0 %v231
  %v388 = vpop.f32.mrf.mxu0
  %v389 = vadd.f32 0.0, %v388
  %v390 = vpop.f32.mrf.mxu0
  %v391 = vadd.f32 0.0, %v390
  %392 = vmatmul.bf16.gmra.mxu0 %v232
  %v393 = vpop.f32.mrf.mxu0
  %v394 = vadd.f32 0.0, %v393
  %v395 = vpop.f32.mrf.mxu0
  %v396 = vadd.f32 0.0, %v395
  %397 = vmatmul.bf16.gmra.mxu0 %v233
  %v398 = vpop.f32.mrf.mxu0
  %v399 = vadd.f32 0.0, %v398
  %v400 = vpop.f32.mrf.mxu0
  %v401 = vadd.f32 0.0, %v400
  %402 = vmatmul.bf16.gmra.mxu0 %v234
  %v403 = vpop.f32.mrf.mxu0
  %v404 = vadd.f32 0.0, %v403
  %v405 = vpop.f32.mrf.mxu0
  %v406 = vadd.f32 0.0, %v405
  %407 = vmatmul.bf16.gmra.mxu0 %v235
  %v408 = vpop.f32.mrf.mxu0
  %v409 = vadd.f32 0.0, %v408
  %v410 = vpop.f32.mrf.mxu0
  %v411 = vadd.f32 0.0, %v410
  %412 = vmatmul.bf16.gmra.mxu0 %v236
  %v413 = vpop.f32.mrf.mxu0
  %v414 = vadd.f32 0.0, %v413
  %v415 = vpop.f32.mrf.mxu0
  %v416 = vadd.f32 0.0, %v415
  %417 = vmatmul.bf16.gmra.mxu0 %v237
  %v418 = vpop.f32.mrf.mxu0
  %v419 = vadd.f32 0.0, %v418
  %v420 = vpop.f32.mrf.mxu0
  %v421 = vadd.f32 0.0, %v420
  %422 = vmatmul.bf16.gmra.mxu0 %v238
  %v423 = vpop.f32.mrf.mxu0
  %v424 = vadd.f32 0.0, %v423
  %v425 = vpop.f32.mrf.mxu0
  %v426 = vadd.f32 0.0, %v425
  %427 = vmatmul.bf16.gmra.mxu0 %v239
  %v428 = vpop.f32.mrf.mxu0
  %v429 = vadd.f32 0.0, %v428
  %v430 = vpop.f32.mrf.mxu0
  %v431 = vadd.f32 0.0, %v430
  %432 = vmatmul.bf16.gmra.mxu0 %v240
  %v433 = vpop.f32.mrf.mxu0
  %v434 = vadd.f32 0.0, %v433
  %v435 = vpop.f32.mrf.mxu0
  %v436 = vadd.f32 0.0, %v435
  %437 = vmatmul.bf16.gmra.mxu0 %v241
  %v438 = vpop.f32.mrf.mxu0
  %v439 = vadd.f32 0.0, %v438
  %v440 = vpop.f32.mrf.mxu0
  %v441 = vadd.f32 0.0, %v440
  %442 = vmatmul.bf16.gmra.mxu0 %v242
  %v443 = vpop.f32.mrf.mxu0
  %v444 = vadd.f32 0.0, %v443
  %v445 = vpop.f32.mrf.mxu0
  %v446 = vadd.f32 0.0, %v445
  %447 = vmatmul.bf16.gmra.mxu0 %v243
  %v448 = vpop.f32.mrf.mxu0
  %v449 = vadd.f32 0.0, %v448
  %v450 = vpop.f32.mrf.mxu0
  %v451 = vadd.f32 0.0, %v450
  %452 = vmatmul.bf16.gmra.mxu0 %v244
  %v453 = vpop.f32.mrf.mxu0
  %v454 = vadd.f32 0.0, %v453
  %v455 = vpop.f32.mrf.mxu0
  %v456 = vadd.f32 0.0, %v455
  %457 = vmatmul.bf16.gmra.mxu0 %v245
  %v458 = vpop.f32.mrf.mxu0
  %v459 = vadd.f32 0.0, %v458
  %v460 = vpop.f32.mrf.mxu0
  %v461 = vadd.f32 0.0, %v460
  %462 = vmatmul.bf16.gmra.mxu0 %v246
  %v463 = vpop.f32.mrf.mxu0
  %v464 = vadd.f32 0.0, %v463
  %v465 = vpop.f32.mrf.mxu0
  %v466 = vadd.f32 0.0, %v465
  %467 = vmatmul.bf16.gmra.mxu0 %v247
  %v468 = vpop.f32.mrf.mxu0
  %v469 = vadd.f32 0.0, %v468
  %v470 = vpop.f32.mrf.mxu0
  %v471 = vadd.f32 0.0, %v470
  %472 = vmatmul.bf16.gmra.mxu0 %v248
  %v473 = vpop.f32.mrf.mxu0
  %v474 = vadd.f32 0.0, %v473
  %v475 = vpop.f32.mrf.mxu0
  %v476 = vadd.f32 0.0, %v475
  %477 = vmatmul.bf16.gmra.mxu0 %v249
  %v478 = vpop.f32.mrf.mxu0
  %v479 = vadd.f32 0.0, %v478
  %v480 = vpop.f32.mrf.mxu0
  %v481 = vadd.f32 0.0, %v480
  %482 = vmatmul.bf16.gmra.mxu0 %v250
  %v483 = vpop.f32.mrf.mxu0
  %v484 = vadd.f32 0.0, %v483
  %v485 = vpop.f32.mrf.mxu0
  %v486 = vadd.f32 0.0, %v485
  %487 = vmatmul.bf16.gmra.mxu0 %v251
  %v488 = vpop.f32.mrf.mxu0
  %v489 = vadd.f32 0.0, %v488
  %v490 = vpop.f32.mrf.mxu0
  %v491 = vadd.f32 0.0, %v490
  %492 = vmatmul.bf16.gmra.mxu0 %v252
  %v493 = vpop.f32.mrf.mxu0
  %v494 = vadd.f32 0.0, %v493
  %v495 = vpop.f32.mrf.mxu0
  %v496 = vadd.f32 0.0, %v495
  %497 = vmatmul.bf16.gmra.mxu0 %v253
  %v498 = vpop.f32.mrf.mxu0
  %v499 = vadd.f32 0.0, %v498
  %v500 = vpop.f32.mrf.mxu0
  %v501 = vadd.f32 0.0, %v500
  %502 = vdwg.mxu0
  %v503 = vadd.f32 %v344, %v346
  %v504 = vadd.f32 %v503, %v349
  %v505 = vadd.f32 %v504, %v351
  %v506 = vadd.f32 %v505, %v354
  %v507 = vadd.f32 %v506, %v356
  %v508 = vadd.f32 %v507, %v359
  %v509 = vadd.f32 %v508, %v361
  %v510 = vadd.f32 %v509, %v364
  %v511 = vadd.f32 %v510, %v366
  %v512 = vadd.f32 %v511, %v369
  %v513 = vadd.f32 %v512, %v371
  %v514 = vadd.f32 %v513, %v374
  %v515 = vadd.f32 %v514, %v376
  %v516 = vadd.f32 %v515, %v379
  %v517 = vadd.f32 %v516, %v381
  %v518 = vadd.f32 %v517, %v384
  %v519 = vadd.f32 %v518, %v386
  %v520 = vadd.f32 %v519, %v389
  %v521 = vadd.f32 %v520, %v391
  %v522 = vadd.f32 %v521, %v394
  %v523 = vadd.f32 %v522, %v396
  %v524 = vadd.f32 %v523, %v399
  %v525 = vadd.f32 %v524, %v401
  %v526 = vadd.f32 %v525, %v404
  %v527 = vadd.f32 %v526, %v406
  %v528 = vadd.f32 %v527, %v409
  %v529 = vadd.f32 %v528, %v411
  %v530 = vadd.f32 %v529, %v414
  %v531 = vadd.f32 %v530, %v416
  %v532 = vadd.f32 %v531, %v419
  %v533 = vadd.f32 %v532, %v421
  %v534 = vadd.f32 %v533, %v424
  %v535 = vadd.f32 %v534, %v426
  %v536 = vadd.f32 %v535, %v429
  %v537 = vadd.f32 %v536, %v431
  %v538 = vadd.f32 %v537, %v434
  %v539 = vadd.f32 %v538, %v436
  %v540 = vadd.f32 %v539, %v439
  %v541 = vadd.f32 %v540, %v441
  %v542 = vadd.f32 %v541, %v444
  %v543 = vadd.f32 %v542, %v446
  %v544 = vadd.f32 %v543, %v449
  %v545 = vadd.f32 %v544, %v451
  %v546 = vadd.f32 %v545, %v454
  %v547 = vadd.f32 %v546, %v456
  %v548 = vadd.f32 %v547, %v459
  %v549 = vadd.f32 %v548, %v461
  %v550 = vadd.f32 %v549, %v464
  %v551 = vadd.f32 %v550, %v466
  %v552 = vadd.f32 %v551, %v469
  %v553 = vadd.f32 %v552, %v471
  %v554 = vadd.f32 %v553, %v474
  %v555 = vadd.f32 %v554, %v476
  %v556 = vadd.f32 %v555, %v479
  %v557 = vadd.f32 %v556, %v481
  %v558 = vadd.f32 %v557, %v484
  %v559 = vadd.f32 %v558, %v486
  %v560 = vadd.f32 %v559, %v489
  %v561 = vadd.f32 %v560, %v491
  %v562 = vadd.f32 %v561, %v494
  %v563 = vadd.f32 %v562, %v496
  %v564 = vadd.f32 %v563, %v499
  %v565 = vadd.f32 %v564, %v501
  %v566 = vrot.slane %v565, 4
  %v567 = vadd.f32 %v565, %v566
  %v568 = vrot.slane %v567, 2
  %v569 = vadd.f32 %v567, %v568
  %v570 = vrot.slane %v569, 1
  %v571 = vadd.f32 %v569, %v570
  %v572 = vmul.f32 %v571, 0.001953125
  %v573 = vmul.f32 %v344, %v344
  %v574 = vmul.f32 %v346, %v346
  %v575 = vmul.f32 %v349, %v349
  %v576 = vmul.f32 %v351, %v351
  %v577 = vmul.f32 %v354, %v354
  %v578 = vmul.f32 %v356, %v356
  %v579 = vmul.f32 %v359, %v359
  %v580 = vmul.f32 %v361, %v361
  %v581 = vmul.f32 %v364, %v364
  %v582 = vmul.f32 %v366, %v366
  %v583 = vmul.f32 %v369, %v369
  %v584 = vmul.f32 %v371, %v371
  %v585 = vmul.f32 %v374, %v374
  %v586 = vmul.f32 %v376, %v376
  %v587 = vmul.f32 %v379, %v379
  %v588 = vmul.f32 %v381, %v381
  %v589 = vmul.f32 %v384, %v384
  %v590 = vmul.f32 %v386, %v386
  %v591 = vmul.f32 %v389, %v389
  %v592 = vmul.f32 %v391, %v391
  %v593 = vmul.f32 %v394, %v394
  %v594 = vmul.f32 %v396, %v396
  %v595 = vmul.f32 %v399, %v399
  %v596 = vmul.f32 %v401, %v401
  %v597 = vmul.f32 %v404, %v404
  %v598 = vmul.f32 %v406, %v406
  %v599 = vmul.f32 %v409, %v409
  %v600 = vmul.f32 %v411, %v411
  %v601 = vmul.f32 %v414, %v414
  %v602 = vmul.f32 %v416, %v416
  %v603 = vmul.f32 %v419, %v419
  %v604 = vmul.f32 %v421, %v421
  %v605 = vmul.f32 %v424, %v424
  %v606 = vmul.f32 %v426, %v426
  %v607 = vmul.f32 %v429, %v429
  %v608 = vmul.f32 %v431, %v431
  %v609 = vmul.f32 %v434, %v434
  %v610 = vmul.f32 %v436, %v436
  %v611 = vmul.f32 %v439, %v439
  %v612 = vmul.f32 %v441, %v441
  %v613 = vmul.f32 %v444, %v444
  %v614 = vmul.f32 %v446, %v446
  %v615 = vmul.f32 %v449, %v449
  %v616 = vmul.f32 %v451, %v451
  %v617 = vmul.f32 %v454, %v454
  %v618 = vmul.f32 %v456, %v456
  %v619 = vmul.f32 %v459, %v459
  %v620 = vmul.f32 %v461, %v461
  %v621 = vmul.f32 %v464, %v464
  %v622 = vmul.f32 %v466, %v466
  %v623 = vmul.f32 %v469, %v469
  %v624 = vmul.f32 %v471, %v471
  %v625 = vmul.f32 %v474, %v474
  %v626 = vmul.f32 %v476, %v476
  %v627 = vmul.f32 %v479, %v479
  %v628 = vmul.f32 %v481, %v481
  %v629 = vmul.f32 %v484, %v484
  %v630 = vmul.f32 %v486, %v486
  %v631 = vmul.f32 %v489, %v489
  %v632 = vmul.f32 %v491, %v491
  %v633 = vmul.f32 %v494, %v494
  %v634 = vmul.f32 %v496, %v496
  %v635 = vmul.f32 %v499, %v499
  %v636 = vmul.f32 %v501, %v501
  %v637 = vadd.f32 %v573, %v574
  %v638 = vadd.f32 %v637, %v575
  %v639 = vadd.f32 %v638, %v576
  %v640 = vadd.f32 %v639, %v577
  %v641 = vadd.f32 %v640, %v578
  %v642 = vadd.f32 %v641, %v579
  %v643 = vadd.f32 %v642, %v580
  %v644 = vadd.f32 %v643, %v581
  %v645 = vadd.f32 %v644, %v582
  %v646 = vadd.f32 %v645, %v583
  %v647 = vadd.f32 %v646, %v584
  %v648 = vadd.f32 %v647, %v585
  %v649 = vadd.f32 %v648, %v586
  %v650 = vadd.f32 %v649, %v587
  %v651 = vadd.f32 %v650, %v588
  %v652 = vadd.f32 %v651, %v589
  %v653 = vadd.f32 %v652, %v590
  %v654 = vadd.f32 %v653, %v591
  %v655 = vadd.f32 %v654, %v592
  %v656 = vadd.f32 %v655, %v593
  %v657 = vadd.f32 %v656, %v594
  %v658 = vadd.f32 %v657, %v595
  %v659 = vadd.f32 %v658, %v596
  %v660 = vadd.f32 %v659, %v597
  %v661 = vadd.f32 %v660, %v598
  %v662 = vadd.f32 %v661, %v599
  %v663 = vadd.f32 %v662, %v600
  %v664 = vadd.f32 %v663, %v601
  %v665 = vadd.f32 %v664, %v602
  %v666 = vadd.f32 %v665, %v603
  %v667 = vadd.f32 %v666, %v604
  %v668 = vadd.f32 %v667, %v605
  %v669 = vadd.f32 %v668, %v606
  %v670 = vadd.f32 %v669, %v607
  %v671 = vadd.f32 %v670, %v608
  %v672 = vadd.f32 %v671, %v609
  %v673 = vadd.f32 %v672, %v610
  %v674 = vadd.f32 %v673, %v611
  %v675 = vadd.f32 %v674, %v612
  %v676 = vadd.f32 %v675, %v613
  %v677 = vadd.f32 %v676, %v614
  %v678 = vadd.f32 %v677, %v615
  %v679 = vadd.f32 %v678, %v616
  %v680 = vadd.f32 %v679, %v617
  %v681 = vadd.f32 %v680, %v618
  %v682 = vadd.f32 %v681, %v619
  %v683 = vadd.f32 %v682, %v620
  %v684 = vadd.f32 %v683, %v621
  %v685 = vadd.f32 %v684, %v622
  %v686 = vadd.f32 %v685, %v623
  %v687 = vadd.f32 %v686, %v624
  %v688 = vadd.f32 %v687, %v625
  %v689 = vadd.f32 %v688, %v626
  %v690 = vadd.f32 %v689, %v627
  %v691 = vadd.f32 %v690, %v628
  %v692 = vadd.f32 %v691, %v629
  %v693 = vadd.f32 %v692, %v630
  %v694 = vadd.f32 %v693, %v631
  %v695 = vadd.f32 %v694, %v632
  %v696 = vadd.f32 %v695, %v633
  %v697 = vadd.f32 %v696, %v634
  %v698 = vadd.f32 %v697, %v635
  %v699 = vadd.f32 %v698, %v636
  %v700 = vrot.slane %v699, 4
  %v701 = vadd.f32 %v699, %v700
  %v702 = vrot.slane %v701, 2
  %v703 = vadd.f32 %v701, %v702
  %v704 = vrot.slane %v703, 1
  %v705 = vadd.f32 %v703, %v704
  %v706 = vmul.f32 %v705, 0.001953125
  %v707 = vmul.f32 %v572, %v572
  %v708 = vsub.f32 %v706, %v707
  %v709 = vld [vmem:[%s2] sm:$0x1]
  %v710 = vadd.f32 %v708, 1e-05
  %v711 = vrsqrt.pop %v710
  %v712 = vmul.f32 %v711, %v710
  %v713 = vmul.f32 %v712, %v711
  %v714 = vmul.f32 0.5, %v713
  %v715 = vsub.f32 1.5, %v714
  %v716 = vmul.f32 %v711, %v715
  %vm717 = vweird.f32 %v710
  %vm718 = vweird.f32 %v711
  %vm719 = vmor %vm717, %vm718
  %v720 = vsel %vm719, %v711, %v716
  %v721 = vmul.f32 %v709, %v720
  %v722 = vld [vmem:[%s2 + $0x1] sm:$0x1]
  %v723 = vmul.f32 %v572, %v721
  %v724 = vsub.f32 %v722, %v723
  %v725 = vperm.slane %v721, 0
  %v726 = vmul.f32 %v344, %v725
  %v727 = vmul.f32 %v346, %v725
  %v728 = vmul.f32 %v349, %v725
  %v729 = vmul.f32 %v351, %v725
  %v730 = vmul.f32 %v354, %v725
  %v731 = vmul.f32 %v356, %v725
  %v732 = vmul.f32 %v359, %v725
  %v733 = vmul.f32 %v361, %v725
  %v734 = vmul.f32 %v364, %v725
  %v735 = vmul.f32 %v366, %v725
  %v736 = vmul.f32 %v369, %v725
  %v737 = vmul.f32 %v371, %v725
  %v738 = vmul.f32 %v374, %v725
  %v739 = vmul.f32 %v376, %v725
  %v740 = vmul.f32 %v379, %v725
  %v741 = vmul.f32 %v381, %v725
  %v742 = vmul.f32 %v384, %v725
  %v743 = vmul.f32 %v386, %v725
  %v744 = vmul.f32 %v389, %v725
  %v745 = vmul.f32 %v391, %v725
  %v746 = vmul.f32 %v394, %v725
  %v747 = vmul.f32 %v396, %v725
  %v748 = vmul.f32 %v399, %v725
  %v749 = vmul.f32 %v401, %v725
  %v750 = vmul.f32 %v404, %v725
  %v751 = vmul.f32 %v406, %v725
  %v752 = vmul.f32 %v409, %v725
  %v753 = vmul.f32 %v411, %v725
  %v754 = vmul.f32 %v414, %v725
  %v755 = vmul.f32 %v416, %v725
  %v756 = vmul.f32 %v419, %v725
  %v757 = vmul.f32 %v421, %v725
  %v758 = vmul.f32 %v424, %v725
  %v759 = vmul.f32 %v426, %v725
  %v760 = vmul.f32 %v429, %v725
  %v761 = vmul.f32 %v431, %v725
  %v762 = vmul.f32 %v434, %v725
  %v763 = vmul.f32 %v436, %v725
  %v764 = vmul.f32 %v439, %v725
  %v765 = vmul.f32 %v441, %v725
  %v766 = vmul.f32 %v444, %v725
  %v767 = vmul.f32 %v446, %v725
  %v768 = vmul.f32 %v449, %v725
  %v769 = vmul.f32 %v451, %v725
  %v770 = vmul.f32 %v454, %v725
  %v771 = vmul.f32 %v456, %v725
  %v772 = vmul.f32 %v459, %v725
  %v773 = vmul.f32 %v461, %v725
  %v774 = vmul.f32 %v464, %v725
  %v775 = vmul.f32 %v466, %v725
  %v776 = vmul.f32 %v469, %v725
  %v777 = vmul.f32 %v471, %v725
  %v778 = vmul.f32 %v474, %v725
  %v779 = vmul.f32 %v476, %v725
  %v780 = vmul.f32 %v479, %v725
  %v781 = vmul.f32 %v481, %v725
  %v782 = vmul.f32 %v484, %v725
  %v783 = vmul.f32 %v486, %v725
  %v784 = vmul.f32 %v489, %v725
  %v785 = vmul.f32 %v491, %v725
  %v786 = vmul.f32 %v494, %v725
  %v787 = vmul.f32 %v496, %v725
  %v788 = vmul.f32 %v499, %v725
  %v789 = vmul.f32 %v501, %v725
  %v790 = vperm.slane %v724, 0
  %v791 = vadd.f32 %v726, %v790
  %v792 = vadd.f32 %v727, %v790
  %v793 = vadd.f32 %v728, %v790
  %v794 = vadd.f32 %v729, %v790
  %v795 = vadd.f32 %v730, %v790
  %v796 = vadd.f32 %v731, %v790
  %v797 = vadd.f32 %v732, %v790
  %v798 = vadd.f32 %v733, %v790
  %v799 = vadd.f32 %v734, %v790
  %v800 = vadd.f32 %v735, %v790
  %v801 = vadd.f32 %v736, %v790
  %v802 = vadd.f32 %v737, %v790
  %v803 = vadd.f32 %v738, %v790
  %v804 = vadd.f32 %v739, %v790
  %v805 = vadd.f32 %v740, %v790
  %v806 = vadd.f32 %v741, %v790
  %v807 = vadd.f32 %v742, %v790
  %v808 = vadd.f32 %v743, %v790
  %v809 = vadd.f32 %v744, %v790
  %v810 = vadd.f32 %v745, %v790
  %v811 = vadd.f32 %v746, %v790
  %v812 = vadd.f32 %v747, %v790
  %v813 = vadd.f32 %v748, %v790
  %v814 = vadd.f32 %v749, %v790
  %v815 = vadd.f32 %v750, %v790
  %v816 = vadd.f32 %v751, %v790
  %v817 = vadd.f32 %v752, %v790
  %v818 = vadd.f32 %v753, %v790
  %v819 = vadd.f32 %v754, %v790
  %v820 = vadd.f32 %v755, %v790
  %v821 = vadd.f32 %v756, %v790
  %v822 = vadd.f32 %v757, %v790
  %v823 = vadd.f32 %v758, %v790
  %v824 = vadd.f32 %v759, %v790
  %v825 = vadd.f32 %v760, %v790
  %v826 = vadd.f32 %v761, %v790
  %v827 = vadd.f32 %v762, %v790
  %v828 = vadd.f32 %v763, %v790
  %v829 = vadd.f32 %v764, %v790
  %v830 = vadd.f32 %v765, %v790
  %v831 = vadd.f32 %v766, %v790
  %v832 = vadd.f32 %v767, %v790
  %v833 = vadd.f32 %v768, %v790
  %v834 = vadd.f32 %v769, %v790
  %v835 = vadd.f32 %v770, %v790
  %v836 = vadd.f32 %v771, %v790
  %v837 = vadd.f32 %v772, %v790
  %v838 = vadd.f32 %v773, %v790
  %v839 = vadd.f32 %v774, %v790
  %v840 = vadd.f32 %v775, %v790
  %v841 = vadd.f32 %v776, %v790
  %v842 = vadd.f32 %v777, %v790
  %v843 = vadd.f32 %v778, %v790
  %v844 = vadd.f32 %v779, %v790
  %v845 = vadd.f32 %v780, %v790
  %v846 = vadd.f32 %v781, %v790
  %v847 = vadd.f32 %v782, %v790
  %v848 = vadd.f32 %v783, %v790
  %v849 = vadd.f32 %v784, %v790
  %v850 = vadd.f32 %v785, %v790
  %v851 = vadd.f32 %v786, %v790
  %v852 = vadd.f32 %v787, %v790
  %v853 = vadd.f32 %v788, %v790
  %v854 = vadd.f32 %v789, %v790
  %vm855 = vcmp.gt.f32.partialorder %v791, 0.0
  %vm856 = vcmp.gt.f32.partialorder %v792, 0.0
  %vm857 = vcmp.gt.f32.partialorder %v793, 0.0
  %vm858 = vcmp.gt.f32.partialorder %v794, 0.0
  %vm859 = vcmp.gt.f32.partialorder %v795, 0.0
  %vm860 = vcmp.gt.f32.partialorder %v796, 0.0
  %vm861 = vcmp.gt.f32.partialorder %v797, 0.0
  %vm862 = vcmp.gt.f32.partialorder %v798, 0.0
  %vm863 = vcmp.gt.f32.partialorder %v799, 0.0
  %vm864 = vcmp.gt.f32.partialorder %v800, 0.0
  %vm865 = vcmp.gt.f32.partialorder %v801, 0.0
  %vm866 = vcmp.gt.f32.partialorder %v802, 0.0
  %vm867 = vcmp.gt.f32.partialorder %v803, 0.0
  %vm868 = vcmp.gt.f32.partialorder %v804, 0.0
  %vm869 = vcmp.gt.f32.partialorder %v805, 0.0
  %vm870 = vcmp.gt.f32.partialorder %v806, 0.0
  %vm871 = vcmp.gt.f32.partialorder %v807, 0.0
  %vm872 = vcmp.gt.f32.partialorder %v808, 0.0
  %vm873 = vcmp.gt.f32.partialorder %v809, 0.0
  %vm874 = vcmp.gt.f32.partialorder %v810, 0.0
  %vm875 = vcmp.gt.f32.partialorder %v811, 0.0
  %vm876 = vcmp.gt.f32.partialorder %v812, 0.0
  %vm877 = vcmp.gt.f32.partialorder %v813, 0.0
  %vm878 = vcmp.gt.f32.partialorder %v814, 0.0
  %vm879 = vcmp.gt.f32.partialorder %v815, 0.0
  %vm880 = vcmp.gt.f32.partialorder %v816, 0.0
  %vm881 = vcmp.gt.f32.partialorder %v817, 0.0
  %vm882 = vcmp.gt.f32.partialorder %v818, 0.0
  %vm883 = vcmp.gt.f32.partialorder %v819, 0.0
  %vm884 = vcmp.gt.f32.partialorder %v820, 0.0
  %vm885 = vcmp.gt.f32.partialorder %v821, 0.0
  %vm886 = vcmp.gt.f32.partialorder %v822, 0.0
  %vm887 = vcmp.gt.f32.partialorder %v823, 0.0
  %vm888 = vcmp.gt.f32.partialorder %v824, 0.0
  %vm889 = vcmp.gt.f32.partialorder %v825, 0.0
  %vm890 = vcmp.gt.f32.partialorder %v826, 0.0
  %vm891 = vcmp.gt.f32.partialorder %v827, 0.0
  %vm892 = vcmp.gt.f32.partialorder %v828, 0.0
  %vm893 = vcmp.gt.f32.partialorder %v829, 0.0
  %vm894 = vcmp.gt.f32.partialorder %v830, 0.0
  %vm895 = vcmp.gt.f32.partialorder %v831, 0.0
  %vm896 = vcmp.gt.f32.partialorder %v832, 0.0
  %vm897 = vcmp.gt.f32.partialorder %v833, 0.0
  %vm898 = vcmp.gt.f32.partialorder %v834, 0.0
  %vm899 = vcmp.gt.f32.partialorder %v835, 0.0
  %vm900 = vcmp.gt.f32.partialorder %v836, 0.0
  %vm901 = vcmp.gt.f32.partialorder %v837, 0.0
  %vm902 = vcmp.gt.f32.partialorder %v838, 0.0
  %vm903 = vcmp.gt.f32.partialorder %v839, 0.0
  %vm904 = vcmp.gt.f32.partialorder %v840, 0.0
  %vm905 = vcmp.gt.f32.partialorder %v841, 0.0
  %vm906 = vcmp.gt.f32.partialorder %v842, 0.0
  %vm907 = vcmp.gt.f32.partialorder %v843, 0.0
  %vm908 = vcmp.gt.f32.partialorder %v844, 0.0
  %vm909 = vcmp.gt.f32.partialorder %v845, 0.0
  %vm910 = vcmp.gt.f32.partialorder %v846, 0.0
  %vm911 = vcmp.gt.f32.partialorder %v847, 0.0
  %vm912 = vcmp.gt.f32.partialorder %v848, 0.0
  %vm913 = vcmp.gt.f32.partialorder %v849, 0.0
  %vm914 = vcmp.gt.f32.partialorder %v850, 0.0
  %vm915 = vcmp.gt.f32.partialorder %v851, 0.0
  %vm916 = vcmp.gt.f32.partialorder %v852, 0.0
  %vm917 = vcmp.gt.f32.partialorder %v853, 0.0
  %vm918 = vcmp.gt.f32.partialorder %v854, 0.0
  %v919 = vmul.f32 %v791, 0.2
  %v920 = vmul.f32 %v792, 0.2
  %v921 = vmul.f32 %v793, 0.2
  %v922 = vmul.f32 %v794, 0.2
  %v923 = vmul.f32 %v795, 0.2
  %v924 = vmul.f32 %v796, 0.2
  %v925 = vmul.f32 %v797, 0.2
  %v926 = vmul.f32 %v798, 0.2
  %v927 = vmul.f32 %v799, 0.2
  %v928 = vmul.f32 %v800, 0.2
  %v929 = vmul.f32 %v801, 0.2
  %v930 = vmul.f32 %v802, 0.2
  %v931 = vmul.f32 %v803, 0.2
  %v932 = vmul.f32 %v804, 0.2
  %v933 = vmul.f32 %v805, 0.2
  %v934 = vmul.f32 %v806, 0.2
  %v935 = vmul.f32 %v807, 0.2
  %v936 = vmul.f32 %v808, 0.2
  %v937 = vmul.f32 %v809, 0.2
  %v938 = vmul.f32 %v810, 0.2
  %v939 = vmul.f32 %v811, 0.2
  %v940 = vmul.f32 %v812, 0.2
  %v941 = vmul.f32 %v813, 0.2
  %v942 = vmul.f32 %v814, 0.2
  %v943 = vmul.f32 %v815, 0.2
  %v944 = vmul.f32 %v816, 0.2
  %v945 = vmul.f32 %v817, 0.2
  %v946 = vmul.f32 %v818, 0.2
  %v947 = vmul.f32 %v819, 0.2
  %v948 = vmul.f32 %v820, 0.2
  %v949 = vmul.f32 %v821, 0.2
  %v950 = vmul.f32 %v822, 0.2
  %v951 = vmul.f32 %v823, 0.2
  %v952 = vmul.f32 %v824, 0.2
  %v953 = vmul.f32 %v825, 0.2
  %v954 = vmul.f32 %v826, 0.2
  %v955 = vmul.f32 %v827, 0.2
  %v956 = vmul.f32 %v828, 0.2
  %v957 = vmul.f32 %v829, 0.2
  %v958 = vmul.f32 %v830, 0.2
  %v959 = vmul.f32 %v831, 0.2
  %v960 = vmul.f32 %v832, 0.2
  %v961 = vmul.f32 %v833, 0.2
  %v962 = vmul.f32 %v834, 0.2
  %v963 = vmul.f32 %v835, 0.2
  %v964 = vmul.f32 %v836, 0.2
  %v965 = vmul.f32 %v837, 0.2
  %v966 = vmul.f32 %v838, 0.2
  %v967 = vmul.f32 %v839, 0.2
  %v968 = vmul.f32 %v840, 0.2
  %v969 = vmul.f32 %v841, 0.2
  %v970 = vmul.f32 %v842, 0.2
  %v971 = vmul.f32 %v843, 0.2
  %v972 = vmul.f32 %v844, 0.2
  %v973 = vmul.f32 %v845, 0.2
  %v974 = vmul.f32 %v846, 0.2
  %v975 = vmul.f32 %v847, 0.2
  %v976 = vmul.f32 %v848, 0.2
  %v977 = vmul.f32 %v849, 0.2
  %v978 = vmul.f32 %v850, 0.2
  %v979 = vmul.f32 %v851, 0.2
  %v980 = vmul.f32 %v852, 0.2
  %v981 = vmul.f32 %v853, 0.2
  %v982 = vmul.f32 %v854, 0.2
  %v983 = vsel %vm855, %v791, %v919
  %v984 = vsel %vm856, %v792, %v920
  %v985 = vsel %vm857, %v793, %v921
  %v986 = vsel %vm858, %v794, %v922
  %v987 = vsel %vm859, %v795, %v923
  %v988 = vsel %vm860, %v796, %v924
  %v989 = vsel %vm861, %v797, %v925
  %v990 = vsel %vm862, %v798, %v926
  %v991 = vsel %vm863, %v799, %v927
  %v992 = vsel %vm864, %v800, %v928
  %v993 = vsel %vm865, %v801, %v929
  %v994 = vsel %vm866, %v802, %v930
  %v995 = vsel %vm867, %v803, %v931
  %v996 = vsel %vm868, %v804, %v932
  %v997 = vsel %vm869, %v805, %v933
  %v998 = vsel %vm870, %v806, %v934
  %v999 = vsel %vm871, %v807, %v935
  %v1000 = vsel %vm872, %v808, %v936
  %v1001 = vsel %vm873, %v809, %v937
  %v1002 = vsel %vm874, %v810, %v938
  %v1003 = vsel %vm875, %v811, %v939
  %v1004 = vsel %vm876, %v812, %v940
  %v1005 = vsel %vm877, %v813, %v941
  %v1006 = vsel %vm878, %v814, %v942
  %v1007 = vsel %vm879, %v815, %v943
  %v1008 = vsel %vm880, %v816, %v944
  %v1009 = vsel %vm881, %v817, %v945
  %v1010 = vsel %vm882, %v818, %v946
  %v1011 = vsel %vm883, %v819, %v947
  %v1012 = vsel %vm884, %v820, %v948
  %v1013 = vsel %vm885, %v821, %v949
  %v1014 = vsel %vm886, %v822, %v950
  %v1015 = vsel %vm887, %v823, %v951
  %v1016 = vsel %vm888, %v824, %v952
  %v1017 = vsel %vm889, %v825, %v953
  %v1018 = vsel %vm890, %v826, %v954
  %v1019 = vsel %vm891, %v827, %v955
  %v1020 = vsel %vm892, %v828, %v956
  %v1021 = vsel %vm893, %v829, %v957
  %v1022 = vsel %vm894, %v830, %v958
  %v1023 = vsel %vm895, %v831, %v959
  %v1024 = vsel %vm896, %v832, %v960
  %v1025 = vsel %vm897, %v833, %v961
  %v1026 = vsel %vm898, %v834, %v962
  %v1027 = vsel %vm899, %v835, %v963
  %v1028 = vsel %vm900, %v836, %v964
  %v1029 = vsel %vm901, %v837, %v965
  %v1030 = vsel %vm902, %v838, %v966
  %v1031 = vsel %vm903, %v839, %v967
  %v1032 = vsel %vm904, %v840, %v968
  %v1033 = vsel %vm905, %v841, %v969
  %v1034 = vsel %vm906, %v842, %v970
  %v1035 = vsel %vm907, %v843, %v971
  %v1036 = vsel %vm908, %v844, %v972
  %v1037 = vsel %vm909, %v845, %v973
  %v1038 = vsel %vm910, %v846, %v974
  %v1039 = vsel %vm911, %v847, %v975
  %v1040 = vsel %vm912, %v848, %v976
  %v1041 = vsel %vm913, %v849, %v977
  %v1042 = vsel %vm914, %v850, %v978
  %v1043 = vsel %vm915, %v851, %v979
  %v1044 = vsel %vm916, %v852, %v980
  %v1045 = vsel %vm917, %v853, %v981
  %v1046 = vsel %vm918, %v854, %v982
  %v1047 = vpack.c.bf16 %v983, %v983
  %v1048 = vpack.c.bf16 %v984, %v984
  %v1049 = vpack.c.bf16 %v985, %v985
  %v1050 = vpack.c.bf16 %v986, %v986
  %v1051 = vpack.c.bf16 %v987, %v987
  %v1052 = vpack.c.bf16 %v988, %v988
  %v1053 = vpack.c.bf16 %v989, %v989
  %v1054 = vpack.c.bf16 %v990, %v990
  %v1055 = vpack.c.bf16 %v991, %v991
  %v1056 = vpack.c.bf16 %v992, %v992
  %v1057 = vpack.c.bf16 %v993, %v993
  %v1058 = vpack.c.bf16 %v994, %v994
  %v1059 = vpack.c.bf16 %v995, %v995
  %v1060 = vpack.c.bf16 %v996, %v996
  %v1061 = vpack.c.bf16 %v997, %v997
  %v1062 = vpack.c.bf16 %v998, %v998
  %v1063 = vpack.c.bf16 %v999, %v999
  %v1064 = vpack.c.bf16 %v1000, %v1000
  %v1065 = vpack.c.bf16 %v1001, %v1001
  %v1066 = vpack.c.bf16 %v1002, %v1002
  %v1067 = vpack.c.bf16 %v1003, %v1003
  %v1068 = vpack.c.bf16 %v1004, %v1004
  %v1069 = vpack.c.bf16 %v1005, %v1005
  %v1070 = vpack.c.bf16 %v1006, %v1006
  %v1071 = vpack.c.bf16 %v1007, %v1007
  %v1072 = vpack.c.bf16 %v1008, %v1008
  %v1073 = vpack.c.bf16 %v1009, %v1009
  %v1074 = vpack.c.bf16 %v1010, %v1010
  %v1075 = vpack.c.bf16 %v1011, %v1011
  %v1076 = vpack.c.bf16 %v1012, %v1012
  %v1077 = vpack.c.bf16 %v1013, %v1013
  %v1078 = vpack.c.bf16 %v1014, %v1014
  %v1079 = vpack.c.bf16 %v1015, %v1015
  %v1080 = vpack.c.bf16 %v1016, %v1016
  %v1081 = vpack.c.bf16 %v1017, %v1017
  %v1082 = vpack.c.bf16 %v1018, %v1018
  %v1083 = vpack.c.bf16 %v1019, %v1019
  %v1084 = vpack.c.bf16 %v1020, %v1020
  %v1085 = vpack.c.bf16 %v1021, %v1021
  %v1086 = vpack.c.bf16 %v1022, %v1022
  %v1087 = vpack.c.bf16 %v1023, %v1023
  %v1088 = vpack.c.bf16 %v1024, %v1024
  %v1089 = vpack.c.bf16 %v1025, %v1025
  %v1090 = vpack.c.bf16 %v1026, %v1026
  %v1091 = vpack.c.bf16 %v1027, %v1027
  %v1092 = vpack.c.bf16 %v1028, %v1028
  %v1093 = vpack.c.bf16 %v1029, %v1029
  %v1094 = vpack.c.bf16 %v1030, %v1030
  %v1095 = vpack.c.bf16 %v1031, %v1031
  %v1096 = vpack.c.bf16 %v1032, %v1032
  %v1097 = vpack.c.bf16 %v1033, %v1033
  %v1098 = vpack.c.bf16 %v1034, %v1034
  %v1099 = vpack.c.bf16 %v1035, %v1035
  %v1100 = vpack.c.bf16 %v1036, %v1036
  %v1101 = vpack.c.bf16 %v1037, %v1037
  %v1102 = vpack.c.bf16 %v1038, %v1038
  %v1103 = vpack.c.bf16 %v1039, %v1039
  %v1104 = vpack.c.bf16 %v1040, %v1040
  %v1105 = vpack.c.bf16 %v1041, %v1041
  %v1106 = vpack.c.bf16 %v1042, %v1042
  %v1107 = vpack.c.bf16 %v1043, %v1043
  %v1108 = vpack.c.bf16 %v1044, %v1044
  %v1109 = vpack.c.bf16 %v1045, %v1045
  %v1110 = vpack.c.bf16 %v1046, %v1046
  %1111 = vst [vmem:[%s3] sm:$0xf] %v1047
  %1112 = vst [vmem:[%s3 + $0x4] sm:$0xf] %v1048
  %1113 = vst [vmem:[%s3 + $0x8] sm:$0xf] %v1049
  %1114 = vst [vmem:[%s3 + $0xc] sm:$0xf] %v1050
  %1115 = vst [vmem:[%s3 + $0x10] sm:$0xf] %v1051
  %1116 = vst [vmem:[%s3 + $0x14] sm:$0xf] %v1052
  %1117 = vst [vmem:[%s3 + $0x18] sm:$0xf] %v1053
  %1118 = vst [vmem:[%s3 + $0x1c] sm:$0xf] %v1054
  %1119 = vst [vmem:[%s3 + $0x20] sm:$0xf] %v1055
  %1120 = vst [vmem:[%s3 + $0x24] sm:$0xf] %v1056
  %1121 = vst [vmem:[%s3 + $0x28] sm:$0xf] %v1057
  %1122 = vst [vmem:[%s3 + $0x2c] sm:$0xf] %v1058
  %1123 = vst [vmem:[%s3 + $0x30] sm:$0xf] %v1059
  %1124 = vst [vmem:[%s3 + $0x34] sm:$0xf] %v1060
  %1125 = vst [vmem:[%s3 + $0x38] sm:$0xf] %v1061
  %1126 = vst [vmem:[%s3 + $0x3c] sm:$0xf] %v1062
  %1127 = vst [vmem:[%s3 + $0x40] sm:$0xf] %v1063
  %1128 = vst [vmem:[%s3 + $0x44] sm:$0xf] %v1064
  %1129 = vst [vmem:[%s3 + $0x48] sm:$0xf] %v1065
  %1130 = vst [vmem:[%s3 + $0x4c] sm:$0xf] %v1066
  %1131 = vst [vmem:[%s3 + $0x50] sm:$0xf] %v1067
  %1132 = vst [vmem:[%s3 + $0x54] sm:$0xf] %v1068
  %1133 = vst [vmem:[%s3 + $0x58] sm:$0xf] %v1069
  %1134 = vst [vmem:[%s3 + $0x5c] sm:$0xf] %v1070
  %1135 = vst [vmem:[%s3 + $0x60] sm:$0xf] %v1071
  %1136 = vst [vmem:[%s3 + $0x64] sm:$0xf] %v1072
  %1137 = vst [vmem:[%s3 + $0x68] sm:$0xf] %v1073
  %1138 = vst [vmem:[%s3 + $0x6c] sm:$0xf] %v1074
  %1139 = vst [vmem:[%s3 + $0x70] sm:$0xf] %v1075
  %1140 = vst [vmem:[%s3 + $0x74] sm:$0xf] %v1076
  %1141 = vst [vmem:[%s3 + $0x78] sm:$0xf] %v1077
  %1142 = vst [vmem:[%s3 + $0x7c] sm:$0xf] %v1078
  %1143 = vst [vmem:[%s3 + $0x80] sm:$0xf] %v1079
  %1144 = vst [vmem:[%s3 + $0x84] sm:$0xf] %v1080
  %1145 = vst [vmem:[%s3 + $0x88] sm:$0xf] %v1081
  %1146 = vst [vmem:[%s3 + $0x8c] sm:$0xf] %v1082
  %1147 = vst [vmem:[%s3 + $0x90] sm:$0xf] %v1083
  %1148 = vst [vmem:[%s3 + $0x94] sm:$0xf] %v1084
  %1149 = vst [vmem:[%s3 + $0x98] sm:$0xf] %v1085
  %1150 = vst [vmem:[%s3 + $0x9c] sm:$0xf] %v1086
  %1151 = vst [vmem:[%s3 + $0xa0] sm:$0xf] %v1087
  %1152 = vst [vmem:[%s3 + $0xa4] sm:$0xf] %v1088
  %1153 = vst [vmem:[%s3 + $0xa8] sm:$0xf] %v1089
  %1154 = vst [vmem:[%s3 + $0xac] sm:$0xf] %v1090
  %1155 = vst [vmem:[%s3 + $0xb0] sm:$0xf] %v1091
  %1156 = vst [vmem:[%s3 + $0xb4] sm:$0xf] %v1092
  %1157 = vst [vmem:[%s3 + $0xb8] sm:$0xf] %v1093
  %1158 = vst [vmem:[%s3 + $0xbc] sm:$0xf] %v1094
  %1159 = vst [vmem:[%s3 + $0xc0] sm:$0xf] %v1095
  %1160 = vst [vmem:[%s3 + $0xc4] sm:$0xf] %v1096
  %1161 = vst [vmem:[%s3 + $0xc8] sm:$0xf] %v1097
  %1162 = vst [vmem:[%s3 + $0xcc] sm:$0xf] %v1098
  %1163 = vst [vmem:[%s3 + $0xd0] sm:$0xf] %v1099
  %1164 = vst [vmem:[%s3 + $0xd4] sm:$0xf] %v1100
  %1165 = vst [vmem:[%s3 + $0xd8] sm:$0xf] %v1101
  %1166 = vst [vmem:[%s3 + $0xdc] sm:$0xf] %v1102
  %1167 = vst [vmem:[%s3 + $0xe0] sm:$0xf] %v1103
  %1168 = vst [vmem:[%s3 + $0xe4] sm:$0xf] %v1104
  %1169 = vst [vmem:[%s3 + $0xe8] sm:$0xf] %v1105
  %1170 = vst [vmem:[%s3 + $0xec] sm:$0xf] %v1106
  %1171 = vst [vmem:[%s3 + $0xf0] sm:$0xf] %v1107
  %1172 = vst [vmem:[%s3 + $0xf4] sm:$0xf] %v1108
  %1173 = vst [vmem:[%s3 + $0xf8] sm:$0xf] %v1109
  %1174 = vst [vmem:[%s3 + $0xfc] sm:$0xf] %v1110
  // Predicated region
  $region14: #{_lambda_.6} parent=0 // pred_check
    _
  $region15: #{_lambda_.6} parent=0 // pred_check_branch
    %1176 = sbr.rel (0) target = $region17
  $region16: #{_lambda_.6} parent=0 // pred_region
    _
  $region17: #{_lambda_.6} parent=0 // pred_fallthru
    _
  // Predicated region
  $region18: #{_lambda_.6} parent=0 // pred_check
    _
  $region19: #{_lambda_.6} parent=0 // pred_check_branch
    %1178 = sbr.rel (0) target = $region21
  $region20: #{_lambda_.6} parent=0 // pred_region
    _
  $region21: #{_lambda_.6} parent=0 // pred_fallthru
    _

// kernel: _lambda_.7
$region0: #{_lambda_.7}
  #allocation0 [shape = 'u32[]', space=smem, size = 0x4, offset = 0x4, fixed_abs, tag = 'smem constant byte address 0x4 - core index']
  #allocation1 [shape = 'u32[72,128]{1,0:T(1,128)}', space=vmem, size = 0x9000, scoped, tag = 'internal scratch']
  %s0 = inlined_call_operand.vmem [shape: bf16[128,256], index: 0, kind: input, shape index: {}]
  %s1 = inlined_call_operand.vmem [shape: bf16[256,128], index: 1, kind: input, shape index: {}]
  %s2 = inlined_call_operand.vmem [shape: f32[8,128], index: 2, kind: input, shape index: {}]
  %s3 = inlined_call_operand.vmem [shape: bf16[128,128], index: 3, kind: output, shape index: {}]
  %s4 = sld [smem:[#allocation0]]
  $region22: #{_lambda_.7} parent=0
    _
  %s6 = ssub.s32 1, %s4
  %s7 = scalar_select 0, %s6, %s4
  // Predicated region
  $region2: #{_lambda_.7} parent=0 // pred_check
    _
  $region3: #{_lambda_.7} parent=0 // pred_check_branch
    %9 = sbr.rel (0) target = $region5
  $region4: #{_lambda_.7} parent=0 // pred_region
    _
  $region5: #{_lambda_.7} parent=0 // pred_fallthru
    _
  // Predicated region
  $region6: #{_lambda_.7} parent=0 // pred_check
    _
  $region7: #{_lambda_.7} parent=0 // pred_check_branch
    %11 = sbr.rel (0) target = $region9
  $region8: #{_lambda_.7} parent=0 // pred_region
    _
  $region9: #{_lambda_.7} parent=0 // pred_fallthru
    _
  // Predicated region
  $region10: #{_lambda_.7} parent=0 // pred_check
    _
  $region11: #{_lambda_.7} parent=0 // pred_check_branch
    %13 = sbr.rel (0) target = $region13
  $region12: #{_lambda_.7} parent=0 // pred_region
    _
  $region13: #{_lambda_.7} parent=0 // pred_fallthru
    _
  %v14 = vld [vmem:[%s0] sm:$0xff]
  %v15 = vld [vmem:[%s0 + $0x8] sm:$0xff]
  %v16 = vld [vmem:[%s0 + $0x10] sm:$0xff]
  %v17 = vld [vmem:[%s0 + $0x18] sm:$0xff]
  %v18 = vld [vmem:[%s0 + $0x20] sm:$0xff]
  %v19 = vld [vmem:[%s0 + $0x28] sm:$0xff]
  %v20 = vld [vmem:[%s0 + $0x30] sm:$0xff]
  %v21 = vld [vmem:[%s0 + $0x38] sm:$0xff]
  %v22 = vld [vmem:[%s0 + $0x40] sm:$0xff]
  %v23 = vld [vmem:[%s0 + $0x48] sm:$0xff]
  %v24 = vld [vmem:[%s0 + $0x50] sm:$0xff]
  %v25 = vld [vmem:[%s0 + $0x58] sm:$0xff]
  %v26 = vld [vmem:[%s0 + $0x60] sm:$0xff]
  %v27 = vld [vmem:[%s0 + $0x68] sm:$0xff]
  %v28 = vld [vmem:[%s0 + $0x70] sm:$0xff]
  %v29 = vld [vmem:[%s0 + $0x78] sm:$0xff]
  %v30 = vld [vmem:[%s1] sm:$0xf]
  %v31 = vld [vmem:[%s1 + $0x4] sm:$0xf]
  %v32 = vld [vmem:[%s1 + $0x8] sm:$0xf]
  %v33 = vld [vmem:[%s1 + $0xc] sm:$0xf]
  %v34 = vld [vmem:[%s1 + $0x10] sm:$0xf]
  %v35 = vld [vmem:[%s1 + $0x14] sm:$0xf]
  %v36 = vld [vmem:[%s1 + $0x18] sm:$0xf]
  %v37 = vld [vmem:[%s1 + $0x1c] sm:$0xf]
  %v38 = vld [vmem:[%s1 + $0x20] sm:$0xf]
  %v39 = vld [vmem:[%s1 + $0x24] sm:$0xf]
  %v40 = vld [vmem:[%s1 + $0x28] sm:$0xf]
  %v41 = vld [vmem:[%s1 + $0x2c] sm:$0xf]
  %v42 = vld [vmem:[%s1 + $0x30] sm:$0xf]
  %v43 = vld [vmem:[%s1 + $0x34] sm:$0xf]
  %v44 = vld [vmem:[%s1 + $0x38] sm:$0xf]
  %v45 = vld [vmem:[%s1 + $0x3c] sm:$0xf]
  %v46 = vld [vmem:[%s1 + $0x40] sm:$0xf]
  %v47 = vld [vmem:[%s1 + $0x44] sm:$0xf]
  %v48 = vld [vmem:[%s1 + $0x48] sm:$0xf]
  %v49 = vld [vmem:[%s1 + $0x4c] sm:$0xf]
  %v50 = vld [vmem:[%s1 + $0x50] sm:$0xf]
  %v51 = vld [vmem:[%s1 + $0x54] sm:$0xf]
  %v52 = vld [vmem:[%s1 + $0x58] sm:$0xf]
  %v53 = vld [vmem:[%s1 + $0x5c] sm:$0xf]
  %v54 = vld [vmem:[%s1 + $0x60] sm:$0xf]
  %v55 = vld [vmem:[%s1 + $0x64] sm:$0xf]
  %v56 = vld [vmem:[%s1 + $0x68] sm:$0xf]
  %v57 = vld [vmem:[%s1 + $0x6c] sm:$0xf]
  %v58 = vld [vmem:[%s1 + $0x70] sm:$0xf]
  %v59 = vld [vmem:[%s1 + $0x74] sm:$0xf]
  %v60 = vld [vmem:[%s1 + $0x78] sm:$0xf]
  %v61 = vld [vmem:[%s1 + $0x7c] sm:$0xf]
  %v78 = vunpack.c.l.b16 %v14
  %v79 = vunpack.c.h.b16 %v14
  %v80 = vunpack.c.l.b16 %v15
  %v81 = vunpack.c.h.b16 %v15
  %v82 = vunpack.c.l.b16 %v16
  %v83 = vunpack.c.h.b16 %v16
  %v84 = vunpack.c.l.b16 %v17
  %v85 = vunpack.c.h.b16 %v17
  %v86 = vunpack.c.l.b16 %v18
  %v87 = vunpack.c.h.b16 %v18
  %v88 = vunpack.c.l.b16 %v19
  %v89 = vunpack.c.h.b16 %v19
  %v90 = vunpack.c.l.b16 %v20
  %v91 = vunpack.c.h.b16 %v20
  %v92 = vunpack.c.l.b16 %v21
  %v93 = vunpack.c.h.b16 %v21
  %v94 = vunpack.c.l.b16 %v22
  %v95 = vunpack.c.h.b16 %v22
  %v96 = vunpack.c.l.b16 %v23
  %v97 = vunpack.c.h.b16 %v23
  %v98 = vunpack.c.l.b16 %v24
  %v99 = vunpack.c.h.b16 %v24
  %v100 = vunpack.c.l.b16 %v25
  %v101 = vunpack.c.h.b16 %v25
  %v102 = vunpack.c.l.b16 %v26
  %v103 = vunpack.c.h.b16 %v26
  %v104 = vunpack.c.l.b16 %v27
  %v105 = vunpack.c.h.b16 %v27
  %v106 = vunpack.c.l.b16 %v28
  %v107 = vunpack.c.h.b16 %v28
  %v108 = vunpack.c.l.b16 %v29
  %v109 = vunpack.c.h.b16 %v29
  %v110 = vpack.c.b16 %v80, %v78
  %v111 = vpack.c.b16 %v81, %v79
  %v112 = vpack.c.b16 %v84, %v82
  %v113 = vpack.c.b16 %v85, %v83
  %v114 = vpack.c.b16 %v88, %v86
  %v115 = vpack.c.b16 %v89, %v87
  %v116 = vpack.c.b16 %v92, %v90
  %v117 = vpack.c.b16 %v93, %v91
  %v118 = vpack.c.b16 %v96, %v94
  %v119 = vpack.c.b16 %v97, %v95
  %v120 = vpack.c.b16 %v100, %v98
  %v121 = vpack.c.b16 %v101, %v99
  %v122 = vpack.c.b16 %v104, %v102
  %v123 = vpack.c.b16 %v105, %v103
  %v124 = vpack.c.b16 %v108, %v106
  %v125 = vpack.c.b16 %v109, %v107
  %v174 = vunpack.c.l.b16 %v30
  %v175 = vunpack.c.l.b16 %v31
  %v176 = vunpack.c.l.b16 %v32
  %v177 = vunpack.c.l.b16 %v33
  %v178 = vunpack.c.l.b16 %v34
  %v179 = vunpack.c.l.b16 %v35
  %v180 = vunpack.c.l.b16 %v36
  %v181 = vunpack.c.l.b16 %v37
  %v182 = vunpack.c.l.b16 %v38
  %v183 = vunpack.c.l.b16 %v39
  %v184 = vunpack.c.l.b16 %v40
  %v185 = vunpack.c.l.b16 %v41
  %v186 = vunpack.c.l.b16 %v42
  %v187 = vunpack.c.l.b16 %v43
  %v188 = vunpack.c.l.b16 %v44
  %v189 = vunpack.c.l.b16 %v45
  %v190 = vunpack.c.l.b16 %v46
  %v191 = vunpack.c.l.b16 %v47
  %v192 = vunpack.c.l.b16 %v48
  %v193 = vunpack.c.l.b16 %v49
  %v194 = vunpack.c.l.b16 %v50
  %v195 = vunpack.c.l.b16 %v51
  %v196 = vunpack.c.l.b16 %v52
  %v197 = vunpack.c.l.b16 %v53
  %v198 = vunpack.c.l.b16 %v54
  %v199 = vunpack.c.l.b16 %v55
  %v200 = vunpack.c.l.b16 %v56
  %v201 = vunpack.c.l.b16 %v57
  %v202 = vunpack.c.l.b16 %v58
  %v203 = vunpack.c.l.b16 %v59
  %v204 = vunpack.c.l.b16 %v60
  %v205 = vunpack.c.l.b16 %v61
  %v206 = vpack.c.b16 %v175, %v174
  %v207 = vpack.c.b16 %v177, %v176
  %v208 = vpack.c.b16 %v179, %v178
  %v209 = vpack.c.b16 %v181, %v180
  %v210 = vpack.c.b16 %v183, %v182
  %v211 = vpack.c.b16 %v185, %v184
  %v212 = vpack.c.b16 %v187, %v186
  %v213 = vpack.c.b16 %v189, %v188
  %v214 = vpack.c.b16 %v191, %v190
  %v215 = vpack.c.b16 %v193, %v192
  %v216 = vpack.c.b16 %v195, %v194
  %v217 = vpack.c.b16 %v197, %v196
  %v218 = vpack.c.b16 %v199, %v198
  %v219 = vpack.c.b16 %v201, %v200
  %v220 = vpack.c.b16 %v203, %v202
  %v221 = vpack.c.b16 %v205, %v204
  %238 = vmatpush.bf16.msra.mxu0 %v213
  %239 = vmatpush.bf16.msra.mxu0 %v212
  %240 = vmatpush.bf16.msra.mxu0 %v211
  %241 = vmatpush.bf16.msra.mxu0 %v210
  %242 = vmatpush.bf16.msra.mxu0 %v209
  %243 = vmatpush.bf16.msra.mxu0 %v208
  %244 = vmatpush.bf16.msra.mxu0 %v207
  %245 = vmatpush.bf16.msra.mxu0 %v206
  %246 = vmatmul.bf16.gmra.mxu0 %v110
  %v247 = vpop.f32.mrf.mxu0
  %v248 = vadd.f32 0.0, %v247
  %v249 = vpop.f32.mrf.mxu0
  %v250 = vadd.f32 0.0, %v249
  %251 = vmatmul.bf16.gmra.mxu0 %v112
  %v252 = vpop.f32.mrf.mxu0
  %v253 = vadd.f32 0.0, %v252
  %v254 = vpop.f32.mrf.mxu0
  %v255 = vadd.f32 0.0, %v254
  %256 = vmatmul.bf16.gmra.mxu0 %v114
  %v257 = vpop.f32.mrf.mxu0
  %v258 = vadd.f32 0.0, %v257
  %v259 = vpop.f32.mrf.mxu0
  %v260 = vadd.f32 0.0, %v259
  %261 = vmatmul.bf16.gmra.mxu0 %v116
  %v262 = vpop.f32.mrf.mxu0
  %v263 = vadd.f32 0.0, %v262
  %v264 = vpop.f32.mrf.mxu0
  %v265 = vadd.f32 0.0, %v264
  %266 = vmatmul.bf16.gmra.mxu0 %v118
  %v267 = vpop.f32.mrf.mxu0
  %v268 = vadd.f32 0.0, %v267
  %v269 = vpop.f32.mrf.mxu0
  %v270 = vadd.f32 0.0, %v269
  %271 = vmatmul.bf16.gmra.mxu0 %v120
  %v272 = vpop.f32.mrf.mxu0
  %v273 = vadd.f32 0.0, %v272
  %v274 = vpop.f32.mrf.mxu0
  %v275 = vadd.f32 0.0, %v274
  %276 = vmatmul.bf16.gmra.mxu0 %v122
  %v277 = vpop.f32.mrf.mxu0
  %v278 = vadd.f32 0.0, %v277
  %v279 = vpop.f32.mrf.mxu0
  %v280 = vadd.f32 0.0, %v279
  %281 = vmatmul.bf16.gmra.mxu0 %v124
  %v282 = vpop.f32.mrf.mxu0
  %v283 = vadd.f32 0.0, %v282
  %v284 = vpop.f32.mrf.mxu0
  %v285 = vadd.f32 0.0, %v284
  %286 = vdwg.mxu0
  %287 = vmatpush.bf16.msra.mxu0 %v221
  %288 = vmatpush.bf16.msra.mxu0 %v220
  %289 = vmatpush.bf16.msra.mxu0 %v219
  %290 = vmatpush.bf16.msra.mxu0 %v218
  %291 = vmatpush.bf16.msra.mxu0 %v217
  %292 = vmatpush.bf16.msra.mxu0 %v216
  %293 = vmatpush.bf16.msra.mxu0 %v215
  %294 = vmatpush.bf16.msra.mxu0 %v214
  %295 = vmatmul.bf16.gmra.mxu0 %v111
  %v296 = vpop.f32.mrf.mxu0
  %v297 = vadd.f32 %v248, %v296
  %v298 = vpop.f32.mrf.mxu0
  %v299 = vadd.f32 %v250, %v298
  %300 = vmatmul.bf16.gmra.mxu0 %v113
  %v301 = vpop.f32.mrf.mxu0
  %v302 = vadd.f32 %v253, %v301
  %v303 = vpop.f32.mrf.mxu0
  %v304 = vadd.f32 %v255, %v303
  %305 = vmatmul.bf16.gmra.mxu0 %v115
  %v306 = vpop.f32.mrf.mxu0
  %v307 = vadd.f32 %v258, %v306
  %v308 = vpop.f32.mrf.mxu0
  %v309 = vadd.f32 %v260, %v308
  %310 = vmatmul.bf16.gmra.mxu0 %v117
  %v311 = vpop.f32.mrf.mxu0
  %v312 = vadd.f32 %v263, %v311
  %v313 = vpop.f32.mrf.mxu0
  %v314 = vadd.f32 %v265, %v313
  %315 = vmatmul.bf16.gmra.mxu0 %v119
  %v316 = vpop.f32.mrf.mxu0
  %v317 = vadd.f32 %v268, %v316
  %v318 = vpop.f32.mrf.mxu0
  %v319 = vadd.f32 %v270, %v318
  %320 = vmatmul.bf16.gmra.mxu0 %v121
  %v321 = vpop.f32.mrf.mxu0
  %v322 = vadd.f32 %v273, %v321
  %v323 = vpop.f32.mrf.mxu0
  %v324 = vadd.f32 %v275, %v323
  %325 = vmatmul.bf16.gmra.mxu0 %v123
  %v326 = vpop.f32.mrf.mxu0
  %v327 = vadd.f32 %v278, %v326
  %v328 = vpop.f32.mrf.mxu0
  %v329 = vadd.f32 %v280, %v328
  %330 = vmatmul.bf16.gmra.mxu0 %v125
  %v331 = vpop.f32.mrf.mxu0
  %v332 = vadd.f32 %v283, %v331
  %v333 = vpop.f32.mrf.mxu0
  %v334 = vadd.f32 %v285, %v333
  %335 = vdwg.mxu0
  %v336 = vadd.f32 %v297, %v299
  %v337 = vadd.f32 %v336, %v302
  %v338 = vadd.f32 %v337, %v304
  %v339 = vadd.f32 %v338, %v307
  %v340 = vadd.f32 %v339, %v309
  %v341 = vadd.f32 %v340, %v312
  %v342 = vadd.f32 %v341, %v314
  %v343 = vadd.f32 %v342, %v317
  %v344 = vadd.f32 %v343, %v319
  %v345 = vadd.f32 %v344, %v322
  %v346 = vadd.f32 %v345, %v324
  %v347 = vadd.f32 %v346, %v327
  %v348 = vadd.f32 %v347, %v329
  %v349 = vadd.f32 %v348, %v332
  %v350 = vadd.f32 %v349, %v334
  %v351 = vrot.slane %v350, 4
  %v352 = vadd.f32 %v350, %v351
  %v353 = vrot.slane %v352, 2
  %v354 = vadd.f32 %v352, %v353
  %v355 = vrot.slane %v354, 1
  %v356 = vadd.f32 %v354, %v355
  %v357 = vmul.f32 %v356, 0.0078125
  %v358 = vmul.f32 %v297, %v297
  %v359 = vmul.f32 %v299, %v299
  %v360 = vmul.f32 %v302, %v302
  %v361 = vmul.f32 %v304, %v304
  %v362 = vmul.f32 %v307, %v307
  %v363 = vmul.f32 %v309, %v309
  %v364 = vmul.f32 %v312, %v312
  %v365 = vmul.f32 %v314, %v314
  %v366 = vmul.f32 %v317, %v317
  %v367 = vmul.f32 %v319, %v319
  %v368 = vmul.f32 %v322, %v322
  %v369 = vmul.f32 %v324, %v324
  %v370 = vmul.f32 %v327, %v327
  %v371 = vmul.f32 %v329, %v329
  %v372 = vmul.f32 %v332, %v332
  %v373 = vmul.f32 %v334, %v334
  %v374 = vadd.f32 %v358, %v359
  %v375 = vadd.f32 %v374, %v360
  %v376 = vadd.f32 %v375, %v361
  %v377 = vadd.f32 %v376, %v362
  %v378 = vadd.f32 %v377, %v363
  %v379 = vadd.f32 %v378, %v364
  %v380 = vadd.f32 %v379, %v365
  %v381 = vadd.f32 %v380, %v366
  %v382 = vadd.f32 %v381, %v367
  %v383 = vadd.f32 %v382, %v368
  %v384 = vadd.f32 %v383, %v369
  %v385 = vadd.f32 %v384, %v370
  %v386 = vadd.f32 %v385, %v371
  %v387 = vadd.f32 %v386, %v372
  %v388 = vadd.f32 %v387, %v373
  %v389 = vrot.slane %v388, 4
  %v390 = vadd.f32 %v388, %v389
  %v391 = vrot.slane %v390, 2
  %v392 = vadd.f32 %v390, %v391
  %v393 = vrot.slane %v392, 1
  %v394 = vadd.f32 %v392, %v393
  %v395 = vmul.f32 %v394, 0.0078125
  %v396 = vmul.f32 %v357, %v357
  %v397 = vsub.f32 %v395, %v396
  %v398 = vld [vmem:[%s2] sm:$0x1]
  %v399 = vadd.f32 %v397, 1e-05
  %v400 = vrsqrt.pop %v399
  %v401 = vmul.f32 %v400, %v399
  %v402 = vmul.f32 %v401, %v400
  %v403 = vmul.f32 0.5, %v402
  %v404 = vsub.f32 1.5, %v403
  %v405 = vmul.f32 %v400, %v404
  %vm406 = vweird.f32 %v399
  %vm407 = vweird.f32 %v400
  %vm408 = vmor %vm406, %vm407
  %v409 = vsel %vm408, %v400, %v405
  %v410 = vmul.f32 %v398, %v409
  %v411 = vld [vmem:[%s2 + $0x1] sm:$0x1]
  %v412 = vmul.f32 %v357, %v410
  %v413 = vsub.f32 %v411, %v412
  %v414 = vperm.slane %v410, 0
  %v415 = vmul.f32 %v297, %v414
  %v416 = vmul.f32 %v299, %v414
  %v417 = vmul.f32 %v302, %v414
  %v418 = vmul.f32 %v304, %v414
  %v419 = vmul.f32 %v307, %v414
  %v420 = vmul.f32 %v309, %v414
  %v421 = vmul.f32 %v312, %v414
  %v422 = vmul.f32 %v314, %v414
  %v423 = vmul.f32 %v317, %v414
  %v424 = vmul.f32 %v319, %v414
  %v425 = vmul.f32 %v322, %v414
  %v426 = vmul.f32 %v324, %v414
  %v427 = vmul.f32 %v327, %v414
  %v428 = vmul.f32 %v329, %v414
  %v429 = vmul.f32 %v332, %v414
  %v430 = vmul.f32 %v334, %v414
  %v431 = vperm.slane %v413, 0
  %v432 = vadd.f32 %v415, %v431
  %v433 = vadd.f32 %v416, %v431
  %v434 = vadd.f32 %v417, %v431
  %v435 = vadd.f32 %v418, %v431
  %v436 = vadd.f32 %v419, %v431
  %v437 = vadd.f32 %v420, %v431
  %v438 = vadd.f32 %v421, %v431
  %v439 = vadd.f32 %v422, %v431
  %v440 = vadd.f32 %v423, %v431
  %v441 = vadd.f32 %v424, %v431
  %v442 = vadd.f32 %v425, %v431
  %v443 = vadd.f32 %v426, %v431
  %v444 = vadd.f32 %v427, %v431
  %v445 = vadd.f32 %v428, %v431
  %v446 = vadd.f32 %v429, %v431
  %v447 = vadd.f32 %v430, %v431
  %vm448 = vcmp.gt.f32.partialorder %v432, 0.0
  %vm449 = vcmp.gt.f32.partialorder %v433, 0.0
  %vm450 = vcmp.gt.f32.partialorder %v434, 0.0
  %vm451 = vcmp.gt.f32.partialorder %v435, 0.0
  %vm452 = vcmp.gt.f32.partialorder %v436, 0.0
  %vm453 = vcmp.gt.f32.partialorder %v437, 0.0
  %vm454 = vcmp.gt.f32.partialorder %v438, 0.0
  %vm455 = vcmp.gt.f32.partialorder %v439, 0.0
  %vm456 = vcmp.gt.f32.partialorder %v440, 0.0
  %vm457 = vcmp.gt.f32.partialorder %v441, 0.0
  %vm458 = vcmp.gt.f32.partialorder %v442, 0.0
  %vm459 = vcmp.gt.f32.partialorder %v443, 0.0
  %vm460 = vcmp.gt.f32.partialorder %v444, 0.0
  %vm461 = vcmp.gt.f32.partialorder %v445, 0.0
  %vm462 = vcmp.gt.f32.partialorder %v446, 0.0
  %vm463 = vcmp.gt.f32.partialorder %v447, 0.0
  %v464 = vmul.f32 %v432, 0.2
  %v465 = vmul.f32 %v433, 0.2
  %v466 = vmul.f32 %v434, 0.2
  %v467 = vmul.f32 %v435, 0.2
  %v468 = vmul.f32 %v436, 0.2
  %v469 = vmul.f32 %v437, 0.2
  %v470 = vmul.f32 %v438, 0.2
  %v471 = vmul.f32 %v439, 0.2
  %v472 = vmul.f32 %v440, 0.2
  %v473 = vmul.f32 %v441, 0.2
  %v474 = vmul.f32 %v442, 0.2
  %v475 = vmul.f32 %v443, 0.2
  %v476 = vmul.f32 %v444, 0.2
  %v477 = vmul.f32 %v445, 0.2
  %v478 = vmul.f32 %v446, 0.2
  %v479 = vmul.f32 %v447, 0.2
  %v480 = vsel %vm448, %v432, %v464
  %v481 = vsel %vm449, %v433, %v465
  %v482 = vsel %vm450, %v434, %v466
  %v483 = vsel %vm451, %v435, %v467
  %v484 = vsel %vm452, %v436, %v468
  %v485 = vsel %vm453, %v437, %v469
  %v486 = vsel %vm454, %v438, %v470
  %v487 = vsel %vm455, %v439, %v471
  %v488 = vsel %vm456, %v440, %v472
  %v489 = vsel %vm457, %v441, %v473
  %v490 = vsel %vm458, %v442, %v474
  %v491 = vsel %vm459, %v443, %v475
  %v492 = vsel %vm460, %v444, %v476
  %v493 = vsel %vm461, %v445, %v477
  %v494 = vsel %vm462, %v446, %v478
  %v495 = vsel %vm463, %v447, %v479
  %v496 = vpack.c.bf16 %v480, %v480
  %v497 = vpack.c.bf16 %v481, %v481
  %v498 = vpack.c.bf16 %v482, %v482
  %v499 = vpack.c.bf16 %v483, %v483
  %v500 = vpack.c.bf16 %v484, %v484
  %v501 = vpack.c.bf16 %v485, %v485
  %v502 = vpack.c.bf16 %v486, %v486
  %v503 = vpack.c.bf16 %v487, %v487
  %v504 = vpack.c.bf16 %v488, %v488
  %v505 = vpack.c.bf16 %v489, %v489
  %v506 = vpack.c.bf16 %v490, %v490
  %v507 = vpack.c.bf16 %v491, %v491
  %v508 = vpack.c.bf16 %v492, %v492
  %v509 = vpack.c.bf16 %v493, %v493
  %v510 = vpack.c.bf16 %v494, %v494
  %v511 = vpack.c.bf16 %v495, %v495
  %512 = vst [vmem:[%s3] sm:$0xf] %v496
  %513 = vst [vmem:[%s3 + $0x4] sm:$0xf] %v497
  %514 = vst [vmem:[%s3 + $0x8] sm:$0xf] %v498
  %515 = vst [vmem:[%s3 + $0xc] sm:$0xf] %v499
  %516 = vst [vmem:[%s3 + $0x10] sm:$0xf] %v500
  %517 = vst [vmem:[%s3 + $0x14] sm:$0xf] %v501
  %518 = vst [vmem:[%s3 + $0x18] sm:$0xf] %v502
  %519 = vst [vmem:[%s3 + $0x1c] sm:$0xf] %v503
  %520 = vst [vmem:[%s3 + $0x20] sm:$0xf] %v504
  %521 = vst [vmem:[%s3 + $0x24] sm:$0xf] %v505
  %522 = vst [vmem:[%s3 + $0x28] sm:$0xf] %v506
  %523 = vst [vmem:[%s3 + $0x2c] sm:$0xf] %v507
  %524 = vst [vmem:[%s3 + $0x30] sm:$0xf] %v508
  %525 = vst [vmem:[%s3 + $0x34] sm:$0xf] %v509
  %526 = vst [vmem:[%s3 + $0x38] sm:$0xf] %v510
  %527 = vst [vmem:[%s3 + $0x3c] sm:$0xf] %v511
  // Predicated region
  $region14: #{_lambda_.7} parent=0 // pred_check
    _
  $region15: #{_lambda_.7} parent=0 // pred_check_branch
    %529 = sbr.rel (0) target = $region17
  $region16: #{_lambda_.7} parent=0 // pred_region
    _
  $region17: #{_lambda_.7} parent=0 // pred_fallthru
    _
  // Predicated region
  $region18: #{_lambda_.7} parent=0 // pred_check
    _
  $region19: #{_lambda_.7} parent=0 // pred_check_branch
    %531 = sbr.rel (0) target = $region21
  $region20: #{_lambda_.7} parent=0 // pred_region
    _
  $region21: #{_lambda_.7} parent=0 // pred_fallthru
    _

// kernel: _lambda_.8
$region0: #{_lambda_.8}
  #allocation0 [shape = 'u32[]', space=smem, size = 0x4, offset = 0x4, fixed_abs, tag = 'smem constant byte address 0x4 - core index']
  #allocation1 [shape = 'u32[72,128]{1,0:T(1,128)}', space=vmem, size = 0x9000, scoped, tag = 'internal scratch']
  %s0 = inlined_call_operand.vmem [shape: bf16[112,512], index: 0, kind: input, shape index: {}]
  %s1 = inlined_call_operand.vmem [shape: bf16[512,128], index: 1, kind: input, shape index: {}]
  %s2 = inlined_call_operand.vmem [shape: f32[8,128], index: 2, kind: input, shape index: {}]
  %s3 = inlined_call_operand.vmem [shape: bf16[112,128], index: 3, kind: output, shape index: {}]
  %s4 = sld [smem:[#allocation0]]
  $region22: #{_lambda_.8} parent=0
    _
  %s6 = ssub.s32 1, %s4
  %s7 = scalar_select 0, %s6, %s4
  // Predicated region
  $region2: #{_lambda_.8} parent=0 // pred_check
    _
  $region3: #{_lambda_.8} parent=0 // pred_check_branch
    %9 = sbr.rel (0) target = $region5
  $region4: #{_lambda_.8} parent=0 // pred_region
    _
  $region5: #{_lambda_.8} parent=0 // pred_fallthru
    _
  // Predicated region
  $region6: #{_lambda_.8} parent=0 // pred_check
    _
  $region7: #{_lambda_.8} parent=0 // pred_check_branch
    %11 = sbr.rel (0) target = $region9
  $region8: #{_lambda_.8} parent=0 // pred_region
    _
  $region9: #{_lambda_.8} parent=0 // pred_fallthru
    _
  // Predicated region
  $region10: #{_lambda_.8} parent=0 // pred_check
    _
  $region11: #{_lambda_.8} parent=0 // pred_check_branch
    %13 = sbr.rel (0) target = $region13
  $region12: #{_lambda_.8} parent=0 // pred_region
    _
  $region13: #{_lambda_.8} parent=0 // pred_fallthru
    _
  %v14 = vld [vmem:[%s0] sm:$0xff]
  %v15 = vld [vmem:[%s0 + $0x8] sm:$0xff]
  %v16 = vld [vmem:[%s0 + $0x10] sm:$0xff]
  %v17 = vld [vmem:[%s0 + $0x18] sm:$0xff]
  %v18 = vld [vmem:[%s0 + $0x20] sm:$0xff]
  %v19 = vld [vmem:[%s0 + $0x28] sm:$0xff]
  %v20 = vld [vmem:[%s0 + $0x30] sm:$0xff]
  %v21 = vld [vmem:[%s0 + $0x38] sm:$0xff]
  %v22 = vld [vmem:[%s0 + $0x40] sm:$0xff]
  %v23 = vld [vmem:[%s0 + $0x48] sm:$0xff]
  %v24 = vld [vmem:[%s0 + $0x50] sm:$0xff]
  %v25 = vld [vmem:[%s0 + $0x58] sm:$0xff]
  %v26 = vld [vmem:[%s0 + $0x60] sm:$0xff]
  %v27 = vld [vmem:[%s0 + $0x68] sm:$0xff]
  %v28 = vld [vmem:[%s0 + $0x70] sm:$0xff]
  %v29 = vld [vmem:[%s0 + $0x78] sm:$0xff]
  %v30 = vld [vmem:[%s0 + $0x80] sm:$0xff]
  %v31 = vld [vmem:[%s0 + $0x88] sm:$0xff]
  %v32 = vld [vmem:[%s0 + $0x90] sm:$0xff]
  %v33 = vld [vmem:[%s0 + $0x98] sm:$0xff]
  %v34 = vld [vmem:[%s0 + $0xa0] sm:$0xff]
  %v35 = vld [vmem:[%s0 + $0xa8] sm:$0xff]
  %v36 = vld [vmem:[%s0 + $0xb0] sm:$0xff]
  %v37 = vld [vmem:[%s0 + $0xb8] sm:$0xff]
  %v38 = vld [vmem:[%s0 + $0xc0] sm:$0xff]
  %v39 = vld [vmem:[%s0 + $0xc8] sm:$0xff]
  %v40 = vld [vmem:[%s0 + $0xd0] sm:$0xff]
  %v41 = vld [vmem:[%s0 + $0xd8] sm:$0xff]
  %v42 = vld [vmem:[%s1] sm:$0xf]
  %v43 = vld [vmem:[%s1 + $0x4] sm:$0xf]
  %v44 = vld [vmem:[%s1 + $0x8] sm:$0xf]
  %v45 = vld [vmem:[%s1 + $0xc] sm:$0xf]
  %v46 = vld [vmem:[%s1 + $0x10] sm:$0xf]
  %v47 = vld [vmem:[%s1 + $0x14] sm:$0xf]
  %v48 = vld [vmem:[%s1 + $0x18] sm:$0xf]
  %v49 = vld [vmem:[%s1 + $0x1c] sm:$0xf]
  %v50 = vld [vmem:[%s1 + $0x20] sm:$0xf]
  %v51 = vld [vmem:[%s1 + $0x24] sm:$0xf]
  %v52 = vld [vmem:[%s1 + $0x28] sm:$0xf]
  %v53 = vld [vmem:[%s1 + $0x2c] sm:$0xf]
  %v54 = vld [vmem:[%s1 + $0x30] sm:$0xf]
  %v55 = vld [vmem:[%s1 + $0x34] sm:$0xf]
  %v56 = vld [vmem:[%s1 + $0x38] sm:$0xf]
  %v57 = vld [vmem:[%s1 + $0x3c] sm:$0xf]
  %v58 = vld [vmem:[%s1 + $0x40] sm:$0xf]
  %v59 = vld [vmem:[%s1 + $0x44] sm:$0xf]
  %v60 = vld [vmem:[%s1 + $0x48] sm:$0xf]
  %v61 = vld [vmem:[%s1 + $0x4c] sm:$0xf]
  %v62 = vld [vmem:[%s1 + $0x50] sm:$0xf]
  %v63 = vld [vmem:[%s1 + $0x54] sm:$0xf]
  %v64 = vld [vmem:[%s1 + $0x58] sm:$0xf]
  %v65 = vld [vmem:[%s1 + $0x5c] sm:$0xf]
  %v66 = vld [vmem:[%s1 + $0x60] sm:$0xf]
  %v67 = vld [vmem:[%s1 + $0x64] sm:$0xf]
  %v68 = vld [vmem:[%s1 + $0x68] sm:$0xf]
  %v69 = vld [vmem:[%s1 + $0x6c] sm:$0xf]
  %v70 = vld [vmem:[%s1 + $0x70] sm:$0xf]
  %v71 = vld [vmem:[%s1 + $0x74] sm:$0xf]
  %v72 = vld [vmem:[%s1 + $0x78] sm:$0xf]
  %v73 = vld [vmem:[%s1 + $0x7c] sm:$0xf]
  %v74 = vld [vmem:[%s1 + $0x80] sm:$0xf]
  %v75 = vld [vmem:[%s1 + $0x84] sm:$0xf]
  %v76 = vld [vmem:[%s1 + $0x88] sm:$0xf]
  %v77 = vld [vmem:[%s1 + $0x8c] sm:$0xf]
  %v78 = vld [vmem:[%s1 + $0x90] sm:$0xf]
  %v79 = vld [vmem:[%s1 + $0x94] sm:$0xf]
  %v80 = vld [vmem:[%s1 + $0x98] sm:$0xf]
  %v81 = vld [vmem:[%s1 + $0x9c] sm:$0xf]
  %v82 = vld [vmem:[%s1 + $0xa0] sm:$0xf]
  %v83 = vld [vmem:[%s1 + $0xa4] sm:$0xf]
  %v84 = vld [vmem:[%s1 + $0xa8] sm:$0xf]
  %v85 = vld [vmem:[%s1 + $0xac] sm:$0xf]
  %v86 = vld [vmem:[%s1 + $0xb0] sm:$0xf]
  %v87 = vld [vmem:[%s1 + $0xb4] sm:$0xf]
  %v88 = vld [vmem:[%s1 + $0xb8] sm:$0xf]
  %v89 = vld [vmem:[%s1 + $0xbc] sm:$0xf]
  %v90 = vld [vmem:[%s1 + $0xc0] sm:$0xf]
  %v91 = vld [vmem:[%s1 + $0xc4] sm:$0xf]
  %v92 = vld [vmem:[%s1 + $0xc8] sm:$0xf]
  %v93 = vld [vmem:[%s1 + $0xcc] sm:$0xf]
  %v94 = vld [vmem:[%s1 + $0xd0] sm:$0xf]
  %v95 = vld [vmem:[%s1 + $0xd4] sm:$0xf]
  %v96 = vld [vmem:[%s1 + $0xd8] sm:$0xf]
  %v97 = vld [vmem:[%s1 + $0xdc] sm:$0xf]
  %v98 = vld [vmem:[%s1 + $0xe0] sm:$0xf]
  %v99 = vld [vmem:[%s1 + $0xe4] sm:$0xf]
  %v100 = vld [vmem:[%s1 + $0xe8] sm:$0xf]
  %v101 = vld [vmem:[%s1 + $0xec] sm:$0xf]
  %v102 = vld [vmem:[%s1 + $0xf0] sm:$0xf]
  %v103 = vld [vmem:[%s1 + $0xf4] sm:$0xf]
  %v104 = vld [vmem:[%s1 + $0xf8] sm:$0xf]
  %v105 = vld [vmem:[%s1 + $0xfc] sm:$0xf]
  %v134 = vunpack.c.l.b16 %v14
  %v135 = vunpack.c.h.b16 %v14
  %v136 = vunpack.c.l.b16 %v15
  %v137 = vunpack.c.h.b16 %v15
  %v138 = vunpack.c.l.b16 %v16
  %v139 = vunpack.c.h.b16 %v16
  %v140 = vunpack.c.l.b16 %v17
  %v141 = vunpack.c.h.b16 %v17
  %v142 = vunpack.c.l.b16 %v18
  %v143 = vunpack.c.h.b16 %v18
  %v144 = vunpack.c.l.b16 %v19
  %v145 = vunpack.c.h.b16 %v19
  %v146 = vunpack.c.l.b16 %v20
  %v147 = vunpack.c.h.b16 %v20
  %v148 = vunpack.c.l.b16 %v21
  %v149 = vunpack.c.h.b16 %v21
  %v150 = vunpack.c.l.b16 %v22
  %v151 = vunpack.c.h.b16 %v22
  %v152 = vunpack.c.l.b16 %v23
  %v153 = vunpack.c.h.b16 %v23
  %v154 = vunpack.c.l.b16 %v24
  %v155 = vunpack.c.h.b16 %v24
  %v156 = vunpack.c.l.b16 %v25
  %v157 = vunpack.c.h.b16 %v25
  %v158 = vunpack.c.l.b16 %v26
  %v159 = vunpack.c.h.b16 %v26
  %v160 = vunpack.c.l.b16 %v27
  %v161 = vunpack.c.h.b16 %v27
  %v162 = vunpack.c.l.b16 %v28
  %v163 = vunpack.c.h.b16 %v28
  %v164 = vunpack.c.l.b16 %v29
  %v165 = vunpack.c.h.b16 %v29
  %v166 = vunpack.c.l.b16 %v30
  %v167 = vunpack.c.h.b16 %v30
  %v168 = vunpack.c.l.b16 %v31
  %v169 = vunpack.c.h.b16 %v31
  %v170 = vunpack.c.l.b16 %v32
  %v171 = vunpack.c.h.b16 %v32
  %v172 = vunpack.c.l.b16 %v33
  %v173 = vunpack.c.h.b16 %v33
  %v174 = vunpack.c.l.b16 %v34
  %v175 = vunpack.c.h.b16 %v34
  %v176 = vunpack.c.l.b16 %v35
  %v177 = vunpack.c.h.b16 %v35
  %v178 = vunpack.c.l.b16 %v36
  %v179 = vunpack.c.h.b16 %v36
  %v180 = vunpack.c.l.b16 %v37
  %v181 = vunpack.c.h.b16 %v37
  %v182 = vunpack.c.l.b16 %v38
  %v183 = vunpack.c.h.b16 %v38
  %v184 = vunpack.c.l.b16 %v39
  %v185 = vunpack.c.h.b16 %v39
  %v186 = vunpack.c.l.b16 %v40
  %v187 = vunpack.c.h.b16 %v40
  %v188 = vunpack.c.l.b16 %v41
  %v189 = vunpack.c.h.b16 %v41
  %v190 = vpack.c.b16 %v138, %v134
  %v191 = vpack.c.b16 %v139, %v135
  %v192 = vpack.c.b16 %v140, %v136
  %v193 = vpack.c.b16 %v141, %v137
  %v194 = vpack.c.b16 %v146, %v142
  %v195 = vpack.c.b16 %v147, %v143
  %v196 = vpack.c.b16 %v148, %v144
  %v197 = vpack.c.b16 %v149, %v145
  %v198 = vpack.c.b16 %v154, %v150
  %v199 = vpack.c.b16 %v155, %v151
  %v200 = vpack.c.b16 %v156, %v152
  %v201 = vpack.c.b16 %v157, %v153
  %v202 = vpack.c.b16 %v162, %v158
  %v203 = vpack.c.b16 %v163, %v159
  %v204 = vpack.c.b16 %v164, %v160
  %v205 = vpack.c.b16 %v165, %v161
  %v206 = vpack.c.b16 %v170, %v166
  %v207 = vpack.c.b16 %v171, %v167
  %v208 = vpack.c.b16 %v172, %v168
  %v209 = vpack.c.b16 %v173, %v169
  %v210 = vpack.c.b16 %v178, %v174
  %v211 = vpack.c.b16 %v179, %v175
  %v212 = vpack.c.b16 %v180, %v176
  %v213 = vpack.c.b16 %v181, %v177
  %v214 = vpack.c.b16 %v186, %v182
  %v215 = vpack.c.b16 %v187, %v183
  %v216 = vpack.c.b16 %v188, %v184
  %v217 = vpack.c.b16 %v189, %v185
  %v310 = vunpack.c.l.b16 %v42
  %v311 = vunpack.c.l.b16 %v43
  %v312 = vunpack.c.l.b16 %v44
  %v313 = vunpack.c.l.b16 %v45
  %v314 = vunpack.c.l.b16 %v46
  %v315 = vunpack.c.l.b16 %v47
  %v316 = vunpack.c.l.b16 %v48
  %v317 = vunpack.c.l.b16 %v49
  %v318 = vunpack.c.l.b16 %v50
  %v319 = vunpack.c.l.b16 %v51
  %v320 = vunpack.c.l.b16 %v52
  %v321 = vunpack.c.l.b16 %v53
  %v322 = vunpack.c.l.b16 %v54
  %v323 = vunpack.c.l.b16 %v55
  %v324 = vunpack.c.l.b16 %v56
  %v325 = vunpack.c.l.b16 %v57
  %v326 = vunpack.c.l.b16 %v58
  %v327 = vunpack.c.l.b16 %v59
  %v328 = vunpack.c.l.b16 %v60
  %v329 = vunpack.c.l.b16 %v61
  %v330 = vunpack.c.l.b16 %v62
  %v331 = vunpack.c.l.b16 %v63
  %v332 = vunpack.c.l.b16 %v64
  %v333 = vunpack.c.l.b16 %v65
  %v334 = vunpack.c.l.b16 %v66
  %v335 = vunpack.c.l.b16 %v67
  %v336 = vunpack.c.l.b16 %v68
  %v337 = vunpack.c.l.b16 %v69
  %v338 = vunpack.c.l.b16 %v70
  %v339 = vunpack.c.l.b16 %v71
  %v340 = vunpack.c.l.b16 %v72
  %v341 = vunpack.c.l.b16 %v73
  %v342 = vunpack.c.l.b16 %v74
  %v343 = vunpack.c.l.b16 %v75
  %v344 = vunpack.c.l.b16 %v76
  %v345 = vunpack.c.l.b16 %v77
  %v346 = vunpack.c.l.b16 %v78
  %v347 = vunpack.c.l.b16 %v79
  %v348 = vunpack.c.l.b16 %v80
  %v349 = vunpack.c.l.b16 %v81
  %v350 = vunpack.c.l.b16 %v82
  %v351 = vunpack.c.l.b16 %v83
  %v352 = vunpack.c.l.b16 %v84
  %v353 = vunpack.c.l.b16 %v85
  %v354 = vunpack.c.l.b16 %v86
  %v355 = vunpack.c.l.b16 %v87
  %v356 = vunpack.c.l.b16 %v88
  %v357 = vunpack.c.l.b16 %v89
  %v358 = vunpack.c.l.b16 %v90
  %v359 = vunpack.c.l.b16 %v91
  %v360 = vunpack.c.l.b16 %v92
  %v361 = vunpack.c.l.b16 %v93
  %v362 = vunpack.c.l.b16 %v94
  %v363 = vunpack.c.l.b16 %v95
  %v364 = vunpack.c.l.b16 %v96
  %v365 = vunpack.c.l.b16 %v97
  %v366 = vunpack.c.l.b16 %v98
  %v367 = vunpack.c.l.b16 %v99
  %v368 = vunpack.c.l.b16 %v100
  %v369 = vunpack.c.l.b16 %v101
  %v370 = vunpack.c.l.b16 %v102
  %v371 = vunpack.c.l.b16 %v103
  %v372 = vunpack.c.l.b16 %v104
  %v373 = vunpack.c.l.b16 %v105
  %v374 = vpack.c.b16 %v311, %v310
  %v375 = vpack.c.b16 %v313, %v312
  %v376 = vpack.c.b16 %v315, %v314
  %v377 = vpack.c.b16 %v317, %v316
  %v378 = vpack.c.b16 %v319, %v318
  %v379 = vpack.c.b16 %v321, %v320
  %v380 = vpack.c.b16 %v323, %v322
  %v381 = vpack.c.b16 %v325, %v324
  %v382 = vpack.c.b16 %v327, %v326
  %v383 = vpack.c.b16 %v329, %v328
  %v384 = vpack.c.b16 %v331, %v330
  %v385 = vpack.c.b16 %v333, %v332
  %v386 = vpack.c.b16 %v335, %v334
  %v387 = vpack.c.b16 %v337, %v336
  %v388 = vpack.c.b16 %v339, %v338
  %v389 = vpack.c.b16 %v341, %v340
  %v390 = vpack.c.b16 %v343, %v342
  %v391 = vpack.c.b16 %v345, %v344
  %v392 = vpack.c.b16 %v347, %v346
  %v393 = vpack.c.b16 %v349, %v348
  %v394 = vpack.c.b16 %v351, %v350
  %v395 = vpack.c.b16 %v353, %v352
  %v396 = vpack.c.b16 %v355, %v354
  %v397 = vpack.c.b16 %v357, %v356
  %v398 = vpack.c.b16 %v359, %v358
  %v399 = vpack.c.b16 %v361, %v360
  %v400 = vpack.c.b16 %v363, %v362
  %v401 = vpack.c.b16 %v365, %v364
  %v402 = vpack.c.b16 %v367, %v366
  %v403 = vpack.c.b16 %v369, %v368
  %v404 = vpack.c.b16 %v371, %v370
  %v405 = vpack.c.b16 %v373, %v372
  %438 = vmatpush.bf16.msra.mxu0 %v381
  %439 = vmatpush.bf16.msra.mxu0 %v380
  %440 = vmatpush.bf16.msra.mxu0 %v379
  %441 = vmatpush.bf16.msra.mxu0 %v378
  %442 = vmatpush.bf16.msra.mxu0 %v377
  %443 = vmatpush.bf16.msra.mxu0 %v376
  %444 = vmatpush.bf16.msra.mxu0 %v375
  %445 = vmatpush.bf16.msra.mxu0 %v374
  %446 = vmatmul.bf16.gmra.mxu0 %v190
  %v447 = vpop.f32.mrf.mxu0
  %v448 = vadd.f32 0.0, %v447
  %v449 = vpop.f32.mrf.mxu0
  %v450 = vadd.f32 0.0, %v449
  %451 = vmatmul.bf16.gmra.mxu0 %v194
  %v452 = vpop.f32.mrf.mxu0
  %v453 = vadd.f32 0.0, %v452
  %v454 = vpop.f32.mrf.mxu0
  %v455 = vadd.f32 0.0, %v454
  %456 = vmatmul.bf16.gmra.mxu0 %v198
  %v457 = vpop.f32.mrf.mxu0
  %v458 = vadd.f32 0.0, %v457
  %v459 = vpop.f32.mrf.mxu0
  %v460 = vadd.f32 0.0, %v459
  %461 = vmatmul.bf16.gmra.mxu0 %v202
  %v462 = vpop.f32.mrf.mxu0
  %v463 = vadd.f32 0.0, %v462
  %v464 = vpop.f32.mrf.mxu0
  %v465 = vadd.f32 0.0, %v464
  %466 = vmatmul.bf16.gmra.mxu0 %v206
  %v467 = vpop.f32.mrf.mxu0
  %v468 = vadd.f32 0.0, %v467
  %v469 = vpop.f32.mrf.mxu0
  %v470 = vadd.f32 0.0, %v469
  %471 = vmatmul.bf16.gmra.mxu0 %v210
  %v472 = vpop.f32.mrf.mxu0
  %v473 = vadd.f32 0.0, %v472
  %v474 = vpop.f32.mrf.mxu0
  %v475 = vadd.f32 0.0, %v474
  %476 = vmatmul.bf16.gmra.mxu0 %v214
  %v477 = vpop.f32.mrf.mxu0
  %v478 = vadd.f32 0.0, %v477
  %v479 = vpop.f32.mrf.mxu0
  %v480 = vadd.f32 0.0, %v479
  %481 = vdwg.mxu0
  %482 = vmatpush.bf16.msra.mxu0 %v389
  %483 = vmatpush.bf16.msra.mxu0 %v388
  %484 = vmatpush.bf16.msra.mxu0 %v387
  %485 = vmatpush.bf16.msra.mxu0 %v386
  %486 = vmatpush.bf16.msra.mxu0 %v385
  %487 = vmatpush.bf16.msra.mxu0 %v384
  %488 = vmatpush.bf16.msra.mxu0 %v383
  %489 = vmatpush.bf16.msra.mxu0 %v382
  %490 = vmatmul.bf16.gmra.mxu0 %v191
  %v491 = vpop.f32.mrf.mxu0
  %v492 = vadd.f32 %v448, %v491
  %v493 = vpop.f32.mrf.mxu0
  %v494 = vadd.f32 %v450, %v493
  %495 = vmatmul.bf16.gmra.mxu0 %v195
  %v496 = vpop.f32.mrf.mxu0
  %v497 = vadd.f32 %v453, %v496
  %v498 = vpop.f32.mrf.mxu0
  %v499 = vadd.f32 %v455, %v498
  %500 = vmatmul.bf16.gmra.mxu0 %v199
  %v501 = vpop.f32.mrf.mxu0
  %v502 = vadd.f32 %v458, %v501
  %v503 = vpop.f32.mrf.mxu0
  %v504 = vadd.f32 %v460, %v503
  %505 = vmatmul.bf16.gmra.mxu0 %v203
  %v506 = vpop.f32.mrf.mxu0
  %v507 = vadd.f32 %v463, %v506
  %v508 = vpop.f32.mrf.mxu0
  %v509 = vadd.f32 %v465, %v508
  %510 = vmatmul.bf16.gmra.mxu0 %v207
  %v511 = vpop.f32.mrf.mxu0
  %v512 = vadd.f32 %v468, %v511
  %v513 = vpop.f32.mrf.mxu0
  %v514 = vadd.f32 %v470, %v513
  %515 = vmatmul.bf16.gmra.mxu0 %v211
  %v516 = vpop.f32.mrf.mxu0
  %v517 = vadd.f32 %v473, %v516
  %v518 = vpop.f32.mrf.mxu0
  %v519 = vadd.f32 %v475, %v518
  %520 = vmatmul.bf16.gmra.mxu0 %v215
  %v521 = vpop.f32.mrf.mxu0
  %v522 = vadd.f32 %v478, %v521
  %v523 = vpop.f32.mrf.mxu0
  %v524 = vadd.f32 %v480, %v523
  %525 = vdwg.mxu0
  %526 = vmatpush.bf16.msra.mxu0 %v397
  %527 = vmatpush.bf16.msra.mxu0 %v396
  %528 = vmatpush.bf16.msra.mxu0 %v395
  %529 = vmatpush.bf16.msra.mxu0 %v394
  %530 = vmatpush.bf16.msra.mxu0 %v393
  %531 = vmatpush.bf16.msra.mxu0 %v392
  %532 = vmatpush.bf16.msra.mxu0 %v391
  %533 = vmatpush.bf16.msra.mxu0 %v390
  %534 = vmatmul.bf16.gmra.mxu0 %v192
  %v535 = vpop.f32.mrf.mxu0
  %v536 = vadd.f32 %v492, %v535
  %v537 = vpop.f32.mrf.mxu0
  %v538 = vadd.f32 %v494, %v537
  %539 = vmatmul.bf16.gmra.mxu0 %v196
  %v540 = vpop.f32.mrf.mxu0
  %v541 = vadd.f32 %v497, %v540
  %v542 = vpop.f32.mrf.mxu0
  %v543 = vadd.f32 %v499, %v542
  %544 = vmatmul.bf16.gmra.mxu0 %v200
  %v545 = vpop.f32.mrf.mxu0
  %v546 = vadd.f32 %v502, %v545
  %v547 = vpop.f32.mrf.mxu0
  %v548 = vadd.f32 %v504, %v547
  %549 = vmatmul.bf16.gmra.mxu0 %v204
  %v550 = vpop.f32.mrf.mxu0
  %v551 = vadd.f32 %v507, %v550
  %v552 = vpop.f32.mrf.mxu0
  %v553 = vadd.f32 %v509, %v552
  %554 = vmatmul.bf16.gmra.mxu0 %v208
  %v555 = vpop.f32.mrf.mxu0
  %v556 = vadd.f32 %v512, %v555
  %v557 = vpop.f32.mrf.mxu0
  %v558 = vadd.f32 %v514, %v557
  %559 = vmatmul.bf16.gmra.mxu0 %v212
  %v560 = vpop.f32.mrf.mxu0
  %v561 = vadd.f32 %v517, %v560
  %v562 = vpop.f32.mrf.mxu0
  %v563 = vadd.f32 %v519, %v562
  %564 = vmatmul.bf16.gmra.mxu0 %v216
  %v565 = vpop.f32.mrf.mxu0
  %v566 = vadd.f32 %v522, %v565
  %v567 = vpop.f32.mrf.mxu0
  %v568 = vadd.f32 %v524, %v567
  %569 = vdwg.mxu0
  %570 = vmatpush.bf16.msra.mxu0 %v405
  %571 = vmatpush.bf16.msra.mxu0 %v404
  %572 = vmatpush.bf16.msra.mxu0 %v403
  %573 = vmatpush.bf16.msra.mxu0 %v402
  %574 = vmatpush.bf16.msra.mxu0 %v401
  %575 = vmatpush.bf16.msra.mxu0 %v400
  %576 = vmatpush.bf16.msra.mxu0 %v399
  %577 = vmatpush.bf16.msra.mxu0 %v398
  %578 = vmatmul.bf16.gmra.mxu0 %v193
  %v579 = vpop.f32.mrf.mxu0
  %v580 = vadd.f32 %v536, %v579
  %v581 = vpop.f32.mrf.mxu0
  %v582 = vadd.f32 %v538, %v581
  %583 = vmatmul.bf16.gmra.mxu0 %v197
  %v584 = vpop.f32.mrf.mxu0
  %v585 = vadd.f32 %v541, %v584
  %v586 = vpop.f32.mrf.mxu0
  %v587 = vadd.f32 %v543, %v586
  %588 = vmatmul.bf16.gmra.mxu0 %v201
  %v589 = vpop.f32.mrf.mxu0
  %v590 = vadd.f32 %v546, %v589
  %v591 = vpop.f32.mrf.mxu0
  %v592 = vadd.f32 %v548, %v591
  %593 = vmatmul.bf16.gmra.mxu0 %v205
  %v594 = vpop.f32.mrf.mxu0
  %v595 = vadd.f32 %v551, %v594
  %v596 = vpop.f32.mrf.mxu0
  %v597 = vadd.f32 %v553, %v596
  %598 = vmatmul.bf16.gmra.mxu0 %v209
  %v599 = vpop.f32.mrf.mxu0
  %v600 = vadd.f32 %v556, %v599
  %v601 = vpop.f32.mrf.mxu0
  %v602 = vadd.f32 %v558, %v601
  %603 = vmatmul.bf16.gmra.mxu0 %v213
  %v604 = vpop.f32.mrf.mxu0
  %v605 = vadd.f32 %v561, %v604
  %v606 = vpop.f32.mrf.mxu0
  %v607 = vadd.f32 %v563, %v606
  %608 = vmatmul.bf16.gmra.mxu0 %v217
  %v609 = vpop.f32.mrf.mxu0
  %v610 = vadd.f32 %v566, %v609
  %v611 = vpop.f32.mrf.mxu0
  %v612 = vadd.f32 %v568, %v611
  %613 = vdwg.mxu0
  %v614 = vadd.f32 %v580, %v582
  %v615 = vadd.f32 %v614, %v585
  %v616 = vadd.f32 %v615, %v587
  %v617 = vadd.f32 %v616, %v590
  %v618 = vadd.f32 %v617, %v592
  %v619 = vadd.f32 %v618, %v595
  %v620 = vadd.f32 %v619, %v597
  %v621 = vadd.f32 %v620, %v600
  %v622 = vadd.f32 %v621, %v602
  %v623 = vadd.f32 %v622, %v605
  %v624 = vadd.f32 %v623, %v607
  %v625 = vadd.f32 %v624, %v610
  %v626 = vadd.f32 %v625, %v612
  %v627 = vrot.slane %v626, 4
  %v628 = vadd.f32 %v626, %v627
  %v629 = vrot.slane %v628, 2
  %v630 = vadd.f32 %v628, %v629
  %v631 = vrot.slane %v630, 1
  %v632 = vadd.f32 %v630, %v631
  %v633 = vmul.f32 %v632, 0.010204081
  %v634 = vmul.f32 %v580, %v580
  %v635 = vmul.f32 %v582, %v582
  %v636 = vmul.f32 %v585, %v585
  %v637 = vmul.f32 %v587, %v587
  %v638 = vmul.f32 %v590, %v590
  %v639 = vmul.f32 %v592, %v592
  %v640 = vmul.f32 %v595, %v595
  %v641 = vmul.f32 %v597, %v597
  %v642 = vmul.f32 %v600, %v600
  %v643 = vmul.f32 %v602, %v602
  %v644 = vmul.f32 %v605, %v605
  %v645 = vmul.f32 %v607, %v607
  %v646 = vmul.f32 %v610, %v610
  %v647 = vmul.f32 %v612, %v612
  %v648 = vadd.f32 %v634, %v635
  %v649 = vadd.f32 %v648, %v636
  %v650 = vadd.f32 %v649, %v637
  %v651 = vadd.f32 %v650, %v638
  %v652 = vadd.f32 %v651, %v639
  %v653 = vadd.f32 %v652, %v640
  %v654 = vadd.f32 %v653, %v641
  %v655 = vadd.f32 %v654, %v642
  %v656 = vadd.f32 %v655, %v643
  %v657 = vadd.f32 %v656, %v644
  %v658 = vadd.f32 %v657, %v645
  %v659 = vadd.f32 %v658, %v646
  %v660 = vadd.f32 %v659, %v647
  %v661 = vrot.slane %v660, 4
  %v662 = vadd.f32 %v660, %v661
  %v663 = vrot.slane %v662, 2
  %v664 = vadd.f32 %v662, %v663
  %v665 = vrot.slane %v664, 1
  %v666 = vadd.f32 %v664, %v665
  %v667 = vmul.f32 %v666, 0.010204081
  %v668 = vmul.f32 %v633, %v633
  %v669 = vsub.f32 %v667, %v668
  %v670 = vld [vmem:[%s2] sm:$0x1]
  %v671 = vadd.f32 %v669, 1e-05
  %v672 = vrsqrt.pop %v671
  %v673 = vmul.f32 %v672, %v671
  %v674 = vmul.f32 %v673, %v672
  %v675 = vmul.f32 0.5, %v674
  %v676 = vsub.f32 1.5, %v675
  %v677 = vmul.f32 %v672, %v676
  %vm678 = vweird.f32 %v671
  %vm679 = vweird.f32 %v672
  %vm680 = vmor %vm678, %vm679
  %v681 = vsel %vm680, %v672, %v677
  %v682 = vmul.f32 %v670, %v681
  %v683 = vld [vmem:[%s2 + $0x1] sm:$0x1]
  %v684 = vmul.f32 %v633, %v682
  %v685 = vsub.f32 %v683, %v684
  %v686 = vperm.slane %v682, 0
  %v687 = vmul.f32 %v580, %v686
  %v688 = vmul.f32 %v582, %v686
  %v689 = vmul.f32 %v585, %v686
  %v690 = vmul.f32 %v587, %v686
  %v691 = vmul.f32 %v590, %v686
  %v692 = vmul.f32 %v592, %v686
  %v693 = vmul.f32 %v595, %v686
  %v694 = vmul.f32 %v597, %v686
  %v695 = vmul.f32 %v600, %v686
  %v696 = vmul.f32 %v602, %v686
  %v697 = vmul.f32 %v605, %v686
  %v698 = vmul.f32 %v607, %v686
  %v699 = vmul.f32 %v610, %v686
  %v700 = vmul.f32 %v612, %v686
  %v701 = vperm.slane %v685, 0
  %v702 = vadd.f32 %v687, %v701
  %v703 = vadd.f32 %v688, %v701
  %v704 = vadd.f32 %v689, %v701
  %v705 = vadd.f32 %v690, %v701
  %v706 = vadd.f32 %v691, %v701
  %v707 = vadd.f32 %v692, %v701
  %v708 = vadd.f32 %v693, %v701
  %v709 = vadd.f32 %v694, %v701
  %v710 = vadd.f32 %v695, %v701
  %v711 = vadd.f32 %v696, %v701
  %v712 = vadd.f32 %v697, %v701
  %v713 = vadd.f32 %v698, %v701
  %v714 = vadd.f32 %v699, %v701
  %v715 = vadd.f32 %v700, %v701
  %vm716 = vcmp.gt.f32.partialorder %v702, 0.0
  %vm717 = vcmp.gt.f32.partialorder %v703, 0.0
  %vm718 = vcmp.gt.f32.partialorder %v704, 0.0
  %vm719 = vcmp.gt.f32.partialorder %v705, 0.0
  %vm720 = vcmp.gt.f32.partialorder %v706, 0.0
  %vm721 = vcmp.gt.f32.partialorder %v707, 0.0
  %vm722 = vcmp.gt.f32.partialorder %v708, 0.0
  %vm723 = vcmp.gt.f32.partialorder %v709, 0.0
  %vm724 = vcmp.gt.f32.partialorder %v710, 0.0
  %vm725 = vcmp.gt.f32.partialorder %v711, 0.0
  %vm726 = vcmp.gt.f32.partialorder %v712, 0.0
  %vm727 = vcmp.gt.f32.partialorder %v713, 0.0
  %vm728 = vcmp.gt.f32.partialorder %v714, 0.0
  %vm729 = vcmp.gt.f32.partialorder %v715, 0.0
  %v730 = vmul.f32 %v702, 0.2
  %v731 = vmul.f32 %v703, 0.2
  %v732 = vmul.f32 %v704, 0.2
  %v733 = vmul.f32 %v705, 0.2
  %v734 = vmul.f32 %v706, 0.2
  %v735 = vmul.f32 %v707, 0.2
  %v736 = vmul.f32 %v708, 0.2
  %v737 = vmul.f32 %v709, 0.2
  %v738 = vmul.f32 %v710, 0.2
  %v739 = vmul.f32 %v711, 0.2
  %v740 = vmul.f32 %v712, 0.2
  %v741 = vmul.f32 %v713, 0.2
  %v742 = vmul.f32 %v714, 0.2
  %v743 = vmul.f32 %v715, 0.2
  %v744 = vsel %vm716, %v702, %v730
  %v745 = vsel %vm717, %v703, %v731
  %v746 = vsel %vm718, %v704, %v732
  %v747 = vsel %vm719, %v705, %v733
  %v748 = vsel %vm720, %v706, %v734
  %v749 = vsel %vm721, %v707, %v735
  %v750 = vsel %vm722, %v708, %v736
  %v751 = vsel %vm723, %v709, %v737
  %v752 = vsel %vm724, %v710, %v738
  %v753 = vsel %vm725, %v711, %v739
  %v754 = vsel %vm726, %v712, %v740
  %v755 = vsel %vm727, %v713, %v741
  %v756 = vsel %vm728, %v714, %v742
  %v757 = vsel %vm729, %v715, %v743
  %v758 = vpack.c.bf16 %v744, %v744
  %v759 = vpack.c.bf16 %v745, %v745
  %v760 = vpack.c.bf16 %v746, %v746
  %v761 = vpack.c.bf16 %v747, %v747
  %v762 = vpack.c.bf16 %v748, %v748
  %v763 = vpack.c.bf16 %v749, %v749
  %v764 = vpack.c.bf16 %v750, %v750
  %v765 = vpack.c.bf16 %v751, %v751
  %v766 = vpack.c.bf16 %v752, %v752
  %v767 = vpack.c.bf16 %v753, %v753
  %v768 = vpack.c.bf16 %v754, %v754
  %v769 = vpack.c.bf16 %v755, %v755
  %v770 = vpack.c.bf16 %v756, %v756
  %v771 = vpack.c.bf16 %v757, %v757
  %772 = vst [vmem:[%s3] sm:$0xf] %v758
  %773 = vst [vmem:[%s3 + $0x4] sm:$0xf] %v759
  %774 = vst [vmem:[%s3 + $0x8] sm:$0xf] %v760
  %775 = vst [vmem:[%s3 + $0xc] sm:$0xf] %v761
  %776 = vst [vmem:[%s3 + $0x10] sm:$0xf] %v762
  %777 = vst [vmem:[%s3 + $0x14] sm:$0xf] %v763
  %778 = vst [vmem:[%s3 + $0x18] sm:$0xf] %v764
  %779 = vst [vmem:[%s3 + $0x1c] sm:$0xf] %v765
  %780 = vst [vmem:[%s3 + $0x20] sm:$0xf] %v766
  %781 = vst [vmem:[%s3 + $0x24] sm:$0xf] %v767
  %782 = vst [vmem:[%s3 + $0x28] sm:$0xf] %v768
  %783 = vst [vmem:[%s3 + $0x2c] sm:$0xf] %v769
  %784 = vst [vmem:[%s3 + $0x30] sm:$0xf] %v770
  %785 = vst [vmem:[%s3 + $0x34] sm:$0xf] %v771
  // Predicated region
  $region14: #{_lambda_.8} parent=0 // pred_check
    _
  $region15: #{_lambda_.8} parent=0 // pred_check_branch
    %787 = sbr.rel (0) target = $region17
  $region16: #{_lambda_.8} parent=0 // pred_region
    _
  $region17: #{_lambda_.8} parent=0 // pred_fallthru
    _
  // Predicated region
  $region18: #{_lambda_.8} parent=0 // pred_check
    _
  $region19: #{_lambda_.8} parent=0 // pred_check_branch
    %789 = sbr.rel (0) target = $region21
  $region20: #{_lambda_.8} parent=0 // pred_region
    _
  $region21: #{_lambda_.8} parent=0 // pred_fallthru
    _

// kernel: _lambda_.9
$region0: #{_lambda_.9}
  #allocation0 [shape = 'u32[]', space=smem, size = 0x4, offset = 0x4, fixed_abs, tag = 'smem constant byte address 0x4 - core index']
  #allocation1 [shape = 'u32[72,128]{1,0:T(1,128)}', space=vmem, size = 0x9000, scoped, tag = 'internal scratch']
  %s0 = inlined_call_operand.vmem [shape: bf16[72,1024], index: 0, kind: input, shape index: {}]
  %s1 = inlined_call_operand.vmem [shape: bf16[1024,128], index: 1, kind: input, shape index: {}]
  %s2 = inlined_call_operand.vmem [shape: f32[8,128], index: 2, kind: input, shape index: {}]
  %s3 = inlined_call_operand.vmem [shape: f32[72,128], index: 3, kind: output, shape index: {}]
  %s4 = sld [smem:[#allocation0]]
  $region93: #{_lambda_.9} parent=0
    _
  %s6 = ssub.s32 1, %s4
  %s7 = scalar_select 0, %s6, %s4
  $region1: #{_lambda_.9} parent=0
    #allocation2 [shape = 'u8[49152]{0}', space=vmem, size = 0xc000, scoped, tag = 'output window, operand 0']
    loop: start=0, step=1, limit=4
    $region2: #{_lambda_.9} parent=1 // loop_pre_header
      _
    $region3: #{_lambda_.9} parent=1 // loop_header
      %s9 = sphi 0, %s13
      %p10 = scmp.ge.s32.totalorder %s9, 4
      %s19 = sphi 0, %s21
      %s22 = sphi 0, %s19
      %s23 = sphi 0, %s22
      %s39 = sphi 0, %s23
      %s43 = sphi 0, %s43
      %s45 = sphi 0, %s43
      %s46 = sphi 0, %s45
      %s60 = sphi 0, %s46
      %s64 = sphi 0, %s64
      %s66 = sphi 0, %s64
      %s67 = sphi 0, %s66
      %s81 = sphi 0, %s67
      %s87 = sphi 0, %s89
      %s90 = sphi 0, %s87
      %s91 = sphi 0, %s90
      %s107 = sphi 0, %s91
    $region4: #{_lambda_.9} parent=1 // loop_header_branch
      %12 = sbr.rel (%p10) target = $region8
    $region5: #{_lambda_.9} parent=1 // loop_body
      %s14 = ssub.s32 %s9, 1
      %s15 = ssub.s32 %s9, 2
      %s16 = sadd.s32 %s9, 1
      %s17 = ssub.s32 %s9, %s16
      %p18 = scmp.eq.s32.totalorder %s17, 0
      %s20 = sadd.s32 %s19, 1
      %s21 = scalar_select %p18, %s19, %s20
      %p24 = pneg %p18
      %p25 = scmp.eq.s32.totalorder %s9, 1
      %p26 = por %p24, %p25
      %p27 = scmp.ne.s32.totalorder %s19, %s22
      %p28 = scmp.eq.s32.totalorder %s9, 0
      %p29 = por %p27, %p28
      %p30 = scmp.ne.s32.totalorder %s19, %s22
      %p31 = scmp.eq.s32.totalorder %s14, 1
      %p32 = por %p30, %p31
      %p33 = scmp.ne.s32.totalorder %s22, %s23
      %p34 = scmp.eq.s32.totalorder %s14, 0
      %p35 = por %p33, %p34
      %p36 = scmp.ne.s32.totalorder %s22, %s23
      %p37 = scmp.eq.s32.totalorder %s15, 1
      %p38 = por %p36, %p37
      %p40 = scmp.ne.s32.totalorder %s23, %s39
      %p41 = scmp.eq.s32.totalorder %s15, 0
      %p42 = por %p40, %p41
      %s44 = sadd.s32 %s43, 1
      %p47 = scmp.eq.s32.totalorder %s9, 1
      %p48 = scmp.ne.s32.totalorder %s43, %s45
      %p49 = scmp.eq.s32.totalorder %s9, 0
      %p50 = por %p48, %p49
      %p51 = scmp.ne.s32.totalorder %s43, %s45
      %p52 = scmp.eq.s32.totalorder %s14, 1
      %p53 = por %p51, %p52
      %p54 = scmp.ne.s32.totalorder %s45, %s46
      %p55 = scmp.eq.s32.totalorder %s14, 0
      %p56 = por %p54, %p55
      %p57 = scmp.ne.s32.totalorder %s45, %s46
      %p58 = scmp.eq.s32.totalorder %s15, 1
      %p59 = por %p57, %p58
      %p61 = scmp.ne.s32.totalorder %s46, %s60
      %p62 = scmp.eq.s32.totalorder %s15, 0
      %p63 = por %p61, %p62
      %s65 = sadd.s32 %s64, 1
      %p68 = scmp.eq.s32.totalorder %s9, 1
      %p69 = scmp.ne.s32.totalorder %s64, %s66
      %p70 = scmp.eq.s32.totalorder %s9, 0
      %p71 = por %p69, %p70
      %p72 = scmp.ne.s32.totalorder %s64, %s66
      %p73 = scmp.eq.s32.totalorder %s14, 1
      %p74 = por %p72, %p73
      %p75 = scmp.ne.s32.totalorder %s66, %s67
      %p76 = scmp.eq.s32.totalorder %s14, 0
      %p77 = por %p75, %p76
      %p78 = scmp.ne.s32.totalorder %s66, %s67
      %p79 = scmp.eq.s32.totalorder %s15, 1
      %p80 = por %p78, %p79
      %p82 = scmp.ne.s32.totalorder %s67, %s81
      %p83 = scmp.eq.s32.totalorder %s15, 0
      %p84 = por %p82, %p83
      %s85 = ssub.s32 %s9, %s16
      %p86 = scmp.eq.s32.totalorder %s85, 0
      %s88 = sadd.s32 %s87, 1
      %s89 = scalar_select %p86, %s87, %s88
      %p92 = pneg %p86
      %p93 = scmp.eq.s32.totalorder %s9, 1
      %p94 = por %p92, %p93
      %p95 = scmp.ne.s32.totalorder %s87, %s90
      %p96 = scmp.eq.s32.totalorder %s9, 0
      %p97 = por %p95, %p96
      %p98 = scmp.ne.s32.totalorder %s87, %s90
      %p99 = scmp.eq.s32.totalorder %s14, 1
      %p100 = por %p98, %p99
      %p101 = scmp.ne.s32.totalorder %s90, %s91
      %p102 = scmp.eq.s32.totalorder %s14, 0
      %p103 = por %p101, %p102
      %p104 = scmp.ne.s32.totalorder %s90, %s91
      %p105 = scmp.eq.s32.totalorder %s15, 1
      %p106 = por %p104, %p105
      %p108 = scmp.ne.s32.totalorder %s91, %s107
      %p109 = scmp.eq.s32.totalorder %s15, 0
      %p110 = por %p108, %p109
      %p111 = scmp.le.s32.totalorder 1, %s9
      %p112 = scmp.lt.s32.totalorder %s9, 3
      %p113 = pnand %p111, %p112
      %p114 = pneg %p113
      // Predicated region
      $region9: #{_lambda_.9} parent=5 // pred_check
        _
      $region10: #{_lambda_.9} parent=5 // pred_check_branch
        %116 = sbr.rel (%p113) target = $region12
      $region11: #{_lambda_.9} parent=5 // pred_region
        %s117 = ssub.s32 %s9, 1
        // Predicated region
        $region13: #{_lambda_.9} parent=11 // pred_check
          %p118 = pneg %p56
        $region14: #{_lambda_.9} parent=11 // pred_check_branch
          %120 = sbr.rel (%p118) target = $region16
        $region15: #{_lambda_.9} parent=11 // pred_region
          _
        $region16: #{_lambda_.9} parent=11 // pred_fallthru
          _
        // Predicated region
        $region17: #{_lambda_.9} parent=11 // pred_check
          %p121 = pneg %p77
        $region18: #{_lambda_.9} parent=11 // pred_check_branch
          %123 = sbr.rel (%p121) target = $region20
        $region19: #{_lambda_.9} parent=11 // pred_region
          _
        $region20: #{_lambda_.9} parent=11 // pred_fallthru
          _
      $region12: #{_lambda_.9} parent=5 // pred_fallthru
        _
      %p124 = scmp.lt.s32.totalorder %s9, 2
      // Predicated region
      $region21: #{_lambda_.9} parent=5 // pred_check
        %p125 = pneg %p124
      $region22: #{_lambda_.9} parent=5 // pred_check_branch
        %127 = sbr.rel (%p125) target = $region24
      $region23: #{_lambda_.9} parent=5 // pred_region
        // Predicated region
        $region25: #{_lambda_.9} parent=23 // pred_check
          %p128 = pneg %p29
        $region26: #{_lambda_.9} parent=23 // pred_check_branch
          %130 = sbr.rel (%p128) target = $region28
        $region27: #{_lambda_.9} parent=23 // pred_region
          %s131 = smul.u32 6, %s9
          %s132 = ssub.s32 9, %s131
          %p133 = scmp.lt.s32.totalorder %s132, 6
          %s134 = scalar_select %p133, %s132, 6
          %s135 = smul.u32 4, %s134
          %s136 = smul.u32 %s135, 8
          %p137 = scmp.lt.s32.totalorder %s131, 8
          %s138 = scalar_select %p137, %s131, 8
          %s139 = smul.addr %s138, 8
          %s140 = smul.addr %s139, 4
          %s141 = scalar_lea.vmem %s0, %s140
          %s142 = smul.u32 6, %s9
          %s143 = ssub.s32 9, %s142
          %p144 = scmp.lt.s32.totalorder %s143, 6
          %s145 = scalar_select %p144, %s143, 6
          %s146 = smul.u32 4, %s145
          %s147 = smul.u32 %s146, 8
        $region28: #{_lambda_.9} parent=23 // pred_fallthru
          _
      $region24: #{_lambda_.9} parent=5 // pred_fallthru
        _
      %p148 = scmp.le.s32.totalorder 1, %s9
      %p149 = scmp.lt.s32.totalorder %s9, 3
      %p150 = pnand %p148, %p149
      %p151 = pneg %p150
      // Predicated region
      $region29: #{_lambda_.9} parent=5 // pred_check
        _
      $region30: #{_lambda_.9} parent=5 // pred_check_branch
        %153 = sbr.rel (%p150) target = $region32
      $region31: #{_lambda_.9} parent=5 // pred_region
        %s154 = ssub.s32 %s9, 1
        %s155 = smul.u32 6, %s14
        %s156 = ssub.s32 9, %s155
        %p157 = scmp.lt.s32.totalorder %s156, 6
        %s158 = scalar_select %p157, %s156, 6
        %s159 = smul.u32 4, %s158
        %s160 = smul.u32 %s159, 8
        %p161 = scmp.lt.s32.totalorder %s155, 8
        %s162 = scalar_select %p161, %s155, 8
        %s163 = smul.addr %s162, 8
        %s164 = smul.addr %s163, 4
        %s165 = scalar_lea.vmem %s0, %s164
        %p166 = pneg %p35
        %p167 = pneg %p32
        %p168 = pneg %p56
        %p169 = pneg %p53
        %p170 = pneg %p77
        %p171 = pneg %p74
        %p172 = pneg %p103
        %p173 = pneg %p100
        %s174 = sand.u32 %s90, 1
        %s175 = sand.u32 %s90, 1
        %s176 = smul.addr %s175, 48
        %s177 = scalar_lea.vmem [#allocation2], %s176
        %s178 = smul.u32 6, %s14
        %s179 = ssub.s32 9, %s178
        %p180 = scmp.lt.s32.totalorder %s179, 6
        %s181 = scalar_select %p180, %s179, 6
        %s182 = smul.u32 4, %s181
        %s183 = smul.u32 %s182, 8
        %p184 = scmp.lt.s32.totalorder %s178, 8
        %s185 = scalar_select %p184, %s178, 8
        %s186 = smul.addr %s185, 8
        %s187 = smul.addr %s186, 4
        %s188 = scalar_lea.vmem %s0, %s187
        %s189 = smul.u32 6, %s14
        %s190 = ssub.s32 9, %s189
        %p191 = scmp.lt.s32.totalorder %s190, 6
        %s192 = scalar_select %p191, %s190, 6
        %s193 = smul.u32 4, %s192
        %s194 = smul.u32 %s193, 8
        %s195 = smul.u32 6, %s14
        %s196 = ssub.s32 9, %s195
        %p197 = scmp.lt.s32.totalorder %s196, 6
        %s198 = scalar_select %p197, %s196, 6
        %s199 = smul.u32 8, %s198
        %v200 = vld [vmem:[%s188] sm:$0xff]
        %v201 = vld [vmem:[%s188 + $0x8] sm:$0xff]
        %v202 = vld [vmem:[%s188 + $0x10] sm:$0xff]
        %v203 = vld [vmem:[%s188 + $0x18] sm:$0xff]
        %v204 = vld [vmem:[%s188 + $0x20] sm:$0xff]
        %v205 = vld [vmem:[%s188 + $0x28] sm:$0xff]
        %v206 = vld [vmem:[%s188 + $0x30] sm:$0xff]
        %v207 = vld [vmem:[%s188 + $0x38] sm:$0xff]
        %v208 = vld [vmem:[%s188 + $0x40] sm:$0xff]
        %v209 = vld [vmem:[%s188 + $0x48] sm:$0xff]
        %v210 = vld [vmem:[%s188 + $0x50] sm:$0xff]
        %v211 = vld [vmem:[%s188 + $0x58] sm:$0xff]
        %v212 = vld [vmem:[%s188 + $0x60] sm:$0xff]
        %v213 = vld [vmem:[%s188 + $0x68] sm:$0xff]
        %v214 = vld [vmem:[%s188 + $0x70] sm:$0xff]
        %v215 = vld [vmem:[%s188 + $0x78] sm:$0xff]
        %v216 = vld [vmem:[%s188 + $0x80] sm:$0xff]
        %v217 = vld [vmem:[%s188 + $0x88] sm:$0xff]
        %v218 = vld [vmem:[%s188 + $0x90] sm:$0xff]
        %v219 = vld [vmem:[%s188 + $0x98] sm:$0xff]
        %v220 = vld [vmem:[%s188 + $0xa0] sm:$0xff]
        %v221 = vld [vmem:[%s188 + $0xa8] sm:$0xff]
        %v222 = vld [vmem:[%s188 + $0xb0] sm:$0xff]
        %v223 = vld [vmem:[%s188 + $0xb8] sm:$0xff]
        %v224 = vld [vmem:[%s1] sm:$0xf]
        %v225 = vld [vmem:[%s1 + $0x4] sm:$0xf]
        %v226 = vld [vmem:[%s1 + $0x8] sm:$0xf]
        %v227 = vld [vmem:[%s1 + $0xc] sm:$0xf]
        %v228 = vld [vmem:[%s1 + $0x10] sm:$0xf]
        %v229 = vld [vmem:[%s1 + $0x14] sm:$0xf]
        %v230 = vld [vmem:[%s1 + $0x18] sm:$0xf]
        %v231 = vld [vmem:[%s1 + $0x1c] sm:$0xf]
        %v232 = vld [vmem:[%s1 + $0x20] sm:$0xf]
        %v233 = vld [vmem:[%s1 + $0x24] sm:$0xf]
        %v234 = vld [vmem:[%s1 + $0x28] sm:$0xf]
        %v235 = vld [vmem:[%s1 + $0x2c] sm:$0xf]
        %v236 = vld [vmem:[%s1 + $0x30] sm:$0xf]
        %v237 = vld [vmem:[%s1 + $0x34] sm:$0xf]
        %v238 = vld [vmem:[%s1 + $0x38] sm:$0xf]
        %v239 = vld [vmem:[%s1 + $0x3c] sm:$0xf]
        %v240 = vld [vmem:[%s1 + $0x40] sm:$0xf]
        %v241 = vld [vmem:[%s1 + $0x44] sm:$0xf]
        %v242 = vld [vmem:[%s1 + $0x48] sm:$0xf]
        %v243 = vld [vmem:[%s1 + $0x4c] sm:$0xf]
        %v244 = vld [vmem:[%s1 + $0x50] sm:$0xf]
        %v245 = vld [vmem:[%s1 + $0x54] sm:$0xf]
        %v246 = vld [vmem:[%s1 + $0x58] sm:$0xf]
        %v247 = vld [vmem:[%s1 + $0x5c] sm:$0xf]
        %v248 = vld [vmem:[%s1 + $0x60] sm:$0xf]
        %v249 = vld [vmem:[%s1 + $0x64] sm:$0xf]
        %v250 = vld [vmem:[%s1 + $0x68] sm:$0xf]
        %v251 = vld [vmem:[%s1 + $0x6c] sm:$0xf]
        %v252 = vld [vmem:[%s1 + $0x70] sm:$0xf]
        %v253 = vld [vmem:[%s1 + $0x74] sm:$0xf]
        %v254 = vld [vmem:[%s1 + $0x78] sm:$0xf]
        %v255 = vld [vmem:[%s1 + $0x7c] sm:$0xf]
        %v256 = vld [vmem:[%s1 + $0x80] sm:$0xf]
        %v257 = vld [vmem:[%s1 + $0x84] sm:$0xf]
        %v258 = vld [vmem:[%s1 + $0x88] sm:$0xf]
        %v259 = vld [vmem:[%s1 + $0x8c] sm:$0xf]
        %v260 = vld [vmem:[%s1 + $0x90] sm:$0xf]
        %v261 = vld [vmem:[%s1 + $0x94] sm:$0xf]
        %v262 = vld [vmem:[%s1 + $0x98] sm:$0xf]
        %v263 = vld [vmem:[%s1 + $0x9c] sm:$0xf]
        %v264 = vld [vmem:[%s1 + $0xa0] sm:$0xf]
        %v265 = vld [vmem:[%s1 + $0xa4] sm:$0xf]
        %v266 = vld [vmem:[%s1 + $0xa8] sm:$0xf]
        %v267 = vld [vmem:[%s1 + $0xac] sm:$0xf]
        %v268 = vld [vmem:[%s1 + $0xb0] sm:$0xf]
        %v269 = vld [vmem:[%s1 + $0xb4] sm:$0xf]
        %v270 = vld [vmem:[%s1 + $0xb8] sm:$0xf]
        %v271 = vld [vmem:[%s1 + $0xbc] sm:$0xf]
        %v272 = vld [vmem:[%s1 + $0xc0] sm:$0xf]
        %v273 = vld [vmem:[%s1 + $0xc4] sm:$0xf]
        %v274 = vld [vmem:[%s1 + $0xc8] sm:$0xf]
        %v275 = vld [vmem:[%s1 + $0xcc] sm:$0xf]
        %v276 = vld [vmem:[%s1 + $0xd0] sm:$0xf]
        %v277 = vld [vmem:[%s1 + $0xd4] sm:$0xf]
        %v278 = vld [vmem:[%s1 + $0xd8] sm:$0xf]
        %v279 = vld [vmem:[%s1 + $0xdc] sm:$0xf]
        %v280 = vld [vmem:[%s1 + $0xe0] sm:$0xf]
        %v281 = vld [vmem:[%s1 + $0xe4] sm:$0xf]
        %v282 = vld [vmem:[%s1 + $0xe8] sm:$0xf]
        %v283 = vld [vmem:[%s1 + $0xec] sm:$0xf]
        %v284 = vld [vmem:[%s1 + $0xf0] sm:$0xf]
        %v285 = vld [vmem:[%s1 + $0xf4] sm:$0xf]
        %v286 = vld [vmem:[%s1 + $0xf8] sm:$0xf]
        %v287 = vld [vmem:[%s1 + $0xfc] sm:$0xf]
        %v288 = vld [vmem:[%s1 + $0x100] sm:$0xf]
        %v289 = vld [vmem:[%s1 + $0x104] sm:$0xf]
        %v290 = vld [vmem:[%s1 + $0x108] sm:$0xf]
        %v291 = vld [vmem:[%s1 + $0x10c] sm:$0xf]
        %v292 = vld [vmem:[%s1 + $0x110] sm:$0xf]
        %v293 = vld [vmem:[%s1 + $0x114] sm:$0xf]
        %v294 = vld [vmem:[%s1 + $0x118] sm:$0xf]
        %v295 = vld [vmem:[%s1 + $0x11c] sm:$0xf]
        %v296 = vld [vmem:[%s1 + $0x120] sm:$0xf]
        %v297 = vld [vmem:[%s1 + $0x124] sm:$0xf]
        %v298 = vld [vmem:[%s1 + $0x128] sm:$0xf]
        %v299 = vld [vmem:[%s1 + $0x12c] sm:$0xf]
        %v300 = vld [vmem:[%s1 + $0x130] sm:$0xf]
        %v301 = vld [vmem:[%s1 + $0x134] sm:$0xf]
        %v302 = vld [vmem:[%s1 + $0x138] sm:$0xf]
        %v303 = vld [vmem:[%s1 + $0x13c] sm:$0xf]
        %v304 = vld [vmem:[%s1 + $0x140] sm:$0xf]
        %v305 = vld [vmem:[%s1 + $0x144] sm:$0xf]
        %v306 = vld [vmem:[%s1 + $0x148] sm:$0xf]
        %v307 = vld [vmem:[%s1 + $0x14c] sm:$0xf]
        %v308 = vld [vmem:[%s1 + $0x150] sm:$0xf]
        %v309 = vld [vmem:[%s1 + $0x154] sm:$0xf]
        %v310 = vld [vmem:[%s1 + $0x158] sm:$0xf]
        %v311 = vld [vmem:[%s1 + $0x15c] sm:$0xf]
        %v312 = vld [vmem:[%s1 + $0x160] sm:$0xf]
        %v313 = vld [vmem:[%s1 + $0x164] sm:$0xf]
        %v314 = vld [vmem:[%s1 + $0x168] sm:$0xf]
        %v315 = vld [vmem:[%s1 + $0x16c] sm:$0xf]
        %v316 = vld [vmem:[%s1 + $0x170] sm:$0xf]
        %v317 = vld [vmem:[%s1 + $0x174] sm:$0xf]
        %v318 = vld [vmem:[%s1 + $0x178] sm:$0xf]
        %v319 = vld [vmem:[%s1 + $0x17c] sm:$0xf]
        %v320 = vld [vmem:[%s1 + $0x180] sm:$0xf]
        %v321 = vld [vmem:[%s1 + $0x184] sm:$0xf]
        %v322 = vld [vmem:[%s1 + $0x188] sm:$0xf]
        %v323 = vld [vmem:[%s1 + $0x18c] sm:$0xf]
        %v324 = vld [vmem:[%s1 + $0x190] sm:$0xf]
        %v325 = vld [vmem:[%s1 + $0x194] sm:$0xf]
        %v326 = vld [vmem:[%s1 + $0x198] sm:$0xf]
        %v327 = vld [vmem:[%s1 + $0x19c] sm:$0xf]
        %v328 = vld [vmem:[%s1 + $0x1a0] sm:$0xf]
        %v329 = vld [vmem:[%s1 + $0x1a4] sm:$0xf]
        %v330 = vld [vmem:[%s1 + $0x1a8] sm:$0xf]
        %v331 = vld [vmem:[%s1 + $0x1ac] sm:$0xf]
        %v332 = vld [vmem:[%s1 + $0x1b0] sm:$0xf]
        %v333 = vld [vmem:[%s1 + $0x1b4] sm:$0xf]
        %v334 = vld [vmem:[%s1 + $0x1b8] sm:$0xf]
        %v335 = vld [vmem:[%s1 + $0x1bc] sm:$0xf]
        %v336 = vld [vmem:[%s1 + $0x1c0] sm:$0xf]
        %v337 = vld [vmem:[%s1 + $0x1c4] sm:$0xf]
        %v338 = vld [vmem:[%s1 + $0x1c8] sm:$0xf]
        %v339 = vld [vmem:[%s1 + $0x1cc] sm:$0xf]
        %v340 = vld [vmem:[%s1 + $0x1d0] sm:$0xf]
        %v341 = vld [vmem:[%s1 + $0x1d4] sm:$0xf]
        %v342 = vld [vmem:[%s1 + $0x1d8] sm:$0xf]
        %v343 = vld [vmem:[%s1 + $0x1dc] sm:$0xf]
        %v344 = vld [vmem:[%s1 + $0x1e0] sm:$0xf]
        %v345 = vld [vmem:[%s1 + $0x1e4] sm:$0xf]
        %v346 = vld [vmem:[%s1 + $0x1e8] sm:$0xf]
        %v347 = vld [vmem:[%s1 + $0x1ec] sm:$0xf]
        %v348 = vld [vmem:[%s1 + $0x1f0] sm:$0xf]
        %v349 = vld [vmem:[%s1 + $0x1f4] sm:$0xf]
        %v350 = vld [vmem:[%s1 + $0x1f8] sm:$0xf]
        %v351 = vld [vmem:[%s1 + $0x1fc] sm:$0xf]
        %v352 = vld [vmem:[%s2] sm:$0x1]
        %v353 = vperm.slane %v352, 0
        %v378 = vunpack.c.l.b16 %v200
        %v379 = vunpack.c.h.b16 %v200
        %v380 = vunpack.c.l.b16 %v201
        %v381 = vunpack.c.h.b16 %v201
        %v382 = vunpack.c.l.b16 %v202
        %v383 = vunpack.c.h.b16 %v202
        %v384 = vunpack.c.l.b16 %v203
        %v385 = vunpack.c.h.b16 %v203
        %v386 = vunpack.c.l.b16 %v204
        %v387 = vunpack.c.h.b16 %v204
        %v388 = vunpack.c.l.b16 %v205
        %v389 = vunpack.c.h.b16 %v205
        %v390 = vunpack.c.l.b16 %v206
        %v391 = vunpack.c.h.b16 %v206
        %v392 = vunpack.c.l.b16 %v207
        %v393 = vunpack.c.h.b16 %v207
        %v394 = vunpack.c.l.b16 %v208
        %v395 = vunpack.c.h.b16 %v208
        %v396 = vunpack.c.l.b16 %v209
        %v397 = vunpack.c.h.b16 %v209
        %v398 = vunpack.c.l.b16 %v210
        %v399 = vunpack.c.h.b16 %v210
        %v400 = vunpack.c.l.b16 %v211
        %v401 = vunpack.c.h.b16 %v211
        %v402 = vunpack.c.l.b16 %v212
        %v403 = vunpack.c.h.b16 %v212
        %v404 = vunpack.c.l.b16 %v213
        %v405 = vunpack.c.h.b16 %v213
        %v406 = vunpack.c.l.b16 %v214
        %v407 = vunpack.c.h.b16 %v214
        %v408 = vunpack.c.l.b16 %v215
        %v409 = vunpack.c.h.b16 %v215
        %v410 = vunpack.c.l.b16 %v216
        %v411 = vunpack.c.h.b16 %v216
        %v412 = vunpack.c.l.b16 %v217
        %v413 = vunpack.c.h.b16 %v217
        %v414 = vunpack.c.l.b16 %v218
        %v415 = vunpack.c.h.b16 %v218
        %v416 = vunpack.c.l.b16 %v219
        %v417 = vunpack.c.h.b16 %v219
        %v418 = vunpack.c.l.b16 %v220
        %v419 = vunpack.c.h.b16 %v220
        %v420 = vunpack.c.l.b16 %v221
        %v421 = vunpack.c.h.b16 %v221
        %v422 = vunpack.c.l.b16 %v222
        %v423 = vunpack.c.h.b16 %v222
        %v424 = vunpack.c.l.b16 %v223
        %v425 = vunpack.c.h.b16 %v223
        %v426 = vpack.c.b16 %v386, %v378
        %v427 = vpack.c.b16 %v387, %v379
        %v428 = vpack.c.b16 %v388, %v380
        %v429 = vpack.c.b16 %v389, %v381
        %v430 = vpack.c.b16 %v390, %v382
        %v431 = vpack.c.b16 %v391, %v383
        %v432 = vpack.c.b16 %v392, %v384
        %v433 = vpack.c.b16 %v393, %v385
        %v434 = vpack.c.b16 %v402, %v394
        %v435 = vpack.c.b16 %v403, %v395
        %v436 = vpack.c.b16 %v404, %v396
        %v437 = vpack.c.b16 %v405, %v397
        %v438 = vpack.c.b16 %v406, %v398
        %v439 = vpack.c.b16 %v407, %v399
        %v440 = vpack.c.b16 %v408, %v400
        %v441 = vpack.c.b16 %v409, %v401
        %v442 = vpack.c.b16 %v418, %v410
        %v443 = vpack.c.b16 %v419, %v411
        %v444 = vpack.c.b16 %v420, %v412
        %v445 = vpack.c.b16 %v421, %v413
        %v446 = vpack.c.b16 %v422, %v414
        %v447 = vpack.c.b16 %v423, %v415
        %v448 = vpack.c.b16 %v424, %v416
        %v449 = vpack.c.b16 %v425, %v417
        %v602 = vunpack.c.l.b16 %v224
        %v603 = vunpack.c.l.b16 %v225
        %v604 = vunpack.c.l.b16 %v226
        %v605 = vunpack.c.l.b16 %v227
        %v606 = vunpack.c.l.b16 %v228
        %v607 = vunpack.c.l.b16 %v229
        %v608 = vunpack.c.l.b16 %v230
        %v609 = vunpack.c.l.b16 %v231
        %v610 = vunpack.c.l.b16 %v232
        %v611 = vunpack.c.l.b16 %v233
        %v612 = vunpack.c.l.b16 %v234
        %v613 = vunpack.c.l.b16 %v235
        %v614 = vunpack.c.l.b16 %v236
        %v615 = vunpack.c.l.b16 %v237
        %v616 = vunpack.c.l.b16 %v238
        %v617 = vunpack.c.l.b16 %v239
        %v618 = vunpack.c.l.b16 %v240
        %v619 = vunpack.c.l.b16 %v241
        %v620 = vunpack.c.l.b16 %v242
        %v621 = vunpack.c.l.b16 %v243
        %v622 = vunpack.c.l.b16 %v244
        %v623 = vunpack.c.l.b16 %v245
        %v624 = vunpack.c.l.b16 %v246
        %v625 = vunpack.c.l.b16 %v247
        %v626 = vunpack.c.l.b16 %v248
        %v627 = vunpack.c.l.b16 %v249
        %v628 = vunpack.c.l.b16 %v250
        %v629 = vunpack.c.l.b16 %v251
        %v630 = vunpack.c.l.b16 %v252
        %v631 = vunpack.c.l.b16 %v253
        %v632 = vunpack.c.l.b16 %v254
        %v633 = vunpack.c.l.b16 %v255
        %v634 = vunpack.c.l.b16 %v256
        %v635 = vunpack.c.l.b16 %v257
        %v636 = vunpack.c.l.b16 %v258
        %v637 = vunpack.c.l.b16 %v259
        %v638 = vunpack.c.l.b16 %v260
        %v639 = vunpack.c.l.b16 %v261
        %v640 = vunpack.c.l.b16 %v262
        %v641 = vunpack.c.l.b16 %v263
        %v642 = vunpack.c.l.b16 %v264
        %v643 = vunpack.c.l.b16 %v265
        %v644 = vunpack.c.l.b16 %v266
        %v645 = vunpack.c.l.b16 %v267
        %v646 = vunpack.c.l.b16 %v268
        %v647 = vunpack.c.l.b16 %v269
        %v648 = vunpack.c.l.b16 %v270
        %v649 = vunpack.c.l.b16 %v271
        %v650 = vunpack.c.l.b16 %v272
        %v651 = vunpack.c.l.b16 %v273
        %v652 = vunpack.c.l.b16 %v274
        %v653 = vunpack.c.l.b16 %v275
        %v654 = vunpack.c.l.b16 %v276
        %v655 = vunpack.c.l.b16 %v277
        %v656 = vunpack.c.l.b16 %v278
        %v657 = vunpack.c.l.b16 %v279
        %v658 = vunpack.c.l.b16 %v280
        %v659 = vunpack.c.l.b16 %v281
        %v660 = vunpack.c.l.b16 %v282
        %v661 = vunpack.c.l.b16 %v283
        %v662 = vunpack.c.l.b16 %v284
        %v663 = vunpack.c.l.b16 %v285
        %v664 = vunpack.c.l.b16 %v286
        %v665 = vunpack.c.l.b16 %v287
        %v666 = vunpack.c.l.b16 %v288
        %v667 = vunpack.c.l.b16 %v289
        %v668 = vunpack.c.l.b16 %v290
        %v669 = vunpack.c.l.b16 %v291
        %v670 = vunpack.c.l.b16 %v292
        %v671 = vunpack.c.l.b16 %v293
        %v672 = vunpack.c.l.b16 %v294
        %v673 = vunpack.c.l.b16 %v295
        %v674 = vunpack.c.l.b16 %v296
        %v675 = vunpack.c.l.b16 %v297
        %v676 = vunpack.c.l.b16 %v298
        %v677 = vunpack.c.l.b16 %v299
        %v678 = vunpack.c.l.b16 %v300
        %v679 = vunpack.c.l.b16 %v301
        %v680 = vunpack.c.l.b16 %v302
        %v681 = vunpack.c.l.b16 %v303
        %v682 = vunpack.c.l.b16 %v304
        %v683 = vunpack.c.l.b16 %v305
        %v684 = vunpack.c.l.b16 %v306
        %v685 = vunpack.c.l.b16 %v307
        %v686 = vunpack.c.l.b16 %v308
        %v687 = vunpack.c.l.b16 %v309
        %v688 = vunpack.c.l.b16 %v310
        %v689 = vunpack.c.l.b16 %v311
        %v690 = vunpack.c.l.b16 %v312
        %v691 = vunpack.c.l.b16 %v313
        %v692 = vunpack.c.l.b16 %v314
        %v693 = vunpack.c.l.b16 %v315
        %v694 = vunpack.c.l.b16 %v316
        %v695 = vunpack.c.l.b16 %v317
        %v696 = vunpack.c.l.b16 %v318
        %v697 = vunpack.c.l.b16 %v319
        %v698 = vunpack.c.l.b16 %v320
        %v699 = vunpack.c.l.b16 %v321
        %v700 = vunpack.c.l.b16 %v322
        %v701 = vunpack.c.l.b16 %v323
        %v702 = vunpack.c.l.b16 %v324
        %v703 = vunpack.c.l.b16 %v325
        %v704 = vunpack.c.l.b16 %v326
        %v705 = vunpack.c.l.b16 %v327
        %v706 = vunpack.c.l.b16 %v328
        %v707 = vunpack.c.l.b16 %v329
        %v708 = vunpack.c.l.b16 %v330
        %v709 = vunpack.c.l.b16 %v331
        %v710 = vunpack.c.l.b16 %v332
        %v711 = vunpack.c.l.b16 %v333
        %v712 = vunpack.c.l.b16 %v334
        %v713 = vunpack.c.l.b16 %v335
        %v714 = vunpack.c.l.b16 %v336
        %v715 = vunpack.c.l.b16 %v337
        %v716 = vunpack.c.l.b16 %v338
        %v717 = vunpack.c.l.b16 %v339
        %v718 = vunpack.c.l.b16 %v340
        %v719 = vunpack.c.l.b16 %v341
        %v720 = vunpack.c.l.b16 %v342
        %v721 = vunpack.c.l.b16 %v343
        %v722 = vunpack.c.l.b16 %v344
        %v723 = vunpack.c.l.b16 %v345
        %v724 = vunpack.c.l.b16 %v346
        %v725 = vunpack.c.l.b16 %v347
        %v726 = vunpack.c.l.b16 %v348
        %v727 = vunpack.c.l.b16 %v349
        %v728 = vunpack.c.l.b16 %v350
        %v729 = vunpack.c.l.b16 %v351
        %v730 = vpack.c.b16 %v603, %v602
        %v731 = vpack.c.b16 %v605, %v604
        %v732 = vpack.c.b16 %v607, %v606
        %v733 = vpack.c.b16 %v609, %v608
        %v734 = vpack.c.b16 %v611, %v610
        %v735 = vpack.c.b16 %v613, %v612
        %v736 = vpack.c.b16 %v615, %v614
        %v737 = vpack.c.b16 %v617, %v616
        %v738 = vpack.c.b16 %v619, %v618
        %v739 = vpack.c.b16 %v621, %v620
        %v740 = vpack.c.b16 %v623, %v622
        %v741 = vpack.c.b16 %v625, %v624
        %v742 = vpack.c.b16 %v627, %v626
        %v743 = vpack.c.b16 %v629, %v628
        %v744 = vpack.c.b16 %v631, %v630
        %v745 = vpack.c.b16 %v633, %v632
        %v746 = vpack.c.b16 %v635, %v634
        %v747 = vpack.c.b16 %v637, %v636
        %v748 = vpack.c.b16 %v639, %v638
        %v749 = vpack.c.b16 %v641, %v640
        %v750 = vpack.c.b16 %v643, %v642
        %v751 = vpack.c.b16 %v645, %v644
        %v752 = vpack.c.b16 %v647, %v646
        %v753 = vpack.c.b16 %v649, %v648
        %v754 = vpack.c.b16 %v651, %v650
        %v755 = vpack.c.b16 %v653, %v652
        %v756 = vpack.c.b16 %v655, %v654
        %v757 = vpack.c.b16 %v657, %v656
        %v758 = vpack.c.b16 %v659, %v658
        %v759 = vpack.c.b16 %v661, %v660
        %v760 = vpack.c.b16 %v663, %v662
        %v761 = vpack.c.b16 %v665, %v664
        %v762 = vpack.c.b16 %v667, %v666
        %v763 = vpack.c.b16 %v669, %v668
        %v764 = vpack.c.b16 %v671, %v670
        %v765 = vpack.c.b16 %v673, %v672
        %v766 = vpack.c.b16 %v675, %v674
        %v767 = vpack.c.b16 %v677, %v676
        %v768 = vpack.c.b16 %v679, %v678
        %v769 = vpack.c.b16 %v681, %v680
        %v770 = vpack.c.b16 %v683, %v682
        %v771 = vpack.c.b16 %v685, %v684
        %v772 = vpack.c.b16 %v687, %v686
        %v773 = vpack.c.b16 %v689, %v688
        %v774 = vpack.c.b16 %v691, %v690
        %v775 = vpack.c.b16 %v693, %v692
        %v776 = vpack.c.b16 %v695, %v694
        %v777 = vpack.c.b16 %v697, %v696
        %v778 = vpack.c.b16 %v699, %v698
        %v779 = vpack.c.b16 %v701, %v700
        %v780 = vpack.c.b16 %v703, %v702
        %v781 = vpack.c.b16 %v705, %v704
        %v782 = vpack.c.b16 %v707, %v706
        %v783 = vpack.c.b16 %v709, %v708
        %v784 = vpack.c.b16 %v711, %v710
        %v785 = vpack.c.b16 %v713, %v712
        %v786 = vpack.c.b16 %v715, %v714
        %v787 = vpack.c.b16 %v717, %v716
        %v788 = vpack.c.b16 %v719, %v718
        %v789 = vpack.c.b16 %v721, %v720
        %v790 = vpack.c.b16 %v723, %v722
        %v791 = vpack.c.b16 %v725, %v724
        %v792 = vpack.c.b16 %v727, %v726
        %v793 = vpack.c.b16 %v729, %v728
        %858 = vmatpush.bf16.msra.mxu0 %v737
        %859 = vmatpush.bf16.msra.mxu0 %v736
        %860 = vmatpush.bf16.msra.mxu0 %v735
        %861 = vmatpush.bf16.msra.mxu0 %v734
        %862 = vmatpush.bf16.msra.mxu0 %v733
        %863 = vmatpush.bf16.msra.mxu0 %v732
        %864 = vmatpush.bf16.msra.mxu0 %v731
        %865 = vmatpush.bf16.msra.mxu0 %v730
        %866 = vmatmul.bf16.gmra.mxu0 %v426
        %v867 = vpop.f32.mrf.mxu0
        %v868 = vadd.f32 %v353, %v867
        %v869 = vpop.f32.mrf.mxu0
        %v870 = vadd.f32 %v353, %v869
        %871 = vmatmul.bf16.gmra.mxu0 %v434
        %v872 = vpop.f32.mrf.mxu0
        %v873 = vadd.f32 %v353, %v872
        %v874 = vpop.f32.mrf.mxu0
        %v875 = vadd.f32 %v353, %v874
        %876 = vmatmul.bf16.gmra.mxu0 %v442
        %v877 = vpop.f32.mrf.mxu0
        %v878 = vadd.f32 %v353, %v877
        %v879 = vpop.f32.mrf.mxu0
        %v880 = vadd.f32 %v353, %v879
        %881 = vdwg.mxu0
        %882 = vmatpush.bf16.msra.mxu0 %v745
        %883 = vmatpush.bf16.msra.mxu0 %v744
        %884 = vmatpush.bf16.msra.mxu0 %v743
        %885 = vmatpush.bf16.msra.mxu0 %v742
        %886 = vmatpush.bf16.msra.mxu0 %v741
        %887 = vmatpush.bf16.msra.mxu0 %v740
        %888 = vmatpush.bf16.msra.mxu0 %v739
        %889 = vmatpush.bf16.msra.mxu0 %v738
        %890 = vmatmul.bf16.gmra.mxu0 %v427
        %v891 = vpop.f32.mrf.mxu0
        %v892 = vadd.f32 %v868, %v891
        %v893 = vpop.f32.mrf.mxu0
        %v894 = vadd.f32 %v870, %v893
        %895 = vmatmul.bf16.gmra.mxu0 %v435
        %v896 = vpop.f32.mrf.mxu0
        %v897 = vadd.f32 %v873, %v896
        %v898 = vpop.f32.mrf.mxu0
        %v899 = vadd.f32 %v875, %v898
        %900 = vmatmul.bf16.gmra.mxu0 %v443
        %v901 = vpop.f32.mrf.mxu0
        %v902 = vadd.f32 %v878, %v901
        %v903 = vpop.f32.mrf.mxu0
        %v904 = vadd.f32 %v880, %v903
        %905 = vdwg.mxu0
        %906 = vmatpush.bf16.msra.mxu0 %v753
        %907 = vmatpush.bf16.msra.mxu0 %v752
        %908 = vmatpush.bf16.msra.mxu0 %v751
        %909 = vmatpush.bf16.msra.mxu0 %v750
        %910 = vmatpush.bf16.msra.mxu0 %v749
        %911 = vmatpush.bf16.msra.mxu0 %v748
        %912 = vmatpush.bf16.msra.mxu0 %v747
        %913 = vmatpush.bf16.msra.mxu0 %v746
        %914 = vmatmul.bf16.gmra.mxu0 %v428
        %v915 = vpop.f32.mrf.mxu0
        %v916 = vadd.f32 %v892, %v915
        %v917 = vpop.f32.mrf.mxu0
        %v918 = vadd.f32 %v894, %v917
        %919 = vmatmul.bf16.gmra.mxu0 %v436
        %v920 = vpop.f32.mrf.mxu0
        %v921 = vadd.f32 %v897, %v920
        %v922 = vpop.f32.mrf.mxu0
        %v923 = vadd.f32 %v899, %v922
        %924 = vmatmul.bf16.gmra.mxu0 %v444
        %v925 = vpop.f32.mrf.mxu0
        %v926 = vadd.f32 %v902, %v925
        %v927 = vpop.f32.mrf.mxu0
        %v928 = vadd.f32 %v904, %v927
        %929 = vdwg.mxu0
        %930 = vmatpush.bf16.msra.mxu0 %v761
        %931 = vmatpush.bf16.msra.mxu0 %v760
        %932 = vmatpush.bf16.msra.mxu0 %v759
        %933 = vmatpush.bf16.msra.mxu0 %v758
        %934 = vmatpush.bf16.msra.mxu0 %v757
        %935 = vmatpush.bf16.msra.mxu0 %v756
        %936 = vmatpush.bf16.msra.mxu0 %v755
        %937 = vmatpush.bf16.msra.mxu0 %v754
        %938 = vmatmul.bf16.gmra.mxu0 %v429
        %v939 = vpop.f32.mrf.mxu0
        %v940 = vadd.f32 %v916, %v939
        %v941 = vpop.f32.mrf.mxu0
        %v942 = vadd.f32 %v918, %v941
        %943 = vmatmul.bf16.gmra.mxu0 %v437
        %v944 = vpop.f32.mrf.mxu0
        %v945 = vadd.f32 %v921, %v944
        %v946 = vpop.f32.mrf.mxu0
        %v947 = vadd.f32 %v923, %v946
        %948 = vmatmul.bf16.gmra.mxu0 %v445
        %v949 = vpop.f32.mrf.mxu0
        %v950 = vadd.f32 %v926, %v949
        %v951 = vpop.f32.mrf.mxu0
        %v952 = vadd.f32 %v928, %v951
        %953 = vdwg.mxu0
        %954 = vmatpush.bf16.msra.mxu0 %v769
        %955 = vmatpush.bf16.msra.mxu0 %v768
        %956 = vmatpush.bf16.msra.mxu0 %v767
        %957 = vmatpush.bf16.msra.mxu0 %v766
        %958 = vmatpush.bf16.msra.mxu0 %v765
        %959 = vmatpush.bf16.msra.mxu0 %v764
        %960 = vmatpush.bf16.msra.mxu0 %v763
        %961 = vmatpush.bf16.msra.mxu0 %v762
        %962 = vmatmul.bf16.gmra.mxu0 %v430
        %v963 = vpop.f32.mrf.mxu0
        %v964 = vadd.f32 %v940, %v963
        %v965 = vpop.f32.mrf.mxu0
        %v966 = vadd.f32 %v942, %v965
        %967 = vmatmul.bf16.gmra.mxu0 %v438
        %v968 = vpop.f32.mrf.mxu0
        %v969 = vadd.f32 %v945, %v968
        %v970 = vpop.f32.mrf.mxu0
        %v971 = vadd.f32 %v947, %v970
        %972 = vmatmul.bf16.gmra.mxu0 %v446
        %v973 = vpop.f32.mrf.mxu0
        %v974 = vadd.f32 %v950, %v973
        %v975 = vpop.f32.mrf.mxu0
        %v976 = vadd.f32 %v952, %v975
        %977 = vdwg.mxu0
        %978 = vmatpush.bf16.msra.mxu0 %v777
        %979 = vmatpush.bf16.msra.mxu0 %v776
        %980 = vmatpush.bf16.msra.mxu0 %v775
        %981 = vmatpush.bf16.msra.mxu0 %v774
        %982 = vmatpush.bf16.msra.mxu0 %v773
        %983 = vmatpush.bf16.msra.mxu0 %v772
        %984 = vmatpush.bf16.msra.mxu0 %v771
        %985 = vmatpush.bf16.msra.mxu0 %v770
        %986 = vmatmul.bf16.gmra.mxu0 %v431
        %v987 = vpop.f32.mrf.mxu0
        %v988 = vadd.f32 %v964, %v987
        %v989 = vpop.f32.mrf.mxu0
        %v990 = vadd.f32 %v966, %v989
        %991 = vmatmul.bf16.gmra.mxu0 %v439
        %v992 = vpop.f32.mrf.mxu0
        %v993 = vadd.f32 %v969, %v992
        %v994 = vpop.f32.mrf.mxu0
        %v995 = vadd.f32 %v971, %v994
        %996 = vmatmul.bf16.gmra.mxu0 %v447
        %v997 = vpop.f32.mrf.mxu0
        %v998 = vadd.f32 %v974, %v997
        %v999 = vpop.f32.mrf.mxu0
        %v1000 = vadd.f32 %v976, %v999
        %1001 = vdwg.mxu0
        %1002 = vmatpush.bf16.msra.mxu0 %v785
        %1003 = vmatpush.bf16.msra.mxu0 %v784
        %1004 = vmatpush.bf16.msra.mxu0 %v783
        %1005 = vmatpush.bf16.msra.mxu0 %v782
        %1006 = vmatpush.bf16.msra.mxu0 %v781
        %1007 = vmatpush.bf16.msra.mxu0 %v780
        %1008 = vmatpush.bf16.msra.mxu0 %v779
        %1009 = vmatpush.bf16.msra.mxu0 %v778
        %1010 = vmatmul.bf16.gmra.mxu0 %v432
        %v1011 = vpop.f32.mrf.mxu0
        %v1012 = vadd.f32 %v988, %v1011
        %v1013 = vpop.f32.mrf.mxu0
        %v1014 = vadd.f32 %v990, %v1013
        %1015 = vmatmul.bf16.gmra.mxu0 %v440
        %v1016 = vpop.f32.mrf.mxu0
        %v1017 = vadd.f32 %v993, %v1016
        %v1018 = vpop.f32.mrf.mxu0
        %v1019 = vadd.f32 %v995, %v1018
        %1020 = vmatmul.bf16.gmra.mxu0 %v448
        %v1021 = vpop.f32.mrf.mxu0
        %v1022 = vadd.f32 %v998, %v1021
        %v1023 = vpop.f32.mrf.mxu0
        %v1024 = vadd.f32 %v1000, %v1023
        %1025 = vdwg.mxu0
        %1026 = vmatpush.bf16.msra.mxu0 %v793
        %1027 = vmatpush.bf16.msra.mxu0 %v792
        %1028 = vmatpush.bf16.msra.mxu0 %v791
        %1029 = vmatpush.bf16.msra.mxu0 %v790
        %1030 = vmatpush.bf16.msra.mxu0 %v789
        %1031 = vmatpush.bf16.msra.mxu0 %v788
        %1032 = vmatpush.bf16.msra.mxu0 %v787
        %1033 = vmatpush.bf16.msra.mxu0 %v786
        %1034 = vmatmul.bf16.gmra.mxu0 %v433
        %v1035 = vpop.f32.mrf.mxu0
        %v1036 = vadd.f32 %v1012, %v1035
        %v1037 = vpop.f32.mrf.mxu0
        %v1038 = vadd.f32 %v1014, %v1037
        %1039 = vmatmul.bf16.gmra.mxu0 %v441
        %v1040 = vpop.f32.mrf.mxu0
        %v1041 = vadd.f32 %v1017, %v1040
        %v1042 = vpop.f32.mrf.mxu0
        %v1043 = vadd.f32 %v1019, %v1042
        %1044 = vmatmul.bf16.gmra.mxu0 %v449
        %v1045 = vpop.f32.mrf.mxu0
        %v1046 = vadd.f32 %v1022, %v1045
        %v1047 = vpop.f32.mrf.mxu0
        %v1048 = vadd.f32 %v1024, %v1047
        %1049 = vdwg.mxu0
        %1050 = vst [vmem:[%s177] sm:$0xff] %v1036
        %1051 = vst [vmem:[%s177 + $0x8] sm:$0xff] %v1038
        %1052 = vst [vmem:[%s177 + $0x10] sm:$0xff] %v1041
        %1053 = vst [vmem:[%s177 + $0x18] sm:$0xff] %v1043
        %1054 = vst [vmem:[%s177 + $0x20] sm:$0xff] %v1046
        %1055 = vst [vmem:[%s177 + $0x28] sm:$0xff] %v1048
        %s1056 = sand.u32 %s90, 1
        %s1057 = sand.u32 %s90, 1
        %s1058 = smul.addr %s1057, 48
        %s1059 = scalar_lea.vmem [#allocation2], %s1058
        // Predicated region
        $region33: #{_lambda_.9} parent=31 // pred_check
          %p1060 = pneg %p100
        $region34: #{_lambda_.9} parent=31 // pred_check_branch
          %1062 = sbr.rel (%p1060) target = $region36
        $region35: #{_lambda_.9} parent=31 // pred_region
          %s1063 = smul.u32 6, %s14
          %s1064 = ssub.s32 9, %s1063
          %p1065 = scmp.lt.s32.totalorder %s1064, 6
          %s1066 = scalar_select %p1065, %s1064, 6
          %s1067 = smul.u32 8, %s1066
          %p1068 = scmp.ne.s32.totalorder 0, %s1067
          %s1069 = smul.addr %s1063, 8
          %s1070 = scalar_lea.vmem %s3, %s1069
          // Predicated region
          $region37: #{_lambda_.9} parent=35 // pred_check
            %p1071 = pneg %p1068
          $region38: #{_lambda_.9} parent=35 // pred_check_branch
            %1073 = sbr.rel (%p1071) target = $region40
          $region39: #{_lambda_.9} parent=35 // pred_region
            // Predicated region
            $region41: #{_lambda_.9} parent=39 // pred_check
              _
            $region42: #{_lambda_.9} parent=39 // pred_check_branch
              %1075 = sbr.rel (0) target = $region44
            $region43: #{_lambda_.9} parent=39 // pred_region
              // Predicated region
              $region63: #{_lambda_.9} parent=43 // pred_check
                _
              $region64: #{_lambda_.9} parent=43 // pred_check_branch
                %1136 = sbr.rel (0) target = $region66
              $region65: #{_lambda_.9} parent=43 // pred_region
                %s1137 = sdiv.u32.pop %s1066, 6
                %s1138 = srem.u32.pop %s1066, 6
                // While loop
                $region67: #{_lambda_.9} parent=65 // loop_pre_header
                  _
                $region68: #{_lambda_.9} parent=65 // loop_header
                  %s1140 = sphi 0, %s1142
                  %p1141 = scmp.ge.s32.totalorder %s1140, %s1137
                  %s1145 = sphi 0, %s1162
                  %s1146 = sphi %s1059, %s1165
                  %s1147 = sphi %s1070, %s1166
                $region69: #{_lambda_.9} parent=65 // loop_header_branch
                  %1144 = sbr.rel (%p1141) target = $region73
                $region70: #{_lambda_.9} parent=65 // loop_body
                  %v1148 = vld [vmem:[%s1146] sm:$0xff]
                  %1149 = vst [vmem:[%s1147] sm:$0xff] %v1148
                  %v1150 = vld [vmem:[%s1146 + $0x8] sm:$0xff]
                  %1151 = vst [vmem:[%s1147 + $0x8] sm:$0xff] %v1150
                  %v1152 = vld [vmem:[%s1146 + $0x10] sm:$0xff]
                  %1153 = vst [vmem:[%s1147 + $0x10] sm:$0xff] %v1152
                  %v1154 = vld [vmem:[%s1146 + $0x18] sm:$0xff]
                  %1155 = vst [vmem:[%s1147 + $0x18] sm:$0xff] %v1154
                  %v1156 = vld [vmem:[%s1146 + $0x20] sm:$0xff]
                  %1157 = vst [vmem:[%s1147 + $0x20] sm:$0xff] %v1156
                  %v1158 = vld [vmem:[%s1146 + $0x28] sm:$0xff]
                  %1159 = vst [vmem:[%s1147 + $0x28] sm:$0xff] %v1158
                  %s1160 = sadd.s32 1, %s1145
                  %p1161 = scmp.ge.s32.totalorder %s1160, %s1137
                  %s1162 = scalar_select %p1161, 0, %s1160
                  %s1163 = smul.u32 %s1162, 48
                  %s1164 = smul.u32 %s1162, 48
                  %s1165 = scalar_lea.vmem %s1059, %s1163 [#allocation2]
                  %s1166 = scalar_lea.vmem %s1070, %s1164
                $region71: #{_lambda_.9} parent=65 // loop_footer
                  %s1142 = sadd.s32 %s1140, 1
                $region72: #{_lambda_.9} parent=65 // loop_footer_branch
                  %1139 = sbr.rel target = $region68
                $region73: #{_lambda_.9} parent=65 // loop_exit
                  _
                %s1167 = sdiv.u32.pop %s1066, 6
                %s1168 = srem.u32.pop %s1066, 6
                %s1169 = smul.u32 %s1167, 6
                %s1170 = smul.u32 8, %s1169
                %s1171 = scalar_lea.vmem %s1059, %s1170 [#allocation2]
                %s1172 = smul.u32 8, %s1169
                %s1173 = scalar_lea.vmem %s1070, %s1172
                // While loop
                $region74: #{_lambda_.9} parent=65 // loop_pre_header
                  _
                $region75: #{_lambda_.9} parent=65 // loop_header
                  %s1175 = sphi 0, %s1177
                  %p1176 = scmp.ge.s32.totalorder %s1175, %s1168
                  %s1180 = sphi 0, %s1187
                  %s1181 = sphi %s1171, %s1190
                  %s1182 = sphi %s1173, %s1191
                $region76: #{_lambda_.9} parent=65 // loop_header_branch
                  %1179 = sbr.rel (%p1176) target = $region80
                $region77: #{_lambda_.9} parent=65 // loop_body
                  %v1183 = vld [vmem:[%s1181] sm:$0xff]
                  %1184 = vst [vmem:[%s1182] sm:$0xff] %v1183
                  %s1185 = sadd.s32 1, %s1180
                  %p1186 = scmp.ge.s32.totalorder %s1185, %s1168
                  %s1187 = scalar_select %p1186, 0, %s1185
                  %s1188 = smul.u32 %s1187, 8
                  %s1189 = smul.u32 %s1187, 8
                  %s1190 = scalar_lea.vmem %s1171, %s1188 [#allocation2]
                  %s1191 = scalar_lea.vmem %s1173, %s1189
                $region78: #{_lambda_.9} parent=65 // loop_footer
                  %s1177 = sadd.s32 %s1175, 1
                $region79: #{_lambda_.9} parent=65 // loop_footer_branch
                  %1174 = sbr.rel target = $region75
                $region80: #{_lambda_.9} parent=65 // loop_exit
                  _
              $region66: #{_lambda_.9} parent=43 // pred_fallthru
                _
              // Predicated region
              $region81: #{_lambda_.9} parent=43 // pred_check
                _
              $region82: #{_lambda_.9} parent=43 // pred_check_branch
                %1193 = sbr.rel target = $region84
              $region83: #{_lambda_.9} parent=43 // pred_region
                _
              $region84: #{_lambda_.9} parent=43 // pred_fallthru
                _
            $region44: #{_lambda_.9} parent=39 // pred_fallthru
              _
            // Predicated region
            $region45: #{_lambda_.9} parent=39 // pred_check
              _
            $region46: #{_lambda_.9} parent=39 // pred_check_branch
              %1077 = sbr.rel target = $region48
            $region47: #{_lambda_.9} parent=39 // pred_region
              %s1079 = ssub.s32 256, 1
              %s1080 = sdiv.u32.pop %s1066, 6
              %s1081 = srem.u32.pop %s1066, 6
              // While loop
              $region49: #{_lambda_.9} parent=47 // loop_pre_header
                _
              $region50: #{_lambda_.9} parent=47 // loop_header
                %s1083 = sphi 0, %s1085
                %p1084 = scmp.ge.s32.totalorder %s1083, %s1080
                %s1088 = sphi 0, %s1105
                %s1089 = sphi %s1059, %s1108
                %s1090 = sphi %s1070, %s1109
              $region51: #{_lambda_.9} parent=47 // loop_header_branch
                %1087 = sbr.rel (%p1084) target = $region55
              $region52: #{_lambda_.9} parent=47 // loop_body
                %v1091 = vld [vmem:[%s1089] sm:%s1079]
                %1092 = vst [vmem:[%s1090] sm:%s1079] %v1091
                %v1093 = vld [vmem:[%s1089 + $0x8] sm:%s1079]
                %1094 = vst [vmem:[%s1090 + $0x8] sm:%s1079] %v1093
                %v1095 = vld [vmem:[%s1089 + $0x10] sm:%s1079]
                %1096 = vst [vmem:[%s1090 + $0x10] sm:%s1079] %v1095
                %v1097 = vld [vmem:[%s1089 + $0x18] sm:%s1079]
                %1098 = vst [vmem:[%s1090 + $0x18] sm:%s1079] %v1097
                %v1099 = vld [vmem:[%s1089 + $0x20] sm:%s1079]
                %1100 = vst [vmem:[%s1090 + $0x20] sm:%s1079] %v1099
                %v1101 = vld [vmem:[%s1089 + $0x28] sm:%s1079]
                %1102 = vst [vmem:[%s1090 + $0x28] sm:%s1079] %v1101
                %s1103 = sadd.s32 1, %s1088
                %p1104 = scmp.ge.s32.totalorder %s1103, %s1080
                %s1105 = scalar_select %p1104, 0, %s1103
                %s1106 = smul.u32 %s1105, 48
                %s1107 = smul.u32 %s1105, 48
                %s1108 = scalar_lea.vmem %s1059, %s1106 [#allocation2]
                %s1109 = scalar_lea.vmem %s1070, %s1107
              $region53: #{_lambda_.9} parent=47 // loop_footer
                %s1085 = sadd.s32 %s1083, 1
              $region54: #{_lambda_.9} parent=47 // loop_footer_branch
                %1082 = sbr.rel target = $region50
              $region55: #{_lambda_.9} parent=47 // loop_exit
                _
              %s1110 = sdiv.u32.pop %s1066, 6
              %s1111 = srem.u32.pop %s1066, 6
              %s1112 = smul.u32 %s1110, 6
              %s1113 = smul.u32 8, %s1112
              %s1114 = scalar_lea.vmem %s1059, %s1113 [#allocation2]
              %s1115 = smul.u32 8, %s1112
              %s1116 = scalar_lea.vmem %s1070, %s1115
              // While loop
              $region56: #{_lambda_.9} parent=47 // loop_pre_header
                _
              $region57: #{_lambda_.9} parent=47 // loop_header
                %s1118 = sphi 0, %s1120
                %p1119 = scmp.ge.s32.totalorder %s1118, %s1111
                %s1123 = sphi 0, %s1130
                %s1124 = sphi %s1114, %s1133
                %s1125 = sphi %s1116, %s1134
              $region58: #{_lambda_.9} parent=47 // loop_header_branch
                %1122 = sbr.rel (%p1119) target = $region62
              $region59: #{_lambda_.9} parent=47 // loop_body
                %v1126 = vld [vmem:[%s1124] sm:%s1079]
                %1127 = vst [vmem:[%s1125] sm:%s1079] %v1126
                %s1128 = sadd.s32 1, %s1123
                %p1129 = scmp.ge.s32.totalorder %s1128, %s1111
                %s1130 = scalar_select %p1129, 0, %s1128
                %s1131 = smul.u32 %s1130, 8
                %s1132 = smul.u32 %s1130, 8
                %s1133 = scalar_lea.vmem %s1114, %s1131 [#allocation2]
                %s1134 = scalar_lea.vmem %s1116, %s1132
              $region60: #{_lambda_.9} parent=47 // loop_footer
                %s1120 = sadd.s32 %s1118, 1
              $region61: #{_lambda_.9} parent=47 // loop_footer_branch
                %1117 = sbr.rel target = $region57
              $region62: #{_lambda_.9} parent=47 // loop_exit
                _
            $region48: #{_lambda_.9} parent=39 // pred_fallthru
              _
          $region40: #{_lambda_.9} parent=35 // pred_fallthru
            _
          %1194 = vnop
        $region36: #{_lambda_.9} parent=31 // pred_fallthru
          _
      $region32: #{_lambda_.9} parent=5 // pred_fallthru
        _
      %p1195 = scmp.le.s32.totalorder 2, %s9
      // Predicated region
      $region85: #{_lambda_.9} parent=5 // pred_check
        %p1196 = pneg %p1195
      $region86: #{_lambda_.9} parent=5 // pred_check_branch
        %1198 = sbr.rel (%p1196) target = $region88
      $region87: #{_lambda_.9} parent=5 // pred_region
        %s1199 = ssub.s32 %s9, 2
        // Predicated region
        $region89: #{_lambda_.9} parent=87 // pred_check
          %p1200 = pneg %p106
        $region90: #{_lambda_.9} parent=87 // pred_check_branch
          %1202 = sbr.rel (%p1200) target = $region92
        $region91: #{_lambda_.9} parent=87 // pred_region
          %s1203 = sand.u32 %s91, 1
          %s1204 = sand.u32 %s91, 1
          %s1205 = smul.addr %s1204, 48
          %s1206 = scalar_lea.vmem [#allocation2], %s1205
        $region92: #{_lambda_.9} parent=87 // pred_fallthru
          _
      $region88: #{_lambda_.9} parent=5 // pred_fallthru
        _
    $region6: #{_lambda_.9} parent=1 // loop_footer
      %s13 = sadd.s32 1, %s9
    $region7: #{_lambda_.9} parent=1 // loop_footer_branch
      %8 = sbr.rel target = $region3
    $region8: #{_lambda_.9} parent=1 // loop_exit
      _

</llo_original>
